<compile_context>
chip_gen: v6e
topology: v6e:2x2x1
jax: 0.10.0
libtpu: 0.0.40
codegen_flags: <defaults>
</compile_context>

<pallas_src>
import functools

import jax
import jax.numpy as jnp
from jax import lax
from jax.experimental import pallas as pl
from jax.experimental.pallas import tpu as pltpu

EPS = 1e-5
NEG_SLOPE = 0.2
SUBLANE = 8


def _round_up(x, m):
    return (x + m - 1) // m * m


def _mosaic_params(semantics, vmem_estimate_bytes):
    # Explicit VMEM budget (v7x: 64 MiB physical / 32 MiB default scoped).
    limit = int(min(48 * 2**20, max(32 * 2**20, 2 * int(vmem_estimate_bytes))))
    return pltpu.CompilerParams(dimension_semantics=semantics,
                                vmem_limit_bytes=limit)


def _pack_stats(psum, pssq, cout):
    """Pack per-tile (sum, sumsq) rows into a sublane-aligned (8, cout) block."""
    row = lax.broadcasted_iota(jnp.int32, (8, cout), 0)
    return jnp.where(row == 0, psum, jnp.where(row == 1, pssq, 0.0))


# ----------------------------------------------------------------------------
# Kernel 1: stride-1 3x3x3 conv, halo-based (no HBM im2col)
# ----------------------------------------------------------------------------
def _conv_s1_halo_kernel(x0_ref, x1_ref, x2_ref, w_ref, b_ref, y_ref, st_ref,
                         *, H, W):
    """One (batch, depth) output slab of conv3d(k3, s1, pad1) + bias + LeakyReLU.

    x0/x1/x2 are the depth-halo slices xp[n, d + kd] (kd = 0, 1, 2), each
    (H+2, W+2, Cin) in VMEM; the 27 shifted patches are built in registers, so no
    patch matrix ever touches HBM.  Accumulation is f32 regardless of the matmul
    input dtype.  Per-slab BN partial sums go to rows 0/1 of st_ref so the grid
    stays fully 'parallel' (v7x has 2 TensorCores)."""
    cout = w_ref.shape[-1]
    hw = H * W
    acc = jnp.zeros((hw, cout), jnp.float32)
    for kd, x_ref in enumerate((x0_ref, x1_ref, x2_ref)):
        xs = x_ref[...]                                    # (H+2, W+2, Cin)
        for kh in range(3):
            for kw in range(3):
                patch = xs[kh:kh + H, kw:kw + W, :].reshape(hw, -1)
                acc = acc + jnp.dot(patch, w_ref[kd * 9 + kh * 3 + kw],
                                    preferred_element_type=jnp.float32)
    acc = acc + b_ref[...]                                 # (hw, cout) + (1, cout)
    y = jnp.where(acc > 0, acc, NEG_SLOPE * acc)           # LeakyReLU(0.2)
    y_ref[...] = y
    st_ref[...] = _pack_stats(jnp.sum(y, axis=0, keepdims=True),
                              jnp.sum(y * y, axis=0, keepdims=True), cout)


def conv3d_s1_lrelu_stats(x, w_pt, b, *, matmul_dtype=jnp.float32):
    """x: (N, D, H, W, Cin) f32; w_pt: PyTorch layout (Cout, Cin, 3, 3, 3).
    Returns pre-BN y=(N, D, H, W, Cout) f32 plus per-channel sum / sumsq."""
    N, D, H, W, C = x.shape
    cout = w_pt.shape[0]
    hp, wp, hw = H + 2, W + 2, H * W
    xp = jnp.pad(x.astype(matmul_dtype), ((0, 0), (1, 1), (1, 1), (1, 1), (0, 0)))
    wk = jnp.transpose(w_pt, (2, 3, 4, 1, 0)).reshape(27, C, cout).astype(matmul_dtype)
    bias = b.reshape(1, cout).astype(jnp.float32)

    def _halo_spec(kd):
        return pl.BlockSpec((None, None, hp, wp, C),
                            lambda n, d: (n, d + kd, 0, 0, 0))

    itemsize = jnp.dtype(matmul_dtype).itemsize
    vmem_est = (3 * 2 * hp * wp * C * itemsize + 27 * C * cout * itemsize
                + 2 * (hw + 8) * cout * 4 + hw * cout * 4)
    y, stats = pl.pallas_call(
        functools.partial(_conv_s1_halo_kernel, H=H, W=W),
        out_shape=(jax.ShapeDtypeStruct((N * D, hw, cout), jnp.float32),
                   jax.ShapeDtypeStruct((N * D, 8, cout), jnp.float32)),
        grid=(N, D),
        in_specs=[_halo_spec(0), _halo_spec(1), _halo_spec(2),
                  pl.BlockSpec((27, C, cout), lambda n, d: (0, 0, 0)),
                  pl.BlockSpec((1, cout), lambda n, d: (0, 0))],
        out_specs=(pl.BlockSpec((None, hw, cout), lambda n, d: (n * D + d, 0, 0)),
                   pl.BlockSpec((None, 8, cout), lambda n, d: (n * D + d, 0, 0))),
        compiler_params=_mosaic_params(("parallel", "parallel"), vmem_est),
    )(xp, xp, xp, wk, bias)
    return (y.reshape(N, D, H, W, cout),
            jnp.sum(stats[:, 0, :], axis=0),
            jnp.sum(stats[:, 1, :], axis=0))


# ----------------------------------------------------------------------------
# Kernel 2: row-tiled patch matmul (+ bias + LeakyReLU + masked BN partial stats)
# ----------------------------------------------------------------------------
def _patch_matmul_kernel(a_ref, w_ref, b_ref, y_ref, st_ref, *, m_true, tm):
    i = pl.program_id(0)
    cout = w_ref.shape[-1]
    acc = jnp.dot(a_ref[...], w_ref[...], preferred_element_type=jnp.float32)
    acc = acc + b_ref[...]
    y = jnp.where(acc > 0, acc, NEG_SLOPE * acc)
    y_ref[...] = y
    # mask out padded tail rows from the BatchNorm statistics
    rows = lax.broadcasted_iota(jnp.int32, (tm, cout), 0) + i * tm
    yv = jnp.where(rows < m_true, y, 0.0)
    st_ref[...] = _pack_stats(jnp.sum(yv, axis=0, keepdims=True),
                              jnp.sum(yv * y, axis=0, keepdims=True), cout)


def patch_matmul_lrelu_stats(a, w, b, *, tm_max=512, vmem_budget=20 * 2**20):
    """a: (M, K) patch rows; w: (K, Cout); b: (1, Cout) f32.
    Returns y=(M, Cout) f32 plus per-channel sum / sumsq over the M valid rows."""
    M, K = a.shape
    cout = w.shape[1]
    itemsize = jnp.dtype(a.dtype).itemsize

    def _tile_bytes(t):
        # double-buffered A / y tiles + resident weights + stats block
        return (2 * t * K * itemsize + 2 * t * cout * 4
                + K * cout * itemsize + 2 * 8 * cout * 4 + cout * 4)

    tm = min(tm_max, _round_up(M, SUBLANE))
    while tm > SUBLANE and _tile_bytes(tm) > vmem_budget:
        tm = max(SUBLANE, _round_up(tm // 2, SUBLANE))
    mp = _round_up(M, tm)
    g = mp // tm
    a = jnp.pad(a, ((0, mp - M), (0, 0)))

    y, stats = pl.pallas_call(
        functools.partial(_patch_matmul_kernel, m_true=M, tm=tm),
        out_shape=(jax.ShapeDtypeStruct((mp, cout), jnp.float32),
                   jax.ShapeDtypeStruct((g, 8, cout), jnp.float32)),
        grid=(g,),
        in_specs=[pl.BlockSpec((tm, K), lambda i: (i, 0)),
                  pl.BlockSpec((K, cout), lambda i: (0, 0)),
                  pl.BlockSpec((1, cout), lambda i: (0, 0))],
        out_specs=(pl.BlockSpec((tm, cout), lambda i: (i, 0)),
                   pl.BlockSpec((None, 8, cout), lambda i: (i, 0, 0))),
        compiler_params=_mosaic_params(("parallel",), _tile_bytes(tm)),
    )(a, w, b)
    return (y[:M],
            jnp.sum(stats[:, 0, :], axis=0),
            jnp.sum(stats[:, 1, :], axis=0))


# ----------------------------------------------------------------------------
# Kernel 3: fused epilogue  out = BN(main) + BN(shortcut)
# ----------------------------------------------------------------------------
def _bn_bn_add_kernel(ym_ref, sm_ref, tm_ref, ys_ref, ss_ref, ts_ref, o_ref):
    o_ref[...] = (ym_ref[...] * sm_ref[...] + tm_ref[...]
                  + ys_ref[...] * ss_ref[...] + ts_ref[...])


def bn_bn_add(y_main, scale_m, shift_m, y_short, scale_s, shift_s, *, tm_max=1024):
    M, C = y_main.shape
    tm = min(tm_max, _round_up(M, SUBLANE))
    mp = _round_up(M, tm)
    g = mp // tm
    pad = ((0, mp - M), (0, 0))
    y_main = jnp.pad(y_main, pad)
    y_short = jnp.pad(y_short, pad)
    row = pl.BlockSpec((tm, C), lambda i: (i, 0))
    ch = pl.BlockSpec((1, C), lambda i: (0, 0))
    out = pl.pallas_call(
        _bn_bn_add_kernel,
        out_shape=jax.ShapeDtypeStruct((mp, C), jnp.float32),
        grid=(g,),
        in_specs=[row, ch, ch, row, ch, ch],
        out_specs=row,
        compiler_params=_mosaic_params(("parallel",), 6 * tm * C * 4),
    )(y_main, scale_m, shift_m, y_short, scale_s, shift_s)
    return out[:M]


# ----------------------------------------------------------------------------
# Glue: BN folding, stride-2 patch extraction, forward pass
# ----------------------------------------------------------------------------
def _bn_scale_shift(ssum, ssq, count, gamma, beta):
    mean = ssum / count
    var = ssq / count - mean * mean          # biased batch variance (training BN)
    inv = lax.rsqrt(var + EPS)
    scale = gamma * inv
    shift = beta - mean * scale
    return scale.reshape(1, -1), shift.reshape(1, -1)


def _im2col_3d(x, stride):
    """x: (N, D, H, W, C) -> patch matrix (N*Do*Ho*Wo, 27*C), zero padding 1."""
    N, D, H, W, C = x.shape
    xp = jnp.pad(x, ((0, 0), (1, 1), (1, 1), (1, 1), (0, 0)))
    do = (D + 2 - 3) // stride + 1
    ho = (H + 2 - 3) // stride + 1
    wo = (W + 2 - 3) // stride + 1
    cols = []
    for kd in range(3):
        for kh in range(3):
            for kw in range(3):
                patch = xp[:,
                           kd:kd + stride * (do - 1) + 1:stride,
                           kh:kh + stride * (ho - 1) + 1:stride,
                           kw:kw + stride * (wo - 1) + 1:stride, :]
                cols.append(patch.reshape(N * do * ho * wo, C))
    return jnp.concatenate(cols, axis=-1), (N, do, ho, wo)


def conv3d_s2_lrelu_stats(x, w_pt, b, *, matmul_dtype=jnp.float32):
    """Stride-2 conv3d(k3, pad1) + bias + LeakyReLU + batch stats.  The patch
    matrix here is only ~27/8 of the input (stride-2 output), so wrapper-side
    extraction is kept; any elementwise producer of `x` (e.g. the conv1 BN
    affine) fuses into this gather inside XLA."""
    cout = w_pt.shape[0]
    a, dims = _im2col_3d(x.astype(matmul_dtype), 2)
    wmat = jnp.transpose(w_pt, (2, 3, 4, 1, 0)).reshape(-1, cout).astype(matmul_dtype)
    y, ssum, ssq = patch_matmul_lrelu_stats(a, wmat,
                                            b.reshape(1, cout).astype(jnp.float32))
    return y, ssum, ssq, dims


def res_block_down(x_ncdhw, params, *, matmul_dtype=jnp.float32):
    """Forward pass of ResBlockDown.  matmul_dtype=bfloat16 feeds the MXU bf16
    inputs (f32 accumulation, f32 BN statistics) for v6e/v7x peak throughput."""
    x = jnp.transpose(x_ncdhw, (0, 2, 3, 4, 1)).astype(jnp.float32)   # NCDHW->NDHWC
    n, d, h, w, cin = x.shape

    # main path, conv1 (stride 1): halo kernel, no HBM patch matrix
    w1, b1, g1, be1 = params["conv1"]
    y1, s1, ss1 = conv3d_s1_lrelu_stats(x, w1, b1, matmul_dtype=matmul_dtype)
    sc1, sh1 = _bn_scale_shift(s1, ss1, n * d * h * w, g1, be1)
    # conv1's BN affine is applied as part of the XLA-fused patch gather feeding
    # conv2 -- no standalone BN kernel pass.  (An exact fold into conv2's weights
    # is impossible with zero padding: border taps must not see `shift`.)
    h1 = y1 * sc1.reshape(1, 1, 1, 1, cin) + sh1.reshape(1, 1, 1, 1, cin)

    # main path, conv2 (stride 2)
    w2, b2, g2, be2 = params["conv2"]
    y2, s2, ss2, dims2 = conv3d_s2_lrelu_stats(h1, w2, b2, matmul_dtype=matmul_dtype)
    m2 = dims2[0] * dims2[1] * dims2[2] * dims2[3]
    sc2, sh2 = _bn_scale_shift(s2, ss2, m2, g2, be2)

    # shortcut (stride 2)
    ws, bs, gs, bes = params["shortcut"]
    ysc, s_s, ss_s, _ = conv3d_s2_lrelu_stats(x, ws, bs, matmul_dtype=matmul_dtype)
    scs, shs = _bn_scale_shift(s_s, ss_s, m2, gs, bes)

    # fused epilogue: BN(main) + BN(shortcut) + residual add in one HBM pass
    out = bn_bn_add(y2, sc2, sh2, ysc, scs, shs)
    nb, do, ho, wo = dims2
    out = out.reshape(nb, do, ho, wo, -1)
    return jnp.transpose(out, (0, 4, 1, 2, 3))            # back to NCDHW


# ----------------------------------------------------------------------------
# Pure-JAX reference (PyTorch semantics) for validation
# ----------------------------------------------------------------------------
def _conv3d_ref(x, w, b, stride, compute_dtype):
    wt = jnp.transpose(w, (2, 3, 4, 1, 0)).astype(compute_dtype)
    out = lax.conv_general_dilated(
        x.astype(compute_dtype), wt, window_strides=(stride,) * 3,
        padding=((1, 1),) * 3,
        dimension_numbers=("NDHWC", "DHWIO", "NDHWC"),
        preferred_element_type=jnp.float32,
        precision=lax.Precision.HIGHEST)
    return out + b.reshape(1, 1, 1, 1, -1).astype(jnp.float32)


def _block_ref(x, params, stride, compute_dtype):
    w, b, g, be = params
    y = _conv3d_ref(x, w, b, stride, compute_dtype)
    y = jnp.where(y > 0, y, NEG_SLOPE * y)
    mean = y.mean(axis=(0, 1, 2, 3), keepdims=True)
    var = y.var(axis=(0, 1, 2, 3), keepdims=True)
    return (y - mean) * lax.rsqrt(var + EPS) * g.reshape(1, 1, 1, 1, -1) \
        + be.reshape(1, 1, 1, 1, -1)


def res_block_down_ref(x_ncdhw, params, compute_dtype=jnp.float32):
    x = jnp.transpose(x_ncdhw, (0, 2, 3, 4, 1))
    r = _block_ref(x, params["shortcut"], 2, compute_dtype)
    h = _block_ref(x, params["conv1"], 1, compute_dtype)
    h = _block_ref(h, params["conv2"], 2, compute_dtype)
    return jnp.transpose(r + h, (0, 4, 1, 2, 3))


# ----------------------------------------------------------------------------
if __name__ == "__main__":
    key = jax.random.PRNGKey(0)
    N, CIN, COUT, S = 2, 4, 8, 8          # batch, in-ch, out-ch, spatial (D=H=W)

    def conv_params(k, cin, cout):
        k1, k2, k3, k4 = jax.random.split(k, 4)
        w = jax.random.normal(k1, (cout, cin, 3, 3, 3), jnp.float32) * 0.1
        b = jax.random.normal(k2, (cout,), jnp.float32) * 0.1
        gamma = 1.0 + 0.1 * jax.random.normal(k3, (cout,), jnp.float32)
        beta = 0.1 * jax.random.normal(k4, (cout,), jnp.float32)
        return (w, b, gamma, beta)

    k0, k1, k2, k3 = jax.random.split(key, 4)
    params = {
        "conv1": conv_params(k0, CIN, CIN),
        "conv2": conv_params(k1, CIN, COUT),
        "shortcut": conv_params(k2, CIN, COUT),
    }
    x = jax.random.normal(k3, (N, CIN, S, S, S), jnp.float32)

    # f32 MXU-input path: strict check against a HIGHEST-precision XLA reference.
    fwd = jax.jit(functools.partial(res_block_down, matmul_dtype=jnp.float32))
    out = jax.block_until_ready(fwd(x, params))
    assert out.shape == (N, COUT, S // 2, S // 2, S // 2), out.shape
    ref = res_block_down_ref(x, params, jnp.float32)
    err = float(jnp.max(jnp.abs(out - ref)))
    if not bool(jnp.allclose(out, ref, atol=1e-2, rtol=1e-2)):
        raise AssertionError(f"f32 path mismatch vs reference, max abs err = {err}")

    # bf16 MXU-input path (v6e/v7x): compared against a reference that also feeds
    # the convolutions bf16 inputs with f32 accumulation, so only accumulation
    # order differs.
    fwd16 = jax.jit(functools.partial(res_block_down, matmul_dtype=jnp.bfloat16))
    out16 = jax.block_until_ready(fwd16(x, params))
    ref16 = res_block_down_ref(x, params, jnp.bfloat16)
    err16 = float(jnp.max(jnp.abs(out16 - ref16)))
    if not bool(jnp.allclose(out16, ref16, atol=2e-2, rtol=2e-2)):
        raise AssertionError(f"bf16 path mismatch vs reference, max abs err = {err16}")

    print("KERNEL_OK")
</pallas_src>

<mosaic_0001>
module attributes {stable_mosaic.version = 11 : i64} {
  func.func @_patch_matmul_kernel(%arg0: i32, %arg1: memref<128x108xf32, #tpu.memory_space<vmem>>, %arg2: memref<108x8xf32, #tpu.memory_space<vmem>>, %arg3: memref<1x8xf32, #tpu.memory_space<vmem>>, %arg4: memref<128x8xf32, #tpu.memory_space<vmem>>, %arg5: memref<1x8x8xf32, #tpu.memory_space<vmem>>) attributes {dimension_semantics = [#tpu.dimension_semantics<parallel>], iteration_bounds = array<i64: 1>, scalar_prefetch = 0 : i64, scratch_operands = 0 : i64, tpu.core_type = #tpu.core_type<tc>, window_params = [{transform_indices = @transform_0, window_bounds = array<i64: 128, 108>}, {pipeline_mode = #tpu.pipeline_mode<synchronous>, transform_indices = @transform_1, window_bounds = array<i64: 108, 8>}, {pipeline_mode = #tpu.pipeline_mode<synchronous>, transform_indices = @transform_2, window_bounds = array<i64: 1, 8>}, {transform_indices = @transform_3, window_bounds = array<i64: 128, 8>}, {transform_indices = @transform_4, window_bounds = array<i64: 1, 8, 8>}]} {
    %c0 = arith.constant 0 : index
    %c0_0 = arith.constant 0 : index
    %0 = vector.load %arg1[%c0, %c0_0] : memref<128x108xf32, #tpu.memory_space<vmem>>, vector<128x108xf32>
    %c0_1 = arith.constant 0 : index
    %c0_2 = arith.constant 0 : index
    %1 = vector.load %arg2[%c0_1, %c0_2] : memref<108x8xf32, #tpu.memory_space<vmem>>, vector<108x8xf32>
    %cst = arith.constant dense<0.000000e+00> : vector<128x8xf32>
    %2 = tpu.matmul %0, %1, %cst {dimension_numbers = #tpu.dot_dimension_numbers<[1], [0], [0], [1], [0, 0, 1, 1], [], []>} : vector<128x108xf32>, vector<108x8xf32>, vector<128x8xf32> -> vector<128x8xf32>
    %c0_3 = arith.constant 0 : index
    %c0_4 = arith.constant 0 : index
    %3 = vector.load %arg3[%c0_3, %c0_4] : memref<1x8xf32, #tpu.memory_space<vmem>>, vector<1x8xf32>
    %4 = vector.broadcast %3 : vector<1x8xf32> to vector<128x8xf32>
    %5 = arith.addf %2, %4 : vector<128x8xf32>
    %cst_5 = arith.constant 0.000000e+00 : f32
    %6 = vector.broadcast %cst_5 : f32 to vector<128x8xf32>
    %7 = arith.cmpf ogt, %5, %6 : vector<128x8xf32>
    %cst_6 = arith.constant 2.000000e-01 : f32
    %8 = vector.broadcast %cst_6 : f32 to vector<128x8xf32>
    %9 = arith.mulf %8, %5 : vector<128x8xf32>
    %10 = arith.select %7, %5, %9 : vector<128x8xi1>, vector<128x8xf32>
    %c0_7 = arith.constant 0 : index
    %c0_8 = arith.constant 0 : index
    %11 = vector.load %arg4[%c0_7, %c0_8] : memref<128x8xf32, #tpu.memory_space<vmem>>, vector<128x8xf32>
    tpu.vector_store %arg4[%c0_7, %c0_8], %10 {strides = array<i32>} : memref<128x8xf32, #tpu.memory_space<vmem>>, vector<128x8xf32>,
    %12 = tpu.iota {dimensions = array<i32: 0>} : vector<128x8xi32>
    %c128_i32 = arith.constant 128 : i32
    %13 = arith.muli %arg0, %c128_i32 : i32
    %14 = vector.broadcast %13 : i32 to vector<128x8xi32>
    %15 = arith.addi %12, %14 : vector<128x8xi32>
    %c128_i32_9 = arith.constant 128 : i32
    %16 = vector.broadcast %c128_i32_9 : i32 to vector<128x8xi32>
    %17 = arith.cmpi slt, %15, %16 : vector<128x8xi32>
    %cst_10 = arith.constant 0.000000e+00 : f32
    %18 = vector.broadcast %cst_10 : f32 to vector<128x8xf32>
    %19 = arith.select %17, %10, %18 : vector<128x8xi1>, vector<128x8xf32>
    %cst_11 = arith.constant dense<0.000000e+00> : vector<8xf32>
    %20 = vector.multi_reduction <add>, %19, %cst_11 [0] : vector<128x8xf32> to vector<8xf32>
    %21 = vector.shape_cast %20 : vector<8xf32> to vector<1x8xf32>
    %22 = arith.mulf %19, %10 : vector<128x8xf32>
    %cst_12 = arith.constant dense<0.000000e+00> : vector<8xf32>
    %23 = vector.multi_reduction <add>, %22, %cst_12 [0] : vector<128x8xf32> to vector<8xf32>
    %24 = vector.shape_cast %23 : vector<8xf32> to vector<1x8xf32>
    %25 = tpu.iota {dimensions = array<i32: 0>} : vector<8x8xi32>
    %c0_i32 = arith.constant 0 : i32
    %26 = vector.broadcast %c0_i32 : i32 to vector<8x8xi32>
    %27 = arith.cmpi eq, %25, %26 : vector<8x8xi32>
    %c1_i32 = arith.constant 1 : i32
    %28 = vector.broadcast %c1_i32 : i32 to vector<8x8xi32>
    %29 = arith.cmpi eq, %25, %28 : vector<8x8xi32>
    %cst_13 = arith.constant 0.000000e+00 : f32
    %30 = vector.shape_cast %24 : vector<1x8xf32> to vector<1x8xf32>
    %31 = vector.broadcast %30 : vector<1x8xf32> to vector<8x8xf32>
    %32 = vector.broadcast %cst_13 : f32 to vector<8x8xf32>
    %33 = arith.select %29, %31, %32 : vector<8x8xi1>, vector<8x8xf32>
    %34 = vector.shape_cast %21 : vector<1x8xf32> to vector<1x8xf32>
    %35 = vector.broadcast %34 : vector<1x8xf32> to vector<8x8xf32>
    %36 = arith.select %27, %35, %33 : vector<8x8xi1>, vector<8x8xf32>
    %c0_14 = arith.constant 0 : index
    %c0_15 = arith.constant 0 : index
    %c0_16 = arith.constant 0 : index
    %37 = vector.load %arg5[%c0_14, %c0_15, %c0_16] : memref<1x8x8xf32, #tpu.memory_space<vmem>>, vector<1x8x8xf32>
    %38 = vector.shape_cast %37 : vector<1x8x8xf32> to vector<8x8xf32>
    %39 = vector.shape_cast %36 : vector<8x8xf32> to vector<1x8x8xf32>
    tpu.vector_store %arg5[%c0_14, %c0_15, %c0_16], %39 {strides = array<i32>} : memref<1x8x8xf32, #tpu.memory_space<vmem>>, vector<1x8x8xf32>,
    return
  }
  func.func @transform_0(%arg0: i32) -> (i32, i32) {
    %c0_i32 = arith.constant 0 : i32
    %c0_i32_0 = arith.constant 0 : i32
    return %arg0, %c0_i32 : i32, i32
  }
  func.func @transform_1(%arg0: i32) -> (i32, i32) {
    %c0_i32 = arith.constant 0 : i32
    %c0_i32_0 = arith.constant 0 : i32
    %c0_i32_1 = arith.constant 0 : i32
    return %c0_i32, %c0_i32_0 : i32, i32
  }
  func.func @transform_2(%arg0: i32) -> (i32, i32) {
    %c0_i32 = arith.constant 0 : i32
    %c0_i32_0 = arith.constant 0 : i32
    %c0_i32_1 = arith.constant 0 : i32
    return %c0_i32, %c0_i32_0 : i32, i32
  }
  func.func @transform_3(%arg0: i32) -> (i32, i32) {
    %c0_i32 = arith.constant 0 : i32
    %c0_i32_0 = arith.constant 0 : i32
    return %arg0, %c0_i32 : i32, i32
  }
  func.func @transform_4(%arg0: i32) -> (i32, i32, i32) {
    %c0_i32 = arith.constant 0 : i32
    %c0_i32_0 = arith.constant 0 : i32
    %c0_i32_1 = arith.constant 0 : i32
    return %arg0, %c0_i32, %c0_i32_0 : i32, i32, i32
  }
}

module attributes {stable_mosaic.version = 11 : i64} {
  func.func @_conv_s1_halo_kernel(%arg0: i32, %arg1: i32, %arg2: memref<1x1x10x10x4xf32, #tpu.memory_space<vmem>>, %arg3: memref<1x1x10x10x4xf32, #tpu.memory_space<vmem>>, %arg4: memref<1x1x10x10x4xf32, #tpu.memory_space<vmem>>, %arg5: memref<27x4x4xf32, #tpu.memory_space<vmem>>, %arg6: memref<1x4xf32, #tpu.memory_space<vmem>>, %arg7: memref<1x64x4xf32, #tpu.memory_space<vmem>>, %arg8: memref<1x8x4xf32, #tpu.memory_space<vmem>>) attributes {dimension_semantics = [#tpu.dimension_semantics<parallel>, #tpu.dimension_semantics<parallel>], iteration_bounds = array<i64: 2, 8>, scalar_prefetch = 0 : i64, scratch_operands = 0 : i64, tpu.core_type = #tpu.core_type<tc>, window_params = [{transform_indices = @transform_0, window_bounds = array<i64: 1, 1, 10, 10, 4>}, {transform_indices = @transform_1, window_bounds = array<i64: 1, 1, 10, 10, 4>}, {transform_indices = @transform_2, window_bounds = array<i64: 1, 1, 10, 10, 4>}, {pipeline_mode = #tpu.pipeline_mode<synchronous>, transform_indices = @transform_3, window_bounds = array<i64: 27, 4, 4>}, {pipeline_mode = #tpu.pipeline_mode<synchronous>, transform_indices = @transform_4, window_bounds = array<i64: 1, 4>}, {transform_indices = @transform_5, window_bounds = array<i64: 1, 64, 4>}, {transform_indices = @transform_6, window_bounds = array<i64: 1, 8, 4>}]} {
    %cst = arith.constant 0.000000e+00 : f32
    %0 = vector.broadcast %cst : f32 to vector<64x4xf32>
    %c0 = arith.constant 0 : index
    %c0_0 = arith.constant 0 : index
    %c0_1 = arith.constant 0 : index
    %c0_2 = arith.constant 0 : index
    %c0_3 = arith.constant 0 : index
    %1 = vector.load %arg2[%c0, %c0_0, %c0_1, %c0_2, %c0_3] : memref<1x1x10x10x4xf32, #tpu.memory_space<vmem>>, vector<1x1x10x10x4xf32>
    %2 = vector.shape_cast %1 : vector<1x1x10x10x4xf32> to vector<10x10x4xf32>
    %3 = vector.extract_strided_slice %2 {offsets = [0, 0, 0], sizes = [8, 8, 4], strides = [1, 1, 1]} : vector<10x10x4xf32> to vector<8x8x4xf32>
    %4 = vector.shape_cast %3 : vector<8x8x4xf32> to vector<64x4xf32>
    %c0_4 = arith.constant 0 : index
    %c0_5 = arith.constant 0 : index
    %c0_6 = arith.constant 0 : index
    %5 = vector.load %arg5[%c0_4, %c0_5, %c0_6] : memref<27x4x4xf32, #tpu.memory_space<vmem>>, vector<1x4x4xf32>
    %6 = vector.shape_cast %5 : vector<1x4x4xf32> to vector<4x4xf32>
    %cst_7 = arith.constant dense<0.000000e+00> : vector<64x4xf32>
    %7 = tpu.matmul %4, %6, %cst_7 {dimension_numbers = #tpu.dot_dimension_numbers<[1], [0], [0], [1], [0, 0, 1, 1], [], []>} : vector<64x4xf32>, vector<4x4xf32>, vector<64x4xf32> -> vector<64x4xf32>
    %8 = arith.addf %0, %7 : vector<64x4xf32>
    %9 = vector.extract_strided_slice %2 {offsets = [0, 1, 0], sizes = [8, 8, 4], strides = [1, 1, 1]} : vector<10x10x4xf32> to vector<8x8x4xf32>
    %10 = vector.shape_cast %9 : vector<8x8x4xf32> to vector<64x4xf32>
    %c1 = arith.constant 1 : index
    %c0_8 = arith.constant 0 : index
    %c0_9 = arith.constant 0 : index
    %11 = vector.load %arg5[%c1, %c0_8, %c0_9] : memref<27x4x4xf32, #tpu.memory_space<vmem>>, vector<1x4x4xf32>
    %12 = vector.shape_cast %11 : vector<1x4x4xf32> to vector<4x4xf32>
    %cst_10 = arith.constant dense<0.000000e+00> : vector<64x4xf32>
    %13 = tpu.matmul %10, %12, %cst_10 {dimension_numbers = #tpu.dot_dimension_numbers<[1], [0], [0], [1], [0, 0, 1, 1], [], []>} : vector<64x4xf32>, vector<4x4xf32>, vector<64x4xf32> -> vector<64x4xf32>
    %14 = arith.addf %8, %13 : vector<64x4xf32>
    %15 = vector.extract_strided_slice %2 {offsets = [0, 2, 0], sizes = [8, 8, 4], strides = [1, 1, 1]} : vector<10x10x4xf32> to vector<8x8x4xf32>
    %16 = vector.shape_cast %15 : vector<8x8x4xf32> to vector<64x4xf32>
    %c2 = arith.constant 2 : index
    %c0_11 = arith.constant 0 : index
    %c0_12 = arith.constant 0 : index
    %17 = vector.load %arg5[%c2, %c0_11, %c0_12] : memref<27x4x4xf32, #tpu.memory_space<vmem>>, vector<1x4x4xf32>
    %18 = vector.shape_cast %17 : vector<1x4x4xf32> to vector<4x4xf32>
    %cst_13 = arith.constant dense<0.000000e+00> : vector<64x4xf32>
    %19 = tpu.matmul %16, %18, %cst_13 {dimension_numbers = #tpu.dot_dimension_numbers<[1], [0], [0], [1], [0, 0, 1, 1], [], []>} : vector<64x4xf32>, vector<4x4xf32>, vector<64x4xf32> -> vector<64x4xf32>
    %20 = arith.addf %14, %19 : vector<64x4xf32>
    %21 = vector.extract_strided_slice %2 {offsets = [1, 0, 0], sizes = [8, 8, 4], strides = [1, 1, 1]} : vector<10x10x4xf32> to vector<8x8x4xf32>
    %22 = vector.shape_cast %21 : vector<8x8x4xf32> to vector<64x4xf32>
    %c3 = arith.constant 3 : index
    %c0_14 = arith.constant 0 : index
    %c0_15 = arith.constant 0 : index
    %23 = vector.load %arg5[%c3, %c0_14, %c0_15] : memref<27x4x4xf32, #tpu.memory_space<vmem>>, vector<1x4x4xf32>
    %24 = vector.shape_cast %23 : vector<1x4x4xf32> to vector<4x4xf32>
    %cst_16 = arith.constant dense<0.000000e+00> : vector<64x4xf32>
    %25 = tpu.matmul %22, %24, %cst_16 {dimension_numbers = #tpu.dot_dimension_numbers<[1], [0], [0], [1], [0, 0, 1, 1], [], []>} : vector<64x4xf32>, vector<4x4xf32>, vector<64x4xf32> -> vector<64x4xf32>
    %26 = arith.addf %20, %25 : vector<64x4xf32>
    %27 = vector.extract_strided_slice %2 {offsets = [1, 1, 0], sizes = [8, 8, 4], strides = [1, 1, 1]} : vector<10x10x4xf32> to vector<8x8x4xf32>
    %28 = vector.shape_cast %27 : vector<8x8x4xf32> to vector<64x4xf32>
    %c4 = arith.constant 4 : index
    %c0_17 = arith.constant 0 : index
    %c0_18 = arith.constant 0 : index
    %29 = vector.load %arg5[%c4, %c0_17, %c0_18] : memref<27x4x4xf32, #tpu.memory_space<vmem>>, vector<1x4x4xf32>
    %30 = vector.shape_cast %29 : vector<1x4x4xf32> to vector<4x4xf32>
    %cst_19 = arith.constant dense<0.000000e+00> : vector<64x4xf32>
    %31 = tpu.matmul %28, %30, %cst_19 {dimension_numbers = #tpu.dot_dimension_numbers<[1], [0], [0], [1], [0, 0, 1, 1], [], []>} : vector<64x4xf32>, vector<4x4xf32>, vector<64x4xf32> -> vector<64x4xf32>
    %32 = arith.addf %26, %31 : vector<64x4xf32>
    %33 = vector.extract_strided_slice %2 {offsets = [1, 2, 0], sizes = [8, 8, 4], strides = [1, 1, 1]} : vector<10x10x4xf32> to vector<8x8x4xf32>
    %34 = vector.shape_cast %33 : vector<8x8x4xf32> to vector<64x4xf32>
    %c5 = arith.constant 5 : index
    %c0_20 = arith.constant 0 : index
    %c0_21 = arith.constant 0 : index
    %35 = vector.load %arg5[%c5, %c0_20, %c0_21] : memref<27x4x4xf32, #tpu.memory_space<vmem>>, vector<1x4x4xf32>
    %36 = vector.shape_cast %35 : vector<1x4x4xf32> to vector<4x4xf32>
    %cst_22 = arith.constant dense<0.000000e+00> : vector<64x4xf32>
    %37 = tpu.matmul %34, %36, %cst_22 {dimension_numbers = #tpu.dot_dimension_numbers<[1], [0], [0], [1], [0, 0, 1, 1], [], []>} : vector<64x4xf32>, vector<4x4xf32>, vector<64x4xf32> -> vector<64x4xf32>
    %38 = arith.addf %32, %37 : vector<64x4xf32>
    %39 = vector.extract_strided_slice %2 {offsets = [2, 0, 0], sizes = [8, 8, 4], strides = [1, 1, 1]} : vector<10x10x4xf32> to vector<8x8x4xf32>
    %40 = vector.shape_cast %39 : vector<8x8x4xf32> to vector<64x4xf32>
    %c6 = arith.constant 6 : index
    %c0_23 = arith.constant 0 : index
    %c0_24 = arith.constant 0 : index
    %41 = vector.load %arg5[%c6, %c0_23, %c0_24] : memref<27x4x4xf32, #tpu.memory_space<vmem>>, vector<1x4x4xf32>
    %42 = vector.shape_cast %41 : vector<1x4x4xf32> to vector<4x4xf32>
    %cst_25 = arith.constant dense<0.000000e+00> : vector<64x4xf32>
    %43 = tpu.matmul %40, %42, %cst_25 {dimension_numbers = #tpu.dot_dimension_numbers<[1], [0], [0], [1], [0, 0, 1, 1], [], []>} : vector<64x4xf32>, vector<4x4xf32>, vector<64x4xf32> -> vector<64x4xf32>
    %44 = arith.addf %38, %43 : vector<64x4xf32>
    %45 = vector.extract_strided_slice %2 {offsets = [2, 1, 0], sizes = [8, 8, 4], strides = [1, 1, 1]} : vector<10x10x4xf32> to vector<8x8x4xf32>
    %46 = vector.shape_cast %45 : vector<8x8x4xf32> to vector<64x4xf32>
    %c7 = arith.constant 7 : index
    %c0_26 = arith.constant 0 : index
    %c0_27 = arith.constant 0 : index
    %47 = vector.load %arg5[%c7, %c0_26, %c0_27] : memref<27x4x4xf32, #tpu.memory_space<vmem>>, vector<1x4x4xf32>
    %48 = vector.shape_cast %47 : vector<1x4x4xf32> to vector<4x4xf32>
    %cst_28 = arith.constant dense<0.000000e+00> : vector<64x4xf32>
    %49 = tpu.matmul %46, %48, %cst_28 {dimension_numbers = #tpu.dot_dimension_numbers<[1], [0], [0], [1], [0, 0, 1, 1], [], []>} : vector<64x4xf32>, vector<4x4xf32>, vector<64x4xf32> -> vector<64x4xf32>
    %50 = arith.addf %44, %49 : vector<64x4xf32>
    %51 = vector.extract_strided_slice %2 {offsets = [2, 2, 0], sizes = [8, 8, 4], strides = [1, 1, 1]} : vector<10x10x4xf32> to vector<8x8x4xf32>
    %52 = vector.shape_cast %51 : vector<8x8x4xf32> to vector<64x4xf32>
    %c8 = arith.constant 8 : index
    %c0_29 = arith.constant 0 : index
    %c0_30 = arith.constant 0 : index
    %53 = vector.load %arg5[%c8, %c0_29, %c0_30] : memref<27x4x4xf32, #tpu.memory_space<vmem>>, vector<1x4x4xf32>
    %54 = vector.shape_cast %53 : vector<1x4x4xf32> to vector<4x4xf32>
    %cst_31 = arith.constant dense<0.000000e+00> : vector<64x4xf32>
    %55 = tpu.matmul %52, %54, %cst_31 {dimension_numbers = #tpu.dot_dimension_numbers<[1], [0], [0], [1], [0, 0, 1, 1], [], []>} : vector<64x4xf32>, vector<4x4xf32>, vector<64x4xf32> -> vector<64x4xf32>
    %56 = arith.addf %50, %55 : vector<64x4xf32>
    %c0_32 = arith.constant 0 : index
    %c0_33 = arith.constant 0 : index
    %c0_34 = arith.constant 0 : index
    %c0_35 = arith.constant 0 : index
    %c0_36 = arith.constant 0 : index
    %57 = vector.load %arg3[%c0_32, %c0_33, %c0_34, %c0_35, %c0_36] : memref<1x1x10x10x4xf32, #tpu.memory_space<vmem>>, vector<1x1x10x10x4xf32>
    %58 = vector.shape_cast %57 : vector<1x1x10x10x4xf32> to vector<10x10x4xf32>
    %59 = vector.extract_strided_slice %58 {offsets = [0, 0, 0], sizes = [8, 8, 4], strides = [1, 1, 1]} : vector<10x10x4xf32> to vector<8x8x4xf32>
    %60 = vector.shape_cast %59 : vector<8x8x4xf32> to vector<64x4xf32>
    %c9 = arith.constant 9 : index
    %c0_37 = arith.constant 0 : index
    %c0_38 = arith.constant 0 : index
    %61 = vector.load %arg5[%c9, %c0_37, %c0_38] : memref<27x4x4xf32, #tpu.memory_space<vmem>>, vector<1x4x4xf32>
    %62 = vector.shape_cast %61 : vector<1x4x4xf32> to vector<4x4xf32>
    %cst_39 = arith.constant dense<0.000000e+00> : vector<64x4xf32>
    %63 = tpu.matmul %60, %62, %cst_39 {dimension_numbers = #tpu.dot_dimension_numbers<[1], [0], [0], [1], [0, 0, 1, 1], [], []>} : vector<64x4xf32>, vector<4x4xf32>, vector<64x4xf32> -> vector<64x4xf32>
    %64 = arith.addf %56, %63 : vector<64x4xf32>
    %65 = vector.extract_strided_slice %58 {offsets = [0, 1, 0], sizes = [8, 8, 4], strides = [1, 1, 1]} : vector<10x10x4xf32> to vector<8x8x4xf32>
    %66 = vector.shape_cast %65 : vector<8x8x4xf32> to vector<64x4xf32>
    %c10 = arith.constant 10 : index
    %c0_40 = arith.constant 0 : index
    %c0_41 = arith.constant 0 : index
    %67 = vector.load %arg5[%c10, %c0_40, %c0_41] : memref<27x4x4xf32, #tpu.memory_space<vmem>>, vector<1x4x4xf32>
    %68 = vector.shape_cast %67 : vector<1x4x4xf32> to vector<4x4xf32>
    %cst_42 = arith.constant dense<0.000000e+00> : vector<64x4xf32>
    %69 = tpu.matmul %66, %68, %cst_42 {dimension_numbers = #tpu.dot_dimension_numbers<[1], [0], [0], [1], [0, 0, 1, 1], [], []>} : vector<64x4xf32>, vector<4x4xf32>, vector<64x4xf32> -> vector<64x4xf32>
    %70 = arith.addf %64, %69 : vector<64x4xf32>
    %71 = vector.extract_strided_slice %58 {offsets = [0, 2, 0], sizes = [8, 8, 4], strides = [1, 1, 1]} : vector<10x10x4xf32> to vector<8x8x4xf32>
    %72 = vector.shape_cast %71 : vector<8x8x4xf32> to vector<64x4xf32>
    %c11 = arith.constant 11 : index
    %c0_43 = arith.constant 0 : index
    %c0_44 = arith.constant 0 : index
    %73 = vector.load %arg5[%c11, %c0_43, %c0_44] : memref<27x4x4xf32, #tpu.memory_space<vmem>>, vector<1x4x4xf32>
    %74 = vector.shape_cast %73 : vector<1x4x4xf32> to vector<4x4xf32>
    %cst_45 = arith.constant dense<0.000000e+00> : vector<64x4xf32>
    %75 = tpu.matmul %72, %74, %cst_45 {dimension_numbers = #tpu.dot_dimension_numbers<[1], [0], [0], [1], [0, 0, 1, 1], [], []>} : vector<64x4xf32>, vector<4x4xf32>, vector<64x4xf32> -> vector<64x4xf32>
    %76 = arith.addf %70, %75 : vector<64x4xf32>
    %77 = vector.extract_strided_slice %58 {offsets = [1, 0, 0], sizes = [8, 8, 4], strides = [1, 1, 1]} : vector<10x10x4xf32> to vector<8x8x4xf32>
    %78 = vector.shape_cast %77 : vector<8x8x4xf32> to vector<64x4xf32>
    %c12 = arith.constant 12 : index
    %c0_46 = arith.constant 0 : index
    %c0_47 = arith.constant 0 : index
    %79 = vector.load %arg5[%c12, %c0_46, %c0_47] : memref<27x4x4xf32, #tpu.memory_space<vmem>>, vector<1x4x4xf32>
    %80 = vector.shape_cast %79 : vector<1x4x4xf32> to vector<4x4xf32>
    %cst_48 = arith.constant dense<0.000000e+00> : vector<64x4xf32>
    %81 = tpu.matmul %78, %80, %cst_48 {dimension_numbers = #tpu.dot_dimension_numbers<[1], [0], [0], [1], [0, 0, 1, 1], [], []>} : vector<64x4xf32>, vector<4x4xf32>, vector<64x4xf32> -> vector<64x4xf32>
    %82 = arith.addf %76, %81 : vector<64x4xf32>
    %83 = vector.extract_strided_slice %58 {offsets = [1, 1, 0], sizes = [8, 8, 4], strides = [1, 1, 1]} : vector<10x10x4xf32> to vector<8x8x4xf32>
    %84 = vector.shape_cast %83 : vector<8x8x4xf32> to vector<64x4xf32>
    %c13 = arith.constant 13 : index
    %c0_49 = arith.constant 0 : index
    %c0_50 = arith.constant 0 : index
    %85 = vector.load %arg5[%c13, %c0_49, %c0_50] : memref<27x4x4xf32, #tpu.memory_space<vmem>>, vector<1x4x4xf32>
    %86 = vector.shape_cast %85 : vector<1x4x4xf32> to vector<4x4xf32>
    %cst_51 = arith.constant dense<0.000000e+00> : vector<64x4xf32>
    %87 = tpu.matmul %84, %86, %cst_51 {dimension_numbers = #tpu.dot_dimension_numbers<[1], [0], [0], [1], [0, 0, 1, 1], [], []>} : vector<64x4xf32>, vector<4x4xf32>, vector<64x4xf32> -> vector<64x4xf32>
    %88 = arith.addf %82, %87 : vector<64x4xf32>
    %89 = vector.extract_strided_slice %58 {offsets = [1, 2, 0], sizes = [8, 8, 4], strides = [1, 1, 1]} : vector<10x10x4xf32> to vector<8x8x4xf32>
    %90 = vector.shape_cast %89 : vector<8x8x4xf32> to vector<64x4xf32>
    %c14 = arith.constant 14 : index
    %c0_52 = arith.constant 0 : index
    %c0_53 = arith.constant 0 : index
    %91 = vector.load %arg5[%c14, %c0_52, %c0_53] : memref<27x4x4xf32, #tpu.memory_space<vmem>>, vector<1x4x4xf32>
    %92 = vector.shape_cast %91 : vector<1x4x4xf32> to vector<4x4xf32>
    %cst_54 = arith.constant dense<0.000000e+00> : vector<64x4xf32>
    %93 = tpu.matmul %90, %92, %cst_54 {dimension_numbers = #tpu.dot_dimension_numbers<[1], [0], [0], [1], [0, 0, 1, 1], [], []>} : vector<64x4xf32>, vector<4x4xf32>, vector<64x4xf32> -> vector<64x4xf32>
    %94 = arith.addf %88, %93 : vector<64x4xf32>
    %95 = vector.extract_strided_slice %58 {offsets = [2, 0, 0], sizes = [8, 8, 4], strides = [1, 1, 1]} : vector<10x10x4xf32> to vector<8x8x4xf32>
    %96 = vector.shape_cast %95 : vector<8x8x4xf32> to vector<64x4xf32>
    %c15 = arith.constant 15 : index
    %c0_55 = arith.constant 0 : index
    %c0_56 = arith.constant 0 : index
    %97 = vector.load %arg5[%c15, %c0_55, %c0_56] : memref<27x4x4xf32, #tpu.memory_space<vmem>>, vector<1x4x4xf32>
    %98 = vector.shape_cast %97 : vector<1x4x4xf32> to vector<4x4xf32>
    %cst_57 = arith.constant dense<0.000000e+00> : vector<64x4xf32>
    %99 = tpu.matmul %96, %98, %cst_57 {dimension_numbers = #tpu.dot_dimension_numbers<[1], [0], [0], [1], [0, 0, 1, 1], [], []>} : vector<64x4xf32>, vector<4x4xf32>, vector<64x4xf32> -> vector<64x4xf32>
    %100 = arith.addf %94, %99 : vector<64x4xf32>
    %101 = vector.extract_strided_slice %58 {offsets = [2, 1, 0], sizes = [8, 8, 4], strides = [1, 1, 1]} : vector<10x10x4xf32> to vector<8x8x4xf32>
    %102 = vector.shape_cast %101 : vector<8x8x4xf32> to vector<64x4xf32>
    %c16 = arith.constant 16 : index
    %c0_58 = arith.constant 0 : index
    %c0_59 = arith.constant 0 : index
    %103 = vector.load %arg5[%c16, %c0_58, %c0_59] : memref<27x4x4xf32, #tpu.memory_space<vmem>>, vector<1x4x4xf32>
    %104 = vector.shape_cast %103 : vector<1x4x4xf32> to vector<4x4xf32>
    %cst_60 = arith.constant dense<0.000000e+00> : vector<64x4xf32>
    %105 = tpu.matmul %102, %104, %cst_60 {dimension_numbers = #tpu.dot_dimension_numbers<[1], [0], [0], [1], [0, 0, 1, 1], [], []>} : vector<64x4xf32>, vector<4x4xf32>, vector<64x4xf32> -> vector<64x4xf32>
    %106 = arith.addf %100, %105 : vector<64x4xf32>
    %107 = vector.extract_strided_slice %58 {offsets = [2, 2, 0], sizes = [8, 8, 4], strides = [1, 1, 1]} : vector<10x10x4xf32> to vector<8x8x4xf32>
    %108 = vector.shape_cast %107 : vector<8x8x4xf32> to vector<64x4xf32>
    %c17 = arith.constant 17 : index
    %c0_61 = arith.constant 0 : index
    %c0_62 = arith.constant 0 : index
    %109 = vector.load %arg5[%c17, %c0_61, %c0_62] : memref<27x4x4xf32, #tpu.memory_space<vmem>>, vector<1x4x4xf32>
    %110 = vector.shape_cast %109 : vector<1x4x4xf32> to vector<4x4xf32>
    %cst_63 = arith.constant dense<0.000000e+00> : vector<64x4xf32>
    %111 = tpu.matmul %108, %110, %cst_63 {dimension_numbers = #tpu.dot_dimension_numbers<[1], [0], [0], [1], [0, 0, 1, 1], [], []>} : vector<64x4xf32>, vector<4x4xf32>, vector<64x4xf32> -> vector<64x4xf32>
    %112 = arith.addf %106, %111 : vector<64x4xf32>
    %c0_64 = arith.constant 0 : index
    %c0_65 = arith.constant 0 : index
    %c0_66 = arith.constant 0 : index
    %c0_67 = arith.constant 0 : index
    %c0_68 = arith.constant 0 : index
    %113 = vector.load %arg4[%c0_64, %c0_65, %c0_66, %c0_67, %c0_68] : memref<1x1x10x10x4xf32, #tpu.memory_space<vmem>>, vector<1x1x10x10x4xf32>
    %114 = vector.shape_cast %113 : vector<1x1x10x10x4xf32> to vector<10x10x4xf32>
    %115 = vector.extract_strided_slice %114 {offsets = [0, 0, 0], sizes = [8, 8, 4], strides = [1, 1, 1]} : vector<10x10x4xf32> to vector<8x8x4xf32>
    %116 = vector.shape_cast %115 : vector<8x8x4xf32> to vector<64x4xf32>
    %c18 = arith.constant 18 : index
    %c0_69 = arith.constant 0 : index
    %c0_70 = arith.constant 0 : index
    %117 = vector.load %arg5[%c18, %c0_69, %c0_70] : memref<27x4x4xf32, #tpu.memory_space<vmem>>, vector<1x4x4xf32>
    %118 = vector.shape_cast %117 : vector<1x4x4xf32> to vector<4x4xf32>
    %cst_71 = arith.constant dense<0.000000e+00> : vector<64x4xf32>
    %119 = tpu.matmul %116, %118, %cst_71 {dimension_numbers = #tpu.dot_dimension_numbers<[1], [0], [0], [1], [0, 0, 1, 1], [], []>} : vector<64x4xf32>, vector<4x4xf32>, vector<64x4xf32> -> vector<64x4xf32>
    %120 = arith.addf %112, %119 : vector<64x4xf32>
    %121 = vector.extract_strided_slice %114 {offsets = [0, 1, 0], sizes = [8, 8, 4], strides = [1, 1, 1]} : vector<10x10x4xf32> to vector<8x8x4xf32>
    %122 = vector.shape_cast %121 : vector<8x8x4xf32> to vector<64x4xf32>
    %c19 = arith.constant 19 : index
    %c0_72 = arith.constant 0 : index
    %c0_73 = arith.constant 0 : index
    %123 = vector.load %arg5[%c19, %c0_72, %c0_73] : memref<27x4x4xf32, #tpu.memory_space<vmem>>, vector<1x4x4xf32>
    %124 = vector.shape_cast %123 : vector<1x4x4xf32> to vector<4x4xf32>
    %cst_74 = arith.constant dense<0.000000e+00> : vector<64x4xf32>
    %125 = tpu.matmul %122, %124, %cst_74 {dimension_numbers = #tpu.dot_dimension_numbers<[1], [0], [0], [1], [0, 0, 1, 1], [], []>} : vector<64x4xf32>, vector<4x4xf32>, vector<64x4xf32> -> vector<64x4xf32>
    %126 = arith.addf %120, %125 : vector<64x4xf32>
    %127 = vector.extract_strided_slice %114 {offsets = [0, 2, 0], sizes = [8, 8, 4], strides = [1, 1, 1]} : vector<10x10x4xf32> to vector<8x8x4xf32>
    %128 = vector.shape_cast %127 : vector<8x8x4xf32> to vector<64x4xf32>
    %c20 = arith.constant 20 : index
    %c0_75 = arith.constant 0 : index
    %c0_76 = arith.constant 0 : index
    %129 = vector.load %arg5[%c20, %c0_75, %c0_76] : memref<27x4x4xf32, #tpu.memory_space<vmem>>, vector<1x4x4xf32>
    %130 = vector.shape_cast %129 : vector<1x4x4xf32> to vector<4x4xf32>
    %cst_77 = arith.constant dense<0.000000e+00> : vector<64x4xf32>
    %131 = tpu.matmul %128, %130, %cst_77 {dimension_numbers = #tpu.dot_dimension_numbers<[1], [0], [0], [1], [0, 0, 1, 1], [], []>} : vector<64x4xf32>, vector<4x4xf32>, vector<64x4xf32> -> vector<64x4xf32>
    %132 = arith.addf %126, %131 : vector<64x4xf32>
    %133 = vector.extract_strided_slice %114 {offsets = [1, 0, 0], sizes = [8, 8, 4], strides = [1, 1, 1]} : vector<10x10x4xf32> to vector<8x8x4xf32>
    %134 = vector.shape_cast %133 : vector<8x8x4xf32> to vector<64x4xf32>
    %c21 = arith.constant 21 : index
    %c0_78 = arith.constant 0 : index
    %c0_79 = arith.constant 0 : index
    %135 = vector.load %arg5[%c21, %c0_78, %c0_79] : memref<27x4x4xf32, #tpu.memory_space<vmem>>, vector<1x4x4xf32>
    %136 = vector.shape_cast %135 : vector<1x4x4xf32> to vector<4x4xf32>
    %cst_80 = arith.constant dense<0.000000e+00> : vector<64x4xf32>
    %137 = tpu.matmul %134, %136, %cst_80 {dimension_numbers = #tpu.dot_dimension_numbers<[1], [0], [0], [1], [0, 0, 1, 1], [], []>} : vector<64x4xf32>, vector<4x4xf32>, vector<64x4xf32> -> vector<64x4xf32>
    %138 = arith.addf %132, %137 : vector<64x4xf32>
    %139 = vector.extract_strided_slice %114 {offsets = [1, 1, 0], sizes = [8, 8, 4], strides = [1, 1, 1]} : vector<10x10x4xf32> to vector<8x8x4xf32>
    %140 = vector.shape_cast %139 : vector<8x8x4xf32> to vector<64x4xf32>
    %c22 = arith.constant 22 : index
    %c0_81 = arith.constant 0 : index
    %c0_82 = arith.constant 0 : index
    %141 = vector.load %arg5[%c22, %c0_81, %c0_82] : memref<27x4x4xf32, #tpu.memory_space<vmem>>, vector<1x4x4xf32>
    %142 = vector.shape_cast %141 : vector<1x4x4xf32> to vector<4x4xf32>
    %cst_83 = arith.constant dense<0.000000e+00> : vector<64x4xf32>
    %143 = tpu.matmul %140, %142, %cst_83 {dimension_numbers = #tpu.dot_dimension_numbers<[1], [0], [0], [1], [0, 0, 1, 1], [], []>} : vector<64x4xf32>, vector<4x4xf32>, vector<64x4xf32> -> vector<64x4xf32>
    %144 = arith.addf %138, %143 : vector<64x4xf32>
    %145 = vector.extract_strided_slice %114 {offsets = [1, 2, 0], sizes = [8, 8, 4], strides = [1, 1, 1]} : vector<10x10x4xf32> to vector<8x8x4xf32>
    %146 = vector.shape_cast %145 : vector<8x8x4xf32> to vector<64x4xf32>
    %c23 = arith.constant 23 : index
    %c0_84 = arith.constant 0 : index
    %c0_85 = arith.constant 0 : index
    %147 = vector.load %arg5[%c23, %c0_84, %c0_85] : memref<27x4x4xf32, #tpu.memory_space<vmem>>, vector<1x4x4xf32>
    %148 = vector.shape_cast %147 : vector<1x4x4xf32> to vector<4x4xf32>
    %cst_86 = arith.constant dense<0.000000e+00> : vector<64x4xf32>
    %149 = tpu.matmul %146, %148, %cst_86 {dimension_numbers = #tpu.dot_dimension_numbers<[1], [0], [0], [1], [0, 0, 1, 1], [], []>} : vector<64x4xf32>, vector<4x4xf32>, vector<64x4xf32> -> vector<64x4xf32>
    %150 = arith.addf %144, %149 : vector<64x4xf32>
    %151 = vector.extract_strided_slice %114 {offsets = [2, 0, 0], sizes = [8, 8, 4], strides = [1, 1, 1]} : vector<10x10x4xf32> to vector<8x8x4xf32>
    %152 = vector.shape_cast %151 : vector<8x8x4xf32> to vector<64x4xf32>
    %c24 = arith.constant 24 : index
    %c0_87 = arith.constant 0 : index
    %c0_88 = arith.constant 0 : index
    %153 = vector.load %arg5[%c24, %c0_87, %c0_88] : memref<27x4x4xf32, #tpu.memory_space<vmem>>, vector<1x4x4xf32>
    %154 = vector.shape_cast %153 : vector<1x4x4xf32> to vector<4x4xf32>
    %cst_89 = arith.constant dense<0.000000e+00> : vector<64x4xf32>
    %155 = tpu.matmul %152, %154, %cst_89 {dimension_numbers = #tpu.dot_dimension_numbers<[1], [0], [0], [1], [0, 0, 1, 1], [], []>} : vector<64x4xf32>, vector<4x4xf32>, vector<64x4xf32> -> vector<64x4xf32>
    %156 = arith.addf %150, %155 : vector<64x4xf32>
    %157 = vector.extract_strided_slice %114 {offsets = [2, 1, 0], sizes = [8, 8, 4], strides = [1, 1, 1]} : vector<10x10x4xf32> to vector<8x8x4xf32>
    %158 = vector.shape_cast %157 : vector<8x8x4xf32> to vector<64x4xf32>
    %c25 = arith.constant 25 : index
    %c0_90 = arith.constant 0 : index
    %c0_91 = arith.constant 0 : index
    %159 = vector.load %arg5[%c25, %c0_90, %c0_91] : memref<27x4x4xf32, #tpu.memory_space<vmem>>, vector<1x4x4xf32>
    %160 = vector.shape_cast %159 : vector<1x4x4xf32> to vector<4x4xf32>
    %cst_92 = arith.constant dense<0.000000e+00> : vector<64x4xf32>
    %161 = tpu.matmul %158, %160, %cst_92 {dimension_numbers = #tpu.dot_dimension_numbers<[1], [0], [0], [1], [0, 0, 1, 1], [], []>} : vector<64x4xf32>, vector<4x4xf32>, vector<64x4xf32> -> vector<64x4xf32>
    %162 = arith.addf %156, %161 : vector<64x4xf32>
    %163 = vector.extract_strided_slice %114 {offsets = [2, 2, 0], sizes = [8, 8, 4], strides = [1, 1, 1]} : vector<10x10x4xf32> to vector<8x8x4xf32>
    %164 = vector.shape_cast %163 : vector<8x8x4xf32> to vector<64x4xf32>
    %c26 = arith.constant 26 : index
    %c0_93 = arith.constant 0 : index
    %c0_94 = arith.constant 0 : index
    %165 = vector.load %arg5[%c26, %c0_93, %c0_94] : memref<27x4x4xf32, #tpu.memory_space<vmem>>, vector<1x4x4xf32>
    %166 = vector.shape_cast %165 : vector<1x4x4xf32> to vector<4x4xf32>
    %cst_95 = arith.constant dense<0.000000e+00> : vector<64x4xf32>
    %167 = tpu.matmul %164, %166, %cst_95 {dimension_numbers = #tpu.dot_dimension_numbers<[1], [0], [0], [1], [0, 0, 1, 1], [], []>} : vector<64x4xf32>, vector<4x4xf32>, vector<64x4xf32> -> vector<64x4xf32>
    %168 = arith.addf %162, %167 : vector<64x4xf32>
    %c0_96 = arith.constant 0 : index
    %c0_97 = arith.constant 0 : index
    %169 = vector.load %arg6[%c0_96, %c0_97] : memref<1x4xf32, #tpu.memory_space<vmem>>, vector<1x4xf32>
    %170 = vector.broadcast %169 : vector<1x4xf32> to vector<64x4xf32>
    %171 = arith.addf %168, %170 : vector<64x4xf32>
    %cst_98 = arith.constant 0.000000e+00 : f32
    %172 = vector.broadcast %cst_98 : f32 to vector<64x4xf32>
    %173 = arith.cmpf ogt, %171, %172 : vector<64x4xf32>
    %cst_99 = arith.constant 2.000000e-01 : f32
    %174 = vector.broadcast %cst_99 : f32 to vector<64x4xf32>
    %175 = arith.mulf %174, %171 : vector<64x4xf32>
    %176 = arith.select %173, %171, %175 : vector<64x4xi1>, vector<64x4xf32>
    %c0_100 = arith.constant 0 : index
    %c0_101 = arith.constant 0 : index
    %c0_102 = arith.constant 0 : index
    %177 = vector.load %arg7[%c0_100, %c0_101, %c0_102] : memref<1x64x4xf32, #tpu.memory_space<vmem>>, vector<1x64x4xf32>
    %178 = vector.shape_cast %177 : vector<1x64x4xf32> to vector<64x4xf32>
    %179 = vector.shape_cast %176 : vector<64x4xf32> to vector<1x64x4xf32>
    tpu.vector_store %arg7[%c0_100, %c0_101, %c0_102], %179 {strides = array<i32>} : memref<1x64x4xf32, #tpu.memory_space<vmem>>, vector<1x64x4xf32>,
    %cst_103 = arith.constant dense<0.000000e+00> : vector<4xf32>
    %180 = vector.multi_reduction <add>, %176, %cst_103 [0] : vector<64x4xf32> to vector<4xf32>
    %181 = vector.shape_cast %180 : vector<4xf32> to vector<1x4xf32>
    %182 = arith.mulf %176, %176 : vector<64x4xf32>
    %cst_104 = arith.constant dense<0.000000e+00> : vector<4xf32>
    %183 = vector.multi_reduction <add>, %182, %cst_104 [0] : vector<64x4xf32> to vector<4xf32>
    %184 = vector.shape_cast %183 : vector<4xf32> to vector<1x4xf32>
    %185 = tpu.iota {dimensions = array<i32: 0>} : vector<8x4xi32>
    %c0_i32 = arith.constant 0 : i32
    %186 = vector.broadcast %c0_i32 : i32 to vector<8x4xi32>
    %187 = arith.cmpi eq, %185, %186 : vector<8x4xi32>
    %c1_i32 = arith.constant 1 : i32
    %188 = vector.broadcast %c1_i32 : i32 to vector<8x4xi32>
    %189 = arith.cmpi eq, %185, %188 : vector<8x4xi32>
    %cst_105 = arith.constant 0.000000e+00 : f32
    %190 = vector.shape_cast %184 : vector<1x4xf32> to vector<1x4xf32>
    %191 = vector.broadcast %190 : vector<1x4xf32> to vector<8x4xf32>
    %192 = vector.broadcast %cst_105 : f32 to vector<8x4xf32>
    %193 = arith.select %189, %191, %192 : vector<8x4xi1>, vector<8x4xf32>
    %194 = vector.shape_cast %181 : vector<1x4xf32> to vector<1x4xf32>
    %195 = vector.broadcast %194 : vector<1x4xf32> to vector<8x4xf32>
    %196 = arith.select %187, %195, %193 : vector<8x4xi1>, vector<8x4xf32>
    %c0_106 = arith.constant 0 : index
    %c0_107 = arith.constant 0 : index
    %c0_108 = arith.constant 0 : index
    %197 = vector.load %arg8[%c0_106, %c0_107, %c0_108] : memref<1x8x4xf32, #tpu.memory_space<vmem>>, vector<1x8x4xf32>
    %198 = vector.shape_cast %197 : vector<1x8x4xf32> to vector<8x4xf32>
    %199 = vector.shape_cast %196 : vector<8x4xf32> to vector<1x8x4xf32>
    tpu.vector_store %arg8[%c0_106, %c0_107, %c0_108], %199 {strides = array<i32>} : memref<1x8x4xf32, #tpu.memory_space<vmem>>, vector<1x8x4xf32>,
    return
  }
  func.func @transform_0(%arg0: i32, %arg1: i32) -> (i32, i32, i32, i32, i32) {
    %c0_i32 = arith.constant 0 : i32
    %0 = arith.addi %arg1, %c0_i32 : i32
    %c0_i32_0 = arith.constant 0 : i32
    %c0_i32_1 = arith.constant 0 : i32
    %c0_i32_2 = arith.constant 0 : i32
    %c0_i32_3 = arith.constant 0 : i32
    return %arg0, %0, %c0_i32_0, %c0_i32_1, %c0_i32_2 : i32, i32, i32, i32, i32
  }
  func.func @transform_1(%arg0: i32, %arg1: i32) -> (i32, i32, i32, i32, i32) {
    %c1_i32 = arith.constant 1 : i32
    %0 = arith.addi %arg1, %c1_i32 : i32
    %c0_i32 = arith.constant 0 : i32
    %c0_i32_0 = arith.constant 0 : i32
    %c0_i32_1 = arith.constant 0 : i32
    %c0_i32_2 = arith.constant 0 : i32
    return %arg0, %0, %c0_i32, %c0_i32_0, %c0_i32_1 : i32, i32, i32, i32, i32
  }
  func.func @transform_2(%arg0: i32, %arg1: i32) -> (i32, i32, i32, i32, i32) {
    %c2_i32 = arith.constant 2 : i32
    %0 = arith.addi %arg1, %c2_i32 : i32
    %c0_i32 = arith.constant 0 : i32
    %c0_i32_0 = arith.constant 0 : i32
    %c0_i32_1 = arith.constant 0 : i32
    %c0_i32_2 = arith.constant 0 : i32
    return %arg0, %0, %c0_i32, %c0_i32_0, %c0_i32_1 : i32, i32, i32, i32, i32
  }
  func.func @transform_3(%arg0: i32, %arg1: i32) -> (i32, i32, i32) {
    %c0_i32 = arith.constant 0 : i32
    %c0_i32_0 = arith.constant 0 : i32
    %c0_i32_1 = arith.constant 0 : i32
    %c0_i32_2 = arith.constant 0 : i32
    return %c0_i32, %c0_i32_0, %c0_i32_1 : i32, i32, i32
  }
  func.func @transform_4(%arg0: i32, %arg1: i32) -> (i32, i32) {
    %c0_i32 = arith.constant 0 : i32
    %c0_i32_0 = arith.constant 0 : i32
    %c0_i32_1 = arith.constant 0 : i32
    return %c0_i32, %c0_i32_0 : i32, i32
  }
  func.func @transform_5(%arg0: i32, %arg1: i32) -> (i32, i32, i32) {
    %c8_i32 = arith.constant 8 : i32
    %0 = arith.muli %arg0, %c8_i32 : i32
    %1 = arith.addi %0, %arg1 : i32
    %c0_i32 = arith.constant 0 : i32
    %c0_i32_0 = arith.constant 0 : i32
    %c0_i32_1 = arith.constant 0 : i32
    return %1, %c0_i32, %c0_i32_0 : i32, i32, i32
  }
  func.func @transform_6(%arg0: i32, %arg1: i32) -> (i32, i32, i32) {
    %c8_i32 = arith.constant 8 : i32
    %0 = arith.muli %arg0, %c8_i32 : i32
    %1 = arith.addi %0, %arg1 : i32
    %c0_i32 = arith.constant 0 : i32
    %c0_i32_0 = arith.constant 0 : i32
    %c0_i32_1 = arith.constant 0 : i32
    return %1, %c0_i32, %c0_i32_0 : i32, i32, i32
  }
}

module attributes {stable_mosaic.version = 11 : i64} {
  func.func @_bn_bn_add_kernel(%arg0: i32, %arg1: memref<128x8xf32, #tpu.memory_space<vmem>>, %arg2: memref<1x8xf32, #tpu.memory_space<vmem>>, %arg3: memref<1x8xf32, #tpu.memory_space<vmem>>, %arg4: memref<128x8xf32, #tpu.memory_space<vmem>>, %arg5: memref<1x8xf32, #tpu.memory_space<vmem>>, %arg6: memref<1x8xf32, #tpu.memory_space<vmem>>, %arg7: memref<128x8xf32, #tpu.memory_space<vmem>>) attributes {dimension_semantics = [#tpu.dimension_semantics<parallel>], iteration_bounds = array<i64: 1>, scalar_prefetch = 0 : i64, scratch_operands = 0 : i64, tpu.core_type = #tpu.core_type<tc>, window_params = [{transform_indices = @transform_0, window_bounds = array<i64: 128, 8>}, {pipeline_mode = #tpu.pipeline_mode<synchronous>, transform_indices = @transform_1, window_bounds = array<i64: 1, 8>}, {pipeline_mode = #tpu.pipeline_mode<synchronous>, transform_indices = @transform_2, window_bounds = array<i64: 1, 8>}, {transform_indices = @transform_3, window_bounds = array<i64: 128, 8>}, {pipeline_mode = #tpu.pipeline_mode<synchronous>, transform_indices = @transform_4, window_bounds = array<i64: 1, 8>}, {pipeline_mode = #tpu.pipeline_mode<synchronous>, transform_indices = @transform_5, window_bounds = array<i64: 1, 8>}, {transform_indices = @transform_6, window_bounds = array<i64: 128, 8>}]} {
    %c0 = arith.constant 0 : index
    %c0_0 = arith.constant 0 : index
    %0 = vector.load %arg1[%c0, %c0_0] : memref<128x8xf32, #tpu.memory_space<vmem>>, vector<128x8xf32>
    %c0_1 = arith.constant 0 : index
    %c0_2 = arith.constant 0 : index
    %1 = vector.load %arg2[%c0_1, %c0_2] : memref<1x8xf32, #tpu.memory_space<vmem>>, vector<1x8xf32>
    %2 = vector.broadcast %1 : vector<1x8xf32> to vector<128x8xf32>
    %3 = arith.mulf %0, %2 : vector<128x8xf32>
    %c0_3 = arith.constant 0 : index
    %c0_4 = arith.constant 0 : index
    %4 = vector.load %arg3[%c0_3, %c0_4] : memref<1x8xf32, #tpu.memory_space<vmem>>, vector<1x8xf32>
    %5 = vector.broadcast %4 : vector<1x8xf32> to vector<128x8xf32>
    %6 = arith.addf %3, %5 : vector<128x8xf32>
    %c0_5 = arith.constant 0 : index
    %c0_6 = arith.constant 0 : index
    %7 = vector.load %arg4[%c0_5, %c0_6] : memref<128x8xf32, #tpu.memory_space<vmem>>, vector<128x8xf32>
    %c0_7 = arith.constant 0 : index
    %c0_8 = arith.constant 0 : index
    %8 = vector.load %arg5[%c0_7, %c0_8] : memref<1x8xf32, #tpu.memory_space<vmem>>, vector<1x8xf32>
    %9 = vector.broadcast %8 : vector<1x8xf32> to vector<128x8xf32>
    %10 = arith.mulf %7, %9 : vector<128x8xf32>
    %11 = arith.addf %6, %10 : vector<128x8xf32>
    %c0_9 = arith.constant 0 : index
    %c0_10 = arith.constant 0 : index
    %12 = vector.load %arg6[%c0_9, %c0_10] : memref<1x8xf32, #tpu.memory_space<vmem>>, vector<1x8xf32>
    %13 = vector.broadcast %12 : vector<1x8xf32> to vector<128x8xf32>
    %14 = arith.addf %11, %13 : vector<128x8xf32>
    %c0_11 = arith.constant 0 : index
    %c0_12 = arith.constant 0 : index
    %15 = vector.load %arg7[%c0_11, %c0_12] : memref<128x8xf32, #tpu.memory_space<vmem>>, vector<128x8xf32>
    tpu.vector_store %arg7[%c0_11, %c0_12], %14 {strides = array<i32>} : memref<128x8xf32, #tpu.memory_space<vmem>>, vector<128x8xf32>,
    return
  }
  func.func @transform_0(%arg0: i32) -> (i32, i32) {
    %c0_i32 = arith.constant 0 : i32
    %c0_i32_0 = arith.constant 0 : i32
    return %arg0, %c0_i32 : i32, i32
  }
  func.func @transform_1(%arg0: i32) -> (i32, i32) {
    %c0_i32 = arith.constant 0 : i32
    %c0_i32_0 = arith.constant 0 : i32
    %c0_i32_1 = arith.constant 0 : i32
    return %c0_i32, %c0_i32_0 : i32, i32
  }
  func.func @transform_2(%arg0: i32) -> (i32, i32) {
    %c0_i32 = arith.constant 0 : i32
    %c0_i32_0 = arith.constant 0 : i32
    %c0_i32_1 = arith.constant 0 : i32
    return %c0_i32, %c0_i32_0 : i32, i32
  }
  func.func @transform_3(%arg0: i32) -> (i32, i32) {
    %c0_i32 = arith.constant 0 : i32
    %c0_i32_0 = arith.constant 0 : i32
    return %arg0, %c0_i32 : i32, i32
  }
  func.func @transform_4(%arg0: i32) -> (i32, i32) {
    %c0_i32 = arith.constant 0 : i32
    %c0_i32_0 = arith.constant 0 : i32
    %c0_i32_1 = arith.constant 0 : i32
    return %c0_i32, %c0_i32_0 : i32, i32
  }
  func.func @transform_5(%arg0: i32) -> (i32, i32) {
    %c0_i32 = arith.constant 0 : i32
    %c0_i32_0 = arith.constant 0 : i32
    %c0_i32_1 = arith.constant 0 : i32
    return %c0_i32, %c0_i32_0 : i32, i32
  }
  func.func @transform_6(%arg0: i32) -> (i32, i32) {
    %c0_i32 = arith.constant 0 : i32
    %c0_i32_0 = arith.constant 0 : i32
    return %arg0, %c0_i32 : i32, i32
  }
}

</mosaic_0001>

<llo_original>
// kernel: res_block_down.6
$region0: #{res_block_down.6}
  #allocation0 [shape = 'u32[]', space=smem, size = 0x4, offset = 0x4, fixed_abs, tag = 'smem constant byte address 0x4 - core index']
  #allocation1 [shape = 'u32[144,128]{1,0:T(1,128)}', space=vmem, size = 0x12000, scoped, tag = 'internal scratch']
  %s0 = inlined_call_operand.vmem [shape: f32[128,108], index: 0, kind: input, shape index: {}]
  %s1 = inlined_call_operand.vmem [shape: f32[108,8], index: 1, kind: input, shape index: {}]
  %s2 = inlined_call_operand.vmem [shape: f32[1,8], index: 2, kind: input, shape index: {}]
  %s3 = inlined_call_operand.vmem [shape: f32[128,8], index: 3, kind: output, shape index: {0}]
  %s4 = inlined_call_operand.vmem [shape: f32[1,8,8], index: 4, kind: output, shape index: {1}]
  %5 = xla_tuple %s3, %s4
  %s6 = sld [smem:[#allocation0]]
  $region30: #{res_block_down.6} parent=0
    _
  %s8 = ssub.s32 1, %s6
  %s9 = scalar_select 0, %s8, %s6
  // Predicated region
  $region2: #{res_block_down.6} parent=0 // pred_check
    _
  $region3: #{res_block_down.6} parent=0 // pred_check_branch
    %11 = sbr.rel (0) target = $region5
  $region4: #{res_block_down.6} parent=0 // pred_region
    _
  $region5: #{res_block_down.6} parent=0 // pred_fallthru
    _
  // Predicated region
  $region6: #{res_block_down.6} parent=0 // pred_check
    _
  $region7: #{res_block_down.6} parent=0 // pred_check_branch
    %13 = sbr.rel (0) target = $region9
  $region8: #{res_block_down.6} parent=0 // pred_region
    _
  $region9: #{res_block_down.6} parent=0 // pred_fallthru
    _
  // Predicated region
  $region10: #{res_block_down.6} parent=0 // pred_check
    _
  $region11: #{res_block_down.6} parent=0 // pred_check_branch
    %15 = sbr.rel (0) target = $region13
  $region12: #{res_block_down.6} parent=0 // pred_region
    _
  $region13: #{res_block_down.6} parent=0 // pred_fallthru
    _
  %v16 = vld [vmem:[%s0] sm:$0xff]
  %v17 = vld [vmem:[%s0 + $0x8] sm:$0xff]
  %v18 = vld [vmem:[%s0 + $0x10] sm:$0xff]
  %v19 = vld [vmem:[%s0 + $0x18] sm:$0xff]
  %v20 = vld [vmem:[%s0 + $0x20] sm:$0xff]
  %v21 = vld [vmem:[%s0 + $0x28] sm:$0xff]
  %v22 = vld [vmem:[%s0 + $0x30] sm:$0xff]
  %v23 = vld [vmem:[%s0 + $0x38] sm:$0xff]
  %v24 = vld [vmem:[%s0 + $0x40] sm:$0xff]
  %v25 = vld [vmem:[%s0 + $0x48] sm:$0xff]
  %v26 = vld [vmem:[%s0 + $0x50] sm:$0xff]
  %v27 = vld [vmem:[%s0 + $0x58] sm:$0xff]
  %v28 = vld [vmem:[%s0 + $0x60] sm:$0xff]
  %v29 = vld [vmem:[%s0 + $0x68] sm:$0xff]
  %v30 = vld [vmem:[%s0 + $0x70] sm:$0xff]
  %v31 = vld [vmem:[%s0 + $0x78] sm:$0xff]
  %v32 = vld [vmem:[%s1] sm:$0xff]
  %v33 = vld [vmem:[%s1 + $0x8] sm:$0xff]
  %v34 = vld [vmem:[%s1 + $0x10] sm:$0xff]
  %v35 = vld [vmem:[%s1 + $0x18] sm:$0xff]
  %v36 = vld [vmem:[%s1 + $0x20] sm:$0xff]
  %v37 = vld [vmem:[%s1 + $0x28] sm:$0xff]
  %v38 = vld [vmem:[%s1 + $0x30] sm:$0xff]
  %v39 = vld [vmem:[%s1 + $0x38] sm:$0xff]
  %v40 = vld [vmem:[%s1 + $0x40] sm:$0xff]
  %v41 = vld [vmem:[%s1 + $0x48] sm:$0xff]
  %v42 = vld [vmem:[%s1 + $0x50] sm:$0xff]
  %v43 = vld [vmem:[%s1 + $0x58] sm:$0xff]
  %v44 = vld [vmem:[%s1 + $0x60] sm:$0xff]
  %v45 = vld [vmem:[%s1 + $0x68] sm:$0xf]
  %v46 = vld [vmem:[%s2] sm:$0x1]
  %v48 = vlaneseq
  %v49 = vshrl.u32 %v48, 7
  %v50 = vsub.s32 0, %v49
  %v51 = vrot.slane %v46, %v50
  %vm53 = vcmask 883712
  %v55 = vsel %vm53, %v16, 0
  %v58 = vsel %vm53, %v17, 0
  %v61 = vsel %vm53, %v18, 0
  %v64 = vsel %vm53, %v19, 0
  %v67 = vsel %vm53, %v20, 0
  %v70 = vsel %vm53, %v21, 0
  %v73 = vsel %vm53, %v22, 0
  %v76 = vsel %vm53, %v23, 0
  %v79 = vsel %vm53, %v24, 0
  %v82 = vsel %vm53, %v25, 0
  %v85 = vsel %vm53, %v26, 0
  %v88 = vsel %vm53, %v27, 0
  %v91 = vsel %vm53, %v28, 0
  %v94 = vsel %vm53, %v29, 0
  %v97 = vsel %vm53, %v30, 0
  %v100 = vsel %vm53, %v31, 0
  %vm102 = vcmask 1043456
  %v104 = vsel %vm102, %v45, 0
  %106 = vmatprep.subr.mxu0 0.0
  %107 = vmatpush1.msra.mxu0 0.0
  %108 = vmatprep.subr.mxu0 0.0
  %109 = vmatpush1.msra.mxu0 0.0
  %110 = vmatprep.subr.mxu0 0.0
  %111 = vmatpush1.msra.mxu0 %v104
  %112 = vmatprep.subr.mxu0 0.0
  %113 = vmatpush1.msra.mxu0 %v44
  %114 = vmatprep.subr.mxu0 0.0
  %115 = vmatpush1.msra.mxu0 %v43
  %116 = vmatprep.subr.mxu0 0.0
  %117 = vmatpush1.msra.mxu0 %v42
  %118 = vmatprep.subr.mxu0 0.0
  %119 = vmatpush1.msra.mxu0 %v41
  %120 = vmatprep.subr.mxu0 0.0
  %121 = vmatpush1.msra.mxu0 %v40
  %122 = vmatprep.subr.mxu0 0.0
  %123 = vmatpush1.msra.mxu0 %v39
  %124 = vmatprep.subr.mxu0 0.0
  %125 = vmatpush1.msra.mxu0 %v38
  %126 = vmatprep.subr.mxu0 0.0
  %127 = vmatpush1.msra.mxu0 %v37
  %128 = vmatprep.subr.mxu0 0.0
  %129 = vmatpush1.msra.mxu0 %v36
  %130 = vmatprep.subr.mxu0 0.0
  %131 = vmatpush1.msra.mxu0 %v35
  %132 = vmatprep.subr.mxu0 0.0
  %133 = vmatpush1.msra.mxu0 %v34
  %134 = vmatprep.subr.mxu0 0.0
  %135 = vmatpush1.msra.mxu0 %v33
  %136 = vmatprep.subr.mxu0 0.0
  %137 = vmatpush1.msra.mxu0 %v32
  %138 = vmatprep.subr.mxu0 0.0
  %139 = vmatpush2.msra.mxu0 0.0
  %140 = vmatprep.subr.mxu0 0.0
  %141 = vmatpush2.msra.mxu0 0.0
  %142 = vmatprep.subr.mxu0 0.0
  %143 = vmatpush2.msra.mxu0 0.0
  %144 = vmatprep.subr.mxu0 0.0
  %145 = vmatpush2.msra.mxu0 0.0
  %146 = vmatprep.subr.mxu0 0.0
  %147 = vmatpush2.msra.mxu0 0.0
  %148 = vmatprep.subr.mxu0 0.0
  %149 = vmatpush2.msra.mxu0 0.0
  %150 = vmatprep.subr.mxu0 0.0
  %151 = vmatpush2.msra.mxu0 0.0
  %152 = vmatprep.subr.mxu0 0.0
  %153 = vmatpush2.msra.mxu0 0.0
  %154 = vmatprep.subr.mxu0 0.0
  %155 = vmatpush2.msra.mxu0 0.0
  %156 = vmatprep.subr.mxu0 0.0
  %157 = vmatpush2.msra.mxu0 0.0
  %158 = vmatprep.subr.mxu0 0.0
  %159 = vmatpush2.msra.mxu0 0.0
  %160 = vmatprep.subr.mxu0 0.0
  %161 = vmatpush2.msra.mxu0 0.0
  %162 = vmatprep.subr.mxu0 0.0
  %163 = vmatpush2.msra.mxu0 0.0
  %164 = vmatprep.subr.mxu0 0.0
  %165 = vmatpush2.msra.mxu0 0.0
  %166 = vmatprep.subr.mxu0 0.0
  %167 = vmatpush2.msra.mxu0 0.0
  %168 = vmatprep.subr.mxu0 0.0
  %169 = vmatpush2.msra.mxu0 0.0
  %170 = vmatprep.mubr.f32.mxu0 0.0
  %171 = vmatmul.mubr.f32.gmra.mxu0 %v55
  %v172 = vpop.f32.mrf.mxu0
  %v173 = vadd.f32 %v51, %v172
  %v174 = vpop.f32.mrf.mxu0
  %175 = vmatprep.mubr.f32.mxu0 0.0
  %176 = vmatmul.mubr.f32.gmra.mxu0 %v58
  %v177 = vpop.f32.mrf.mxu0
  %v178 = vadd.f32 %v51, %v177
  %v179 = vpop.f32.mrf.mxu0
  %180 = vmatprep.mubr.f32.mxu0 0.0
  %181 = vmatmul.mubr.f32.gmra.mxu0 %v61
  %v182 = vpop.f32.mrf.mxu0
  %v183 = vadd.f32 %v51, %v182
  %v184 = vpop.f32.mrf.mxu0
  %185 = vmatprep.mubr.f32.mxu0 0.0
  %186 = vmatmul.mubr.f32.gmra.mxu0 %v64
  %v187 = vpop.f32.mrf.mxu0
  %v188 = vadd.f32 %v51, %v187
  %v189 = vpop.f32.mrf.mxu0
  %190 = vmatprep.mubr.f32.mxu0 0.0
  %191 = vmatmul.mubr.f32.gmra.mxu0 %v67
  %v192 = vpop.f32.mrf.mxu0
  %v193 = vadd.f32 %v51, %v192
  %v194 = vpop.f32.mrf.mxu0
  %195 = vmatprep.mubr.f32.mxu0 0.0
  %196 = vmatmul.mubr.f32.gmra.mxu0 %v70
  %v197 = vpop.f32.mrf.mxu0
  %v198 = vadd.f32 %v51, %v197
  %v199 = vpop.f32.mrf.mxu0
  %200 = vmatprep.mubr.f32.mxu0 0.0
  %201 = vmatmul.mubr.f32.gmra.mxu0 %v73
  %v202 = vpop.f32.mrf.mxu0
  %v203 = vadd.f32 %v51, %v202
  %v204 = vpop.f32.mrf.mxu0
  %205 = vmatprep.mubr.f32.mxu0 0.0
  %206 = vmatmul.mubr.f32.gmra.mxu0 %v76
  %v207 = vpop.f32.mrf.mxu0
  %v208 = vadd.f32 %v51, %v207
  %v209 = vpop.f32.mrf.mxu0
  %210 = vmatprep.mubr.f32.mxu0 0.0
  %211 = vmatmul.mubr.f32.gmra.mxu0 %v79
  %v212 = vpop.f32.mrf.mxu0
  %v213 = vadd.f32 %v51, %v212
  %v214 = vpop.f32.mrf.mxu0
  %215 = vmatprep.mubr.f32.mxu0 0.0
  %216 = vmatmul.mubr.f32.gmra.mxu0 %v82
  %v217 = vpop.f32.mrf.mxu0
  %v218 = vadd.f32 %v51, %v217
  %v219 = vpop.f32.mrf.mxu0
  %220 = vmatprep.mubr.f32.mxu0 0.0
  %221 = vmatmul.mubr.f32.gmra.mxu0 %v85
  %v222 = vpop.f32.mrf.mxu0
  %v223 = vadd.f32 %v51, %v222
  %v224 = vpop.f32.mrf.mxu0
  %225 = vmatprep.mubr.f32.mxu0 0.0
  %226 = vmatmul.mubr.f32.gmra.mxu0 %v88
  %v227 = vpop.f32.mrf.mxu0
  %v228 = vadd.f32 %v51, %v227
  %v229 = vpop.f32.mrf.mxu0
  %230 = vmatprep.mubr.f32.mxu0 0.0
  %231 = vmatmul.mubr.f32.gmra.mxu0 %v91
  %v232 = vpop.f32.mrf.mxu0
  %v233 = vadd.f32 %v51, %v232
  %v234 = vpop.f32.mrf.mxu0
  %235 = vmatprep.mubr.f32.mxu0 0.0
  %236 = vmatmul.mubr.f32.gmra.mxu0 %v94
  %v237 = vpop.f32.mrf.mxu0
  %v238 = vadd.f32 %v51, %v237
  %v239 = vpop.f32.mrf.mxu0
  %240 = vmatprep.mubr.f32.mxu0 0.0
  %241 = vmatmul.mubr.f32.gmra.mxu0 %v97
  %v242 = vpop.f32.mrf.mxu0
  %v243 = vadd.f32 %v51, %v242
  %v244 = vpop.f32.mrf.mxu0
  %245 = vmatprep.mubr.f32.mxu0 0.0
  %246 = vmatmul.mubr.f32.gmra.mxu0 %v100
  %v247 = vpop.f32.mrf.mxu0
  %v248 = vadd.f32 %v51, %v247
  %v249 = vpop.f32.mrf.mxu0
  %250 = vdwg.mxu0
  %vm251 = vcmp.gt.f32.partialorder %v173, 0.0
  %vm252 = vcmp.gt.f32.partialorder %v178, 0.0
  %vm253 = vcmp.gt.f32.partialorder %v183, 0.0
  %vm254 = vcmp.gt.f32.partialorder %v188, 0.0
  %vm255 = vcmp.gt.f32.partialorder %v193, 0.0
  %vm256 = vcmp.gt.f32.partialorder %v198, 0.0
  %vm257 = vcmp.gt.f32.partialorder %v203, 0.0
  %vm258 = vcmp.gt.f32.partialorder %v208, 0.0
  %vm259 = vcmp.gt.f32.partialorder %v213, 0.0
  %vm260 = vcmp.gt.f32.partialorder %v218, 0.0
  %vm261 = vcmp.gt.f32.partialorder %v223, 0.0
  %vm262 = vcmp.gt.f32.partialorder %v228, 0.0
  %vm263 = vcmp.gt.f32.partialorder %v233, 0.0
  %vm264 = vcmp.gt.f32.partialorder %v238, 0.0
  %vm265 = vcmp.gt.f32.partialorder %v243, 0.0
  %vm266 = vcmp.gt.f32.partialorder %v248, 0.0
  %v267 = vmul.f32 %v173, 0.2
  %v268 = vmul.f32 %v178, 0.2
  %v269 = vmul.f32 %v183, 0.2
  %v270 = vmul.f32 %v188, 0.2
  %v271 = vmul.f32 %v193, 0.2
  %v272 = vmul.f32 %v198, 0.2
  %v273 = vmul.f32 %v203, 0.2
  %v274 = vmul.f32 %v208, 0.2
  %v275 = vmul.f32 %v213, 0.2
  %v276 = vmul.f32 %v218, 0.2
  %v277 = vmul.f32 %v223, 0.2
  %v278 = vmul.f32 %v228, 0.2
  %v279 = vmul.f32 %v233, 0.2
  %v280 = vmul.f32 %v238, 0.2
  %v281 = vmul.f32 %v243, 0.2
  %v282 = vmul.f32 %v248, 0.2
  %v283 = vsel %vm251, %v173, %v267
  %v284 = vsel %vm252, %v178, %v268
  %v285 = vsel %vm253, %v183, %v269
  %v286 = vsel %vm254, %v188, %v270
  %v287 = vsel %vm255, %v193, %v271
  %v288 = vsel %vm256, %v198, %v272
  %v289 = vsel %vm257, %v203, %v273
  %v290 = vsel %vm258, %v208, %v274
  %v291 = vsel %vm259, %v213, %v275
  %v292 = vsel %vm260, %v218, %v276
  %v293 = vsel %vm261, %v223, %v277
  %v294 = vsel %vm262, %v228, %v278
  %v295 = vsel %vm263, %v233, %v279
  %v296 = vsel %vm264, %v238, %v280
  %v297 = vsel %vm265, %v243, %v281
  %v298 = vsel %vm266, %v248, %v282
  %vm299 = vcmask 64512
  %300 = vst.msk [vmem:[%s3] sm:$0xff] %vm299, %v283
  %301 = vst.msk [vmem:[%s3 + $0x8] sm:$0xff] %vm299, %v284
  %302 = vst.msk [vmem:[%s3 + $0x10] sm:$0xff] %vm299, %v285
  %303 = vst.msk [vmem:[%s3 + $0x18] sm:$0xff] %vm299, %v286
  %304 = vst.msk [vmem:[%s3 + $0x20] sm:$0xff] %vm299, %v287
  %305 = vst.msk [vmem:[%s3 + $0x28] sm:$0xff] %vm299, %v288
  %306 = vst.msk [vmem:[%s3 + $0x30] sm:$0xff] %vm299, %v289
  %307 = vst.msk [vmem:[%s3 + $0x38] sm:$0xff] %vm299, %v290
  %308 = vst.msk [vmem:[%s3 + $0x40] sm:$0xff] %vm299, %v291
  %309 = vst.msk [vmem:[%s3 + $0x48] sm:$0xff] %vm299, %v292
  %310 = vst.msk [vmem:[%s3 + $0x50] sm:$0xff] %vm299, %v293
  %311 = vst.msk [vmem:[%s3 + $0x58] sm:$0xff] %vm299, %v294
  %312 = vst.msk [vmem:[%s3 + $0x60] sm:$0xff] %vm299, %v295
  %313 = vst.msk [vmem:[%s3 + $0x68] sm:$0xff] %vm299, %v296
  %314 = vst.msk [vmem:[%s3 + $0x70] sm:$0xff] %vm299, %v297
  %315 = vst.msk [vmem:[%s3 + $0x78] sm:$0xff] %vm299, %v298
  %v316 = vlaneseq
  %v317 = vshrl.u32 %v316, 7
  %v318 = vadd.s32 %v317, 8
  %v319 = vadd.s32 %v317, 16
  %v320 = vadd.s32 %v317, 24
  %v321 = vadd.s32 %v317, 32
  %v322 = vadd.s32 %v317, 40
  %v323 = vadd.s32 %v317, 48
  %v324 = vadd.s32 %v317, 56
  %v325 = vadd.s32 %v317, 64
  %v326 = vadd.s32 %v317, 72
  %v327 = vadd.s32 %v317, 80
  %v328 = vadd.s32 %v317, 88
  %v329 = vadd.s32 %v317, 96
  %v330 = vadd.s32 %v317, 104
  %v331 = vadd.s32 %v317, 112
  %v332 = vadd.s32 %v317, 120
  %s333 = smul.u32 0, 128
  %v334 = vstv %s333
  %v335 = vadd.s32 %v317, %v334
  %v336 = vadd.s32 %v318, %v334
  %v337 = vadd.s32 %v319, %v334
  %v338 = vadd.s32 %v320, %v334
  %v339 = vadd.s32 %v321, %v334
  %v340 = vadd.s32 %v322, %v334
  %v341 = vadd.s32 %v323, %v334
  %v342 = vadd.s32 %v324, %v334
  %v343 = vadd.s32 %v325, %v334
  %v344 = vadd.s32 %v326, %v334
  %v345 = vadd.s32 %v327, %v334
  %v346 = vadd.s32 %v328, %v334
  %v347 = vadd.s32 %v329, %v334
  %v348 = vadd.s32 %v330, %v334
  %v349 = vadd.s32 %v331, %v334
  %v350 = vadd.s32 %v332, %v334
  %vm351 = vcmp.lt.s32.totalorder %v335, 128
  %vm352 = vcmp.lt.s32.totalorder %v336, 128
  %vm353 = vcmp.lt.s32.totalorder %v337, 128
  %vm354 = vcmp.lt.s32.totalorder %v338, 128
  %vm355 = vcmp.lt.s32.totalorder %v339, 128
  %vm356 = vcmp.lt.s32.totalorder %v340, 128
  %vm357 = vcmp.lt.s32.totalorder %v341, 128
  %vm358 = vcmp.lt.s32.totalorder %v342, 128
  %vm359 = vcmp.lt.s32.totalorder %v343, 128
  %vm360 = vcmp.lt.s32.totalorder %v344, 128
  %vm361 = vcmp.lt.s32.totalorder %v345, 128
  %vm362 = vcmp.lt.s32.totalorder %v346, 128
  %vm363 = vcmp.lt.s32.totalorder %v347, 128
  %vm364 = vcmp.lt.s32.totalorder %v348, 128
  %vm365 = vcmp.lt.s32.totalorder %v349, 128
  %vm366 = vcmp.lt.s32.totalorder %v350, 128
  %v367 = vsel %vm351, %v283, 0.0
  %v368 = vsel %vm352, %v284, 0.0
  %v369 = vsel %vm353, %v285, 0.0
  %v370 = vsel %vm354, %v286, 0.0
  %v371 = vsel %vm355, %v287, 0.0
  %v372 = vsel %vm356, %v288, 0.0
  %v373 = vsel %vm357, %v289, 0.0
  %v374 = vsel %vm358, %v290, 0.0
  %v375 = vsel %vm359, %v291, 0.0
  %v376 = vsel %vm360, %v292, 0.0
  %v377 = vsel %vm361, %v293, 0.0
  %v378 = vsel %vm362, %v294, 0.0
  %v379 = vsel %vm363, %v295, 0.0
  %v380 = vsel %vm364, %v296, 0.0
  %v381 = vsel %vm365, %v297, 0.0
  %v382 = vsel %vm366, %v298, 0.0
  %v383 = vsel %vm299, %v367, 0.0
  %v384 = vsel %vm299, %v368, 0.0
  %v385 = vadd.f32 %v383, %v384
  %v386 = vsel %vm299, %v369, 0.0
  %v387 = vadd.f32 %v385, %v386
  %v388 = vsel %vm299, %v370, 0.0
  %v389 = vadd.f32 %v387, %v388
  %v390 = vsel %vm299, %v371, 0.0
  %v391 = vadd.f32 %v389, %v390
  %v392 = vsel %vm299, %v372, 0.0
  %v393 = vadd.f32 %v391, %v392
  %v394 = vsel %vm299, %v373, 0.0
  %v395 = vadd.f32 %v393, %v394
  %v396 = vsel %vm299, %v374, 0.0
  %v397 = vadd.f32 %v395, %v396
  %v398 = vsel %vm299, %v375, 0.0
  %v399 = vadd.f32 %v397, %v398
  %v400 = vsel %vm299, %v376, 0.0
  %v401 = vadd.f32 %v399, %v400
  %v402 = vsel %vm299, %v377, 0.0
  %v403 = vadd.f32 %v401, %v402
  %v404 = vsel %vm299, %v378, 0.0
  %v405 = vadd.f32 %v403, %v404
  %v406 = vsel %vm299, %v379, 0.0
  %v407 = vadd.f32 %v405, %v406
  %v408 = vsel %vm299, %v380, 0.0
  %v409 = vadd.f32 %v407, %v408
  %v410 = vsel %vm299, %v381, 0.0
  %v411 = vadd.f32 %v409, %v410
  %v412 = vsel %vm299, %v382, 0.0
  %v413 = vadd.f32 %v411, %v412
  %v414 = vrot.slane %v413, 4
  %v415 = vadd.f32 %v413, %v414
  %v416 = vrot.slane %v415, 2
  %v417 = vadd.f32 %v415, %v416
  %v418 = vrot.slane %v417, 1
  %v419 = vadd.f32 %v417, %v418
  %v420 = vmul.f32 %v367, %v283
  %v421 = vmul.f32 %v368, %v284
  %v422 = vmul.f32 %v369, %v285
  %v423 = vmul.f32 %v370, %v286
  %v424 = vmul.f32 %v371, %v287
  %v425 = vmul.f32 %v372, %v288
  %v426 = vmul.f32 %v373, %v289
  %v427 = vmul.f32 %v374, %v290
  %v428 = vmul.f32 %v375, %v291
  %v429 = vmul.f32 %v376, %v292
  %v430 = vmul.f32 %v377, %v293
  %v431 = vmul.f32 %v378, %v294
  %v432 = vmul.f32 %v379, %v295
  %v433 = vmul.f32 %v380, %v296
  %v434 = vmul.f32 %v381, %v297
  %v435 = vmul.f32 %v382, %v298
  %v436 = vsel %vm299, %v420, 0.0
  %v437 = vsel %vm299, %v421, 0.0
  %v438 = vadd.f32 %v436, %v437
  %v439 = vsel %vm299, %v422, 0.0
  %v440 = vadd.f32 %v438, %v439
  %v441 = vsel %vm299, %v423, 0.0
  %v442 = vadd.f32 %v440, %v441
  %v443 = vsel %vm299, %v424, 0.0
  %v444 = vadd.f32 %v442, %v443
  %v445 = vsel %vm299, %v425, 0.0
  %v446 = vadd.f32 %v444, %v445
  %v447 = vsel %vm299, %v426, 0.0
  %v448 = vadd.f32 %v446, %v447
  %v449 = vsel %vm299, %v427, 0.0
  %v450 = vadd.f32 %v448, %v449
  %v451 = vsel %vm299, %v428, 0.0
  %v452 = vadd.f32 %v450, %v451
  %v453 = vsel %vm299, %v429, 0.0
  %v454 = vadd.f32 %v452, %v453
  %v455 = vsel %vm299, %v430, 0.0
  %v456 = vadd.f32 %v454, %v455
  %v457 = vsel %vm299, %v431, 0.0
  %v458 = vadd.f32 %v456, %v457
  %v459 = vsel %vm299, %v432, 0.0
  %v460 = vadd.f32 %v458, %v459
  %v461 = vsel %vm299, %v433, 0.0
  %v462 = vadd.f32 %v460, %v461
  %v463 = vsel %vm299, %v434, 0.0
  %v464 = vadd.f32 %v462, %v463
  %v465 = vsel %vm299, %v435, 0.0
  %v466 = vadd.f32 %v464, %v465
  %v467 = vrot.slane %v466, 4
  %v468 = vadd.f32 %v466, %v467
  %v469 = vrot.slane %v468, 2
  %v470 = vadd.f32 %v468, %v469
  %v471 = vrot.slane %v470, 1
  %v472 = vadd.f32 %v470, %v471
  %vm473 = vcmp.eq.s32.totalorder %v317, 0
  %vm474 = vcmp.eq.s32.totalorder %v317, 1
  %v475 = vsel %vm474, %v472, 0.0
  %v476 = vsel %vm473, %v419, %v475
  %477 = vst.msk [vmem:[%s4] sm:$0xff] %vm299, %v476
  // Predicated region
  $region14: #{res_block_down.6} parent=0 // pred_check
    _
  $region15: #{res_block_down.6} parent=0 // pred_check_branch
    %479 = sbr.rel (0) target = $region17
  $region16: #{res_block_down.6} parent=0 // pred_region
    _
  $region17: #{res_block_down.6} parent=0 // pred_fallthru
    _
  // Predicated region
  $region18: #{res_block_down.6} parent=0 // pred_check
    _
  $region19: #{res_block_down.6} parent=0 // pred_check_branch
    %481 = sbr.rel (0) target = $region21
  $region20: #{res_block_down.6} parent=0 // pred_region
    _
  $region21: #{res_block_down.6} parent=0 // pred_fallthru
    _
  // Predicated region
  $region22: #{res_block_down.6} parent=0 // pred_check
    _
  $region23: #{res_block_down.6} parent=0 // pred_check_branch
    %483 = sbr.rel (0) target = $region25
  $region24: #{res_block_down.6} parent=0 // pred_region
    _
  $region25: #{res_block_down.6} parent=0 // pred_fallthru
    _
  // Predicated region
  $region26: #{res_block_down.6} parent=0 // pred_check
    _
  $region27: #{res_block_down.6} parent=0 // pred_check_branch
    %485 = sbr.rel (0) target = $region29
  $region28: #{res_block_down.6} parent=0 // pred_region
    _
  $region29: #{res_block_down.6} parent=0 // pred_fallthru
    _

// kernel: res_block_down.7
$region0: #{res_block_down.7}
  #allocation0 [shape = 'u32[]', space=smem, size = 0x4, offset = 0x4, fixed_abs, tag = 'smem constant byte address 0x4 - core index']
  #allocation1 [shape = 'u32[144,128]{1,0:T(1,128)}', space=vmem, size = 0x12000, scoped, tag = 'internal scratch']
  %s0 = inlined_call_operand.vmem [shape: f32[128,8], index: 0, kind: input, shape index: {}]
  %s1 = inlined_call_operand.vmem [shape: f32[1,8], index: 1, kind: input, shape index: {}]
  %s2 = inlined_call_operand.vmem [shape: f32[1,8], index: 2, kind: input, shape index: {}]
  %s3 = inlined_call_operand.vmem [shape: f32[128,8], index: 3, kind: input, shape index: {}]
  %s4 = inlined_call_operand.vmem [shape: f32[1,8], index: 4, kind: input, shape index: {}]
  %s5 = inlined_call_operand.vmem [shape: f32[1,8], index: 5, kind: input, shape index: {}]
  %s6 = inlined_call_operand.hbm [shape: f32[128,8], index: 6, kind: output, shape index: {}]
  %s7 = sld [smem:[#allocation0]]
  $region34: #{res_block_down.7} parent=0
    _
  %s9 = ssub.s32 1, %s7
  %s10 = scalar_select 0, %s9, %s7
  $region1: #{res_block_down.7} parent=0
    #allocation2 [shape = 'u8[65536]{0}', space=vmem, size = 0x10000, scoped, tag = 'output window, operand 0, single buffered']
    #allocation3 [shape = 's32[1]{0}', space=sflag, size = 0x4, scoped, tag = 'scoped memory for res_block_down.7']
    %11 = vsyncpa [#allocation3], 0
    // Predicated region
    $region2: #{res_block_down.7} parent=1 // pred_check
      _
    $region3: #{res_block_down.7} parent=1 // pred_check_branch
      %13 = sbr.rel (0) target = $region5
    $region4: #{res_block_down.7} parent=1 // pred_region
      _
    $region5: #{res_block_down.7} parent=1 // pred_fallthru
      _
    // Predicated region
    $region6: #{res_block_down.7} parent=1 // pred_check
      _
    $region7: #{res_block_down.7} parent=1 // pred_check_branch
      %15 = sbr.rel (0) target = $region9
    $region8: #{res_block_down.7} parent=1 // pred_region
      _
    $region9: #{res_block_down.7} parent=1 // pred_fallthru
      _
    // Predicated region
    $region10: #{res_block_down.7} parent=1 // pred_check
      _
    $region11: #{res_block_down.7} parent=1 // pred_check_branch
      %17 = sbr.rel (0) target = $region13
    $region12: #{res_block_down.7} parent=1 // pred_region
      _
    $region13: #{res_block_down.7} parent=1 // pred_fallthru
      _
    // Predicated region
    $region14: #{res_block_down.7} parent=1 // pred_check
      _
    $region15: #{res_block_down.7} parent=1 // pred_check_branch
      %19 = sbr.rel (0) target = $region17
    $region16: #{res_block_down.7} parent=1 // pred_region
      _
    $region17: #{res_block_down.7} parent=1 // pred_fallthru
      _
    // Predicated region
    $region18: #{res_block_down.7} parent=1 // pred_check
      _
    $region19: #{res_block_down.7} parent=1 // pred_check_branch
      %21 = sbr.rel (0) target = $region21
    $region20: #{res_block_down.7} parent=1 // pred_region
      _
    $region21: #{res_block_down.7} parent=1 // pred_fallthru
      _
    // Predicated region
    $region22: #{res_block_down.7} parent=1 // pred_check
      _
    $region23: #{res_block_down.7} parent=1 // pred_check_branch
      %23 = sbr.rel (0) target = $region25
    $region24: #{res_block_down.7} parent=1 // pred_region
      _
    $region25: #{res_block_down.7} parent=1 // pred_fallthru
      _
    %v24 = vld [vmem:[%s0] sm:$0xff]
    %v25 = vld [vmem:[%s0 + $0x8] sm:$0xff]
    %v26 = vld [vmem:[%s0 + $0x10] sm:$0xff]
    %v27 = vld [vmem:[%s0 + $0x18] sm:$0xff]
    %v28 = vld [vmem:[%s0 + $0x20] sm:$0xff]
    %v29 = vld [vmem:[%s0 + $0x28] sm:$0xff]
    %v30 = vld [vmem:[%s0 + $0x30] sm:$0xff]
    %v31 = vld [vmem:[%s0 + $0x38] sm:$0xff]
    %v32 = vld [vmem:[%s0 + $0x40] sm:$0xff]
    %v33 = vld [vmem:[%s0 + $0x48] sm:$0xff]
    %v34 = vld [vmem:[%s0 + $0x50] sm:$0xff]
    %v35 = vld [vmem:[%s0 + $0x58] sm:$0xff]
    %v36 = vld [vmem:[%s0 + $0x60] sm:$0xff]
    %v37 = vld [vmem:[%s0 + $0x68] sm:$0xff]
    %v38 = vld [vmem:[%s0 + $0x70] sm:$0xff]
    %v39 = vld [vmem:[%s0 + $0x78] sm:$0xff]
    %v40 = vld [vmem:[%s1] sm:$0x1]
    %v42 = vlaneseq
    %v43 = vshrl.u32 %v42, 7
    %v44 = vsub.s32 0, %v43
    %v45 = vrot.slane %v40, %v44
    %v47 = vmul.f32 %v24, %v45
    %v48 = vmul.f32 %v25, %v45
    %v49 = vmul.f32 %v26, %v45
    %v50 = vmul.f32 %v27, %v45
    %v51 = vmul.f32 %v28, %v45
    %v52 = vmul.f32 %v29, %v45
    %v53 = vmul.f32 %v30, %v45
    %v54 = vmul.f32 %v31, %v45
    %v55 = vmul.f32 %v32, %v45
    %v56 = vmul.f32 %v33, %v45
    %v57 = vmul.f32 %v34, %v45
    %v58 = vmul.f32 %v35, %v45
    %v59 = vmul.f32 %v36, %v45
    %v60 = vmul.f32 %v37, %v45
    %v61 = vmul.f32 %v38, %v45
    %v62 = vmul.f32 %v39, %v45
    %v63 = vld [vmem:[%s2] sm:$0x1]
    %v65 = vlaneseq
    %v66 = vshrl.u32 %v65, 7
    %v67 = vsub.s32 0, %v66
    %v68 = vrot.slane %v63, %v67
    %v70 = vadd.f32 %v47, %v68
    %v71 = vadd.f32 %v48, %v68
    %v72 = vadd.f32 %v49, %v68
    %v73 = vadd.f32 %v50, %v68
    %v74 = vadd.f32 %v51, %v68
    %v75 = vadd.f32 %v52, %v68
    %v76 = vadd.f32 %v53, %v68
    %v77 = vadd.f32 %v54, %v68
    %v78 = vadd.f32 %v55, %v68
    %v79 = vadd.f32 %v56, %v68
    %v80 = vadd.f32 %v57, %v68
    %v81 = vadd.f32 %v58, %v68
    %v82 = vadd.f32 %v59, %v68
    %v83 = vadd.f32 %v60, %v68
    %v84 = vadd.f32 %v61, %v68
    %v85 = vadd.f32 %v62, %v68
    %v86 = vld [vmem:[%s3] sm:$0xff]
    %v87 = vld [vmem:[%s3 + $0x8] sm:$0xff]
    %v88 = vld [vmem:[%s3 + $0x10] sm:$0xff]
    %v89 = vld [vmem:[%s3 + $0x18] sm:$0xff]
    %v90 = vld [vmem:[%s3 + $0x20] sm:$0xff]
    %v91 = vld [vmem:[%s3 + $0x28] sm:$0xff]
    %v92 = vld [vmem:[%s3 + $0x30] sm:$0xff]
    %v93 = vld [vmem:[%s3 + $0x38] sm:$0xff]
    %v94 = vld [vmem:[%s3 + $0x40] sm:$0xff]
    %v95 = vld [vmem:[%s3 + $0x48] sm:$0xff]
    %v96 = vld [vmem:[%s3 + $0x50] sm:$0xff]
    %v97 = vld [vmem:[%s3 + $0x58] sm:$0xff]
    %v98 = vld [vmem:[%s3 + $0x60] sm:$0xff]
    %v99 = vld [vmem:[%s3 + $0x68] sm:$0xff]
    %v100 = vld [vmem:[%s3 + $0x70] sm:$0xff]
    %v101 = vld [vmem:[%s3 + $0x78] sm:$0xff]
    %v102 = vld [vmem:[%s4] sm:$0x1]
    %v104 = vlaneseq
    %v105 = vshrl.u32 %v104, 7
    %v106 = vsub.s32 0, %v105
    %v107 = vrot.slane %v102, %v106
    %v109 = vmul.f32 %v86, %v107
    %v110 = vmul.f32 %v87, %v107
    %v111 = vmul.f32 %v88, %v107
    %v112 = vmul.f32 %v89, %v107
    %v113 = vmul.f32 %v90, %v107
    %v114 = vmul.f32 %v91, %v107
    %v115 = vmul.f32 %v92, %v107
    %v116 = vmul.f32 %v93, %v107
    %v117 = vmul.f32 %v94, %v107
    %v118 = vmul.f32 %v95, %v107
    %v119 = vmul.f32 %v96, %v107
    %v120 = vmul.f32 %v97, %v107
    %v121 = vmul.f32 %v98, %v107
    %v122 = vmul.f32 %v99, %v107
    %v123 = vmul.f32 %v100, %v107
    %v124 = vmul.f32 %v101, %v107
    %v125 = vadd.f32 %v70, %v109
    %v126 = vadd.f32 %v71, %v110
    %v127 = vadd.f32 %v72, %v111
    %v128 = vadd.f32 %v73, %v112
    %v129 = vadd.f32 %v74, %v113
    %v130 = vadd.f32 %v75, %v114
    %v131 = vadd.f32 %v76, %v115
    %v132 = vadd.f32 %v77, %v116
    %v133 = vadd.f32 %v78, %v117
    %v134 = vadd.f32 %v79, %v118
    %v135 = vadd.f32 %v80, %v119
    %v136 = vadd.f32 %v81, %v120
    %v137 = vadd.f32 %v82, %v121
    %v138 = vadd.f32 %v83, %v122
    %v139 = vadd.f32 %v84, %v123
    %v140 = vadd.f32 %v85, %v124
    %v141 = vld [vmem:[%s5] sm:$0x1]
    %v143 = vlaneseq
    %v144 = vshrl.u32 %v143, 7
    %v145 = vsub.s32 0, %v144
    %v146 = vrot.slane %v141, %v145
    %v148 = vadd.f32 %v125, %v146
    %v149 = vadd.f32 %v126, %v146
    %v150 = vadd.f32 %v127, %v146
    %v151 = vadd.f32 %v128, %v146
    %v152 = vadd.f32 %v129, %v146
    %v153 = vadd.f32 %v130, %v146
    %v154 = vadd.f32 %v131, %v146
    %v155 = vadd.f32 %v132, %v146
    %v156 = vadd.f32 %v133, %v146
    %v157 = vadd.f32 %v134, %v146
    %v158 = vadd.f32 %v135, %v146
    %v159 = vadd.f32 %v136, %v146
    %v160 = vadd.f32 %v137, %v146
    %v161 = vadd.f32 %v138, %v146
    %v162 = vadd.f32 %v139, %v146
    %v163 = vadd.f32 %v140, %v146
    %vm164 = vcmask 64512
    %165 = vst.msk [vmem:[#allocation2] sm:$0xff] %vm164, %v148
    %166 = vst.msk [vmem:[#allocation2 + $0x8] sm:$0xff] %vm164, %v149
    %167 = vst.msk [vmem:[#allocation2 + $0x10] sm:$0xff] %vm164, %v150
    %168 = vst.msk [vmem:[#allocation2 + $0x18] sm:$0xff] %vm164, %v151
    %169 = vst.msk [vmem:[#allocation2 + $0x20] sm:$0xff] %vm164, %v152
    %170 = vst.msk [vmem:[#allocation2 + $0x28] sm:$0xff] %vm164, %v153
    %171 = vst.msk [vmem:[#allocation2 + $0x30] sm:$0xff] %vm164, %v154
    %172 = vst.msk [vmem:[#allocation2 + $0x38] sm:$0xff] %vm164, %v155
    %173 = vst.msk [vmem:[#allocation2 + $0x40] sm:$0xff] %vm164, %v156
    %174 = vst.msk [vmem:[#allocation2 + $0x48] sm:$0xff] %vm164, %v157
    %175 = vst.msk [vmem:[#allocation2 + $0x50] sm:$0xff] %vm164, %v158
    %176 = vst.msk [vmem:[#allocation2 + $0x58] sm:$0xff] %vm164, %v159
    %177 = vst.msk [vmem:[#allocation2 + $0x60] sm:$0xff] %vm164, %v160
    %178 = vst.msk [vmem:[#allocation2 + $0x68] sm:$0xff] %vm164, %v161
    %179 = vst.msk [vmem:[#allocation2 + $0x70] sm:$0xff] %vm164, %v162
    %180 = vst.msk [vmem:[#allocation2 + $0x78] sm:$0xff] %vm164, %v163
    // Predicated region
    $region26: #{res_block_down.7} parent=1 // pred_check
      _
    $region27: #{res_block_down.7} parent=1 // pred_check_branch
      %182 = sbr.rel (0) target = $region29
    $region28: #{res_block_down.7} parent=1 // pred_region
      %s184 = ssub.s32 2048, 2048
      %185 = vsyncadd [#allocation3], %s184
      %s186 = sshll.u32 [#allocation2], 4
      %s187 = int_to_ptr.vmem [resolvable:$true] %s186
      %192 = dma.vmem_to_hbm [thread:$0]  %s187, 2048, %s6, [#allocation3], 128, 128, 8
    $region29: #{res_block_down.7} parent=1 // pred_fallthru
      _
    // Predicated region
    $region30: #{res_block_down.7} parent=1 // pred_check
      _
    $region31: #{res_block_down.7} parent=1 // pred_check_branch
      %194 = sbr.rel (0) target = $region33
    $region32: #{res_block_down.7} parent=1 // pred_region
      %195 = dma.done [#allocation3], 2048
    $region33: #{res_block_down.7} parent=1 // pred_fallthru
      _
    %196 = vsyncpa [#allocation3], 1

// kernel: res_block_down.4
$region0: #{res_block_down.4}
  #allocation0 [shape = 'u32[]', space=smem, size = 0x4, offset = 0x4, fixed_abs, tag = 'smem constant byte address 0x4 - core index']
  #allocation1 [shape = 'u32[144,128]{1,0:T(1,128)}', space=vmem, size = 0x12000, scoped, tag = 'internal scratch']
  %s0 = inlined_call_operand.vmem [shape: f32[2,10,10,10,4], index: 0, kind: input, shape index: {}, may-alias: {0,1,2}]
  %s1 = inlined_call_operand.vmem [shape: f32[2,10,10,10,4], index: 1, kind: input, shape index: {}, may-alias: {0,1,2}]
  %s2 = inlined_call_operand.vmem [shape: f32[2,10,10,10,4], index: 2, kind: input, shape index: {}, may-alias: {0,1,2}]
  %s3 = inlined_call_operand.vmem [shape: f32[27,4,4], index: 3, kind: input, shape index: {}]
  %s4 = inlined_call_operand.vmem [shape: f32[1,4], index: 4, kind: input, shape index: {}]
  %s5 = inlined_call_operand.vmem [shape: f32[16,64,4], index: 5, kind: output, shape index: {0}]
  %s6 = inlined_call_operand.vmem [shape: f32[16,8,4], index: 6, kind: output, shape index: {1}]
  %7 = xla_tuple %s5, %s6
  %s8 = sld [smem:[#allocation0]]
  $region61: #{res_block_down.4} parent=0
    _
  %s10 = ssub.s32 1, %s8
  %s11 = scalar_select 0, %s10, %s8
  loop: start=0, step=1, limit=18
  $region2: #{res_block_down.4} parent=0 // loop_pre_header
    _
  $region3: #{res_block_down.4} parent=0 // loop_header
    %s13 = sphi 0, %s17
    %p14 = scmp.ge.s32.totalorder %s13, 18
    %s20 = sphi 0, %s32
    %s21 = sphi 0, %s28
    %s22 = sphi 0, %s20
    %s23 = sphi 0, %s21
    %s24 = sphi 0, %s22
    %s25 = sphi 0, %s23
    %s37 = sphi 0, %s39
    %s40 = sphi 0, %s37
    %s41 = sphi 0, %s40
    %s57 = sphi 0, %s41
    %s67 = sphi 0, %s69
    %s70 = sphi 0, %s67
    %s71 = sphi 0, %s70
    %s87 = sphi 0, %s71
    %s97 = sphi 0, %s99
    %s100 = sphi 0, %s97
    %s101 = sphi 0, %s100
    %s117 = sphi 0, %s101
    %s121 = sphi 0, %s121
    %s123 = sphi 0, %s121
    %s124 = sphi 0, %s123
    %s138 = sphi 0, %s124
    %s142 = sphi 0, %s142
    %s144 = sphi 0, %s142
    %s145 = sphi 0, %s144
    %s159 = sphi 0, %s145
    %s169 = sphi 0, %s171
    %s172 = sphi 0, %s169
    %s173 = sphi 0, %s172
    %s189 = sphi 0, %s173
    %s199 = sphi 0, %s201
    %s202 = sphi 0, %s199
    %s203 = sphi 0, %s202
    %s219 = sphi 0, %s203
  $region4: #{res_block_down.4} parent=0 // loop_header_branch
    %16 = sbr.rel (%p14) target = $region8
  $region5: #{res_block_down.4} parent=0 // loop_body
    %s18 = ssub.s32 %s13, 1
    %s19 = ssub.s32 %s13, 2
    %s26 = sadd.s32 1, %s21
    %p27 = scmp.ge.s32.totalorder %s26, 8
    %s28 = scalar_select %p27, 0, %s26
    %s29 = sadd.s32 1, %s20
    %s30 = scalar_select %p27, %s29, %s20
    %p31 = scmp.ge.s32.totalorder %s30, 2
    %s32 = scalar_select %p31, 0, %s30
    %s33 = ssub.s32 %s20, %s32
    %s34 = ssub.s32 %s21, %s28
    %s35 = sor.u32 %s33, %s34
    %p36 = scmp.eq.s32.totalorder %s35, 0
    %s38 = sadd.s32 %s37, 1
    %s39 = scalar_select %p36, %s37, %s38
    %p42 = pneg %p36
    %p43 = scmp.eq.s32.totalorder %s13, 15
    %p44 = por %p42, %p43
    %p45 = scmp.ne.s32.totalorder %s37, %s40
    %p46 = scmp.eq.s32.totalorder %s13, 0
    %p47 = por %p45, %p46
    %p48 = scmp.ne.s32.totalorder %s37, %s40
    %p49 = scmp.eq.s32.totalorder %s18, 15
    %p50 = por %p48, %p49
    %p51 = scmp.ne.s32.totalorder %s40, %s41
    %p52 = scmp.eq.s32.totalorder %s18, 0
    %p53 = por %p51, %p52
    %p54 = scmp.ne.s32.totalorder %s40, %s41
    %p55 = scmp.eq.s32.totalorder %s19, 15
    %p56 = por %p54, %p55
    %p58 = scmp.ne.s32.totalorder %s41, %s57
    %p59 = scmp.eq.s32.totalorder %s19, 0
    %p60 = por %p58, %p59
    %s61 = sadd.s32 %s21, 1
    %s62 = sadd.s32 %s28, 1
    %s63 = ssub.s32 %s20, %s32
    %s64 = ssub.s32 %s61, %s62
    %s65 = sor.u32 %s63, %s64
    %p66 = scmp.eq.s32.totalorder %s65, 0
    %s68 = sadd.s32 %s67, 1
    %s69 = scalar_select %p66, %s67, %s68
    %p72 = pneg %p66
    %p73 = scmp.eq.s32.totalorder %s13, 15
    %p74 = por %p72, %p73
    %p75 = scmp.ne.s32.totalorder %s67, %s70
    %p76 = scmp.eq.s32.totalorder %s13, 0
    %p77 = por %p75, %p76
    %p78 = scmp.ne.s32.totalorder %s67, %s70
    %p79 = scmp.eq.s32.totalorder %s18, 15
    %p80 = por %p78, %p79
    %p81 = scmp.ne.s32.totalorder %s70, %s71
    %p82 = scmp.eq.s32.totalorder %s18, 0
    %p83 = por %p81, %p82
    %p84 = scmp.ne.s32.totalorder %s70, %s71
    %p85 = scmp.eq.s32.totalorder %s19, 15
    %p86 = por %p84, %p85
    %p88 = scmp.ne.s32.totalorder %s71, %s87
    %p89 = scmp.eq.s32.totalorder %s19, 0
    %p90 = por %p88, %p89
    %s91 = sadd.s32 %s21, 2
    %s92 = sadd.s32 %s28, 2
    %s93 = ssub.s32 %s20, %s32
    %s94 = ssub.s32 %s91, %s92
    %s95 = sor.u32 %s93, %s94
    %p96 = scmp.eq.s32.totalorder %s95, 0
    %s98 = sadd.s32 %s97, 1
    %s99 = scalar_select %p96, %s97, %s98
    %p102 = pneg %p96
    %p103 = scmp.eq.s32.totalorder %s13, 15
    %p104 = por %p102, %p103
    %p105 = scmp.ne.s32.totalorder %s97, %s100
    %p106 = scmp.eq.s32.totalorder %s13, 0
    %p107 = por %p105, %p106
    %p108 = scmp.ne.s32.totalorder %s97, %s100
    %p109 = scmp.eq.s32.totalorder %s18, 15
    %p110 = por %p108, %p109
    %p111 = scmp.ne.s32.totalorder %s100, %s101
    %p112 = scmp.eq.s32.totalorder %s18, 0
    %p113 = por %p111, %p112
    %p114 = scmp.ne.s32.totalorder %s100, %s101
    %p115 = scmp.eq.s32.totalorder %s19, 15
    %p116 = por %p114, %p115
    %p118 = scmp.ne.s32.totalorder %s101, %s117
    %p119 = scmp.eq.s32.totalorder %s19, 0
    %p120 = por %p118, %p119
    %s122 = sadd.s32 %s121, 1
    %p125 = scmp.eq.s32.totalorder %s13, 15
    %p126 = scmp.ne.s32.totalorder %s121, %s123
    %p127 = scmp.eq.s32.totalorder %s13, 0
    %p128 = por %p126, %p127
    %p129 = scmp.ne.s32.totalorder %s121, %s123
    %p130 = scmp.eq.s32.totalorder %s18, 15
    %p131 = por %p129, %p130
    %p132 = scmp.ne.s32.totalorder %s123, %s124
    %p133 = scmp.eq.s32.totalorder %s18, 0
    %p134 = por %p132, %p133
    %p135 = scmp.ne.s32.totalorder %s123, %s124
    %p136 = scmp.eq.s32.totalorder %s19, 15
    %p137 = por %p135, %p136
    %p139 = scmp.ne.s32.totalorder %s124, %s138
    %p140 = scmp.eq.s32.totalorder %s19, 0
    %p141 = por %p139, %p140
    %s143 = sadd.s32 %s142, 1
    %p146 = scmp.eq.s32.totalorder %s13, 15
    %p147 = scmp.ne.s32.totalorder %s142, %s144
    %p148 = scmp.eq.s32.totalorder %s13, 0
    %p149 = por %p147, %p148
    %p150 = scmp.ne.s32.totalorder %s142, %s144
    %p151 = scmp.eq.s32.totalorder %s18, 15
    %p152 = por %p150, %p151
    %p153 = scmp.ne.s32.totalorder %s144, %s145
    %p154 = scmp.eq.s32.totalorder %s18, 0
    %p155 = por %p153, %p154
    %p156 = scmp.ne.s32.totalorder %s144, %s145
    %p157 = scmp.eq.s32.totalorder %s19, 15
    %p158 = por %p156, %p157
    %p160 = scmp.ne.s32.totalorder %s145, %s159
    %p161 = scmp.eq.s32.totalorder %s19, 0
    %p162 = por %p160, %p161
    %s163 = smul.u32 %s20, 8
    %s164 = sadd.s32 %s163, %s21
    %s165 = smul.u32 %s32, 8
    %s166 = sadd.s32 %s165, %s28
    %s167 = ssub.s32 %s164, %s166
    %p168 = scmp.eq.s32.totalorder %s167, 0
    %s170 = sadd.s32 %s169, 1
    %s171 = scalar_select %p168, %s169, %s170
    %p174 = pneg %p168
    %p175 = scmp.eq.s32.totalorder %s13, 15
    %p176 = por %p174, %p175
    %p177 = scmp.ne.s32.totalorder %s169, %s172
    %p178 = scmp.eq.s32.totalorder %s13, 0
    %p179 = por %p177, %p178
    %p180 = scmp.ne.s32.totalorder %s169, %s172
    %p181 = scmp.eq.s32.totalorder %s18, 15
    %p182 = por %p180, %p181
    %p183 = scmp.ne.s32.totalorder %s172, %s173
    %p184 = scmp.eq.s32.totalorder %s18, 0
    %p185 = por %p183, %p184
    %p186 = scmp.ne.s32.totalorder %s172, %s173
    %p187 = scmp.eq.s32.totalorder %s19, 15
    %p188 = por %p186, %p187
    %p190 = scmp.ne.s32.totalorder %s173, %s189
    %p191 = scmp.eq.s32.totalorder %s19, 0
    %p192 = por %p190, %p191
    %s193 = smul.u32 %s20, 8
    %s194 = sadd.s32 %s193, %s21
    %s195 = smul.u32 %s32, 8
    %s196 = sadd.s32 %s195, %s28
    %s197 = ssub.s32 %s194, %s196
    %p198 = scmp.eq.s32.totalorder %s197, 0
    %s200 = sadd.s32 %s199, 1
    %s201 = scalar_select %p198, %s199, %s200
    %p204 = pneg %p198
    %p205 = scmp.eq.s32.totalorder %s13, 15
    %p206 = por %p204, %p205
    %p207 = scmp.ne.s32.totalorder %s199, %s202
    %p208 = scmp.eq.s32.totalorder %s13, 0
    %p209 = por %p207, %p208
    %p210 = scmp.ne.s32.totalorder %s199, %s202
    %p211 = scmp.eq.s32.totalorder %s18, 15
    %p212 = por %p210, %p211
    %p213 = scmp.ne.s32.totalorder %s202, %s203
    %p214 = scmp.eq.s32.totalorder %s18, 0
    %p215 = por %p213, %p214
    %p216 = scmp.ne.s32.totalorder %s202, %s203
    %p217 = scmp.eq.s32.totalorder %s19, 15
    %p218 = por %p216, %p217
    %p220 = scmp.ne.s32.totalorder %s203, %s219
    %p221 = scmp.eq.s32.totalorder %s19, 0
    %p222 = por %p220, %p221
    %p223 = scmp.le.s32.totalorder 1, %s13
    %p224 = scmp.lt.s32.totalorder %s13, 17
    %p225 = pnand %p223, %p224
    %p226 = pneg %p225
    // Predicated region
    $region9: #{res_block_down.4} parent=5 // pred_check
      _
    $region10: #{res_block_down.4} parent=5 // pred_check_branch
      %228 = sbr.rel (%p225) target = $region12
    $region11: #{res_block_down.4} parent=5 // pred_region
      %s229 = ssub.s32 %s13, 1
      // Predicated region
      $region13: #{res_block_down.4} parent=11 // pred_check
        %p230 = pneg %p134
      $region14: #{res_block_down.4} parent=11 // pred_check_branch
        %232 = sbr.rel (%p230) target = $region16
      $region15: #{res_block_down.4} parent=11 // pred_region
        _
      $region16: #{res_block_down.4} parent=11 // pred_fallthru
        _
      // Predicated region
      $region17: #{res_block_down.4} parent=11 // pred_check
        %p233 = pneg %p155
      $region18: #{res_block_down.4} parent=11 // pred_check_branch
        %235 = sbr.rel (%p233) target = $region20
      $region19: #{res_block_down.4} parent=11 // pred_region
        _
      $region20: #{res_block_down.4} parent=11 // pred_fallthru
        _
    $region12: #{res_block_down.4} parent=5 // pred_fallthru
      _
    %p236 = scmp.lt.s32.totalorder %s13, 16
    // Predicated region
    $region21: #{res_block_down.4} parent=5 // pred_check
      %p237 = pneg %p236
    $region22: #{res_block_down.4} parent=5 // pred_check_branch
      %239 = sbr.rel (%p237) target = $region24
    $region23: #{res_block_down.4} parent=5 // pred_region
      // Predicated region
      $region25: #{res_block_down.4} parent=23 // pred_check
        %p240 = pneg %p47
      $region26: #{res_block_down.4} parent=23 // pred_check_branch
        %242 = sbr.rel (%p240) target = $region28
      $region27: #{res_block_down.4} parent=23 // pred_region
        %p243 = scmp.lt.s32.totalorder %s20, 1
        %s244 = scalar_select %p243, %s20, 1
        %p245 = scmp.lt.s32.totalorder %s21, 9
        %s246 = scalar_select %p245, %s21, 9
        %s247 = smul.addr %s246, 20
        %s248 = smul.addr %s244, 200
        %s249 = sadd.s32 %s247, %s248
        %s250 = smul.addr %s249, 8
        %s251 = scalar_lea.vmem %s0, %s250
      $region28: #{res_block_down.4} parent=23 // pred_fallthru
        _
      // Predicated region
      $region29: #{res_block_down.4} parent=23 // pred_check
        %p252 = pneg %p77
      $region30: #{res_block_down.4} parent=23 // pred_check_branch
        %254 = sbr.rel (%p252) target = $region32
      $region31: #{res_block_down.4} parent=23 // pred_region
        %s255 = sadd.s32 %s21, 1
        %p256 = scmp.lt.s32.totalorder %s20, 1
        %s257 = scalar_select %p256, %s20, 1
        %p258 = scmp.lt.s32.totalorder %s255, 9
        %s259 = scalar_select %p258, %s255, 9
        %s260 = smul.addr %s259, 20
        %s261 = smul.addr %s257, 200
        %s262 = sadd.s32 %s260, %s261
        %s263 = smul.addr %s262, 8
        %s264 = scalar_lea.vmem %s1, %s263
        %s265 = sadd.s32 %s21, 1
      $region32: #{res_block_down.4} parent=23 // pred_fallthru
        _
      // Predicated region
      $region33: #{res_block_down.4} parent=23 // pred_check
        %p266 = pneg %p107
      $region34: #{res_block_down.4} parent=23 // pred_check_branch
        %268 = sbr.rel (%p266) target = $region36
      $region35: #{res_block_down.4} parent=23 // pred_region
        %s269 = sadd.s32 %s21, 2
        %p270 = scmp.lt.s32.totalorder %s20, 1
        %s271 = scalar_select %p270, %s20, 1
        %p272 = scmp.lt.s32.totalorder %s269, 9
        %s273 = scalar_select %p272, %s269, 9
        %s274 = smul.addr %s273, 20
        %s275 = smul.addr %s271, 200
        %s276 = sadd.s32 %s274, %s275
        %s277 = smul.addr %s276, 8
        %s278 = scalar_lea.vmem %s2, %s277
        %s279 = sadd.s32 %s21, 2
      $region36: #{res_block_down.4} parent=23 // pred_fallthru
        _
    $region24: #{res_block_down.4} parent=5 // pred_fallthru
      _
    %p280 = scmp.le.s32.totalorder 1, %s13
    %p281 = scmp.lt.s32.totalorder %s13, 17
    %p282 = pnand %p280, %p281
    %p283 = pneg %p282
    // Predicated region
    $region37: #{res_block_down.4} parent=5 // pred_check
      _
    $region38: #{res_block_down.4} parent=5 // pred_check_branch
      %285 = sbr.rel (%p282) target = $region40
    $region39: #{res_block_down.4} parent=5 // pred_region
      %s286 = ssub.s32 %s13, 1
      %p287 = scmp.lt.s32.totalorder %s22, 1
      %s288 = scalar_select %p287, %s22, 1
      %p289 = scmp.lt.s32.totalorder %s23, 9
      %s290 = scalar_select %p289, %s23, 9
      %s291 = smul.addr %s290, 20
      %s292 = smul.addr %s288, 200
      %s293 = sadd.s32 %s291, %s292
      %s294 = smul.addr %s293, 8
      %s295 = scalar_lea.vmem %s0, %s294
      %p296 = pneg %p53
      %p297 = pneg %p50
      %s298 = sadd.s32 %s23, 1
      %p299 = scmp.lt.s32.totalorder %s22, 1
      %s300 = scalar_select %p299, %s22, 1
      %p301 = scmp.lt.s32.totalorder %s298, 9
      %s302 = scalar_select %p301, %s298, 9
      %s303 = smul.addr %s302, 20
      %s304 = smul.addr %s300, 200
      %s305 = sadd.s32 %s303, %s304
      %s306 = smul.addr %s305, 8
      %s307 = scalar_lea.vmem %s1, %s306
      %p308 = pneg %p83
      %p309 = pneg %p80
      %s310 = sadd.s32 %s23, 2
      %p311 = scmp.lt.s32.totalorder %s22, 1
      %s312 = scalar_select %p311, %s22, 1
      %p313 = scmp.lt.s32.totalorder %s310, 9
      %s314 = scalar_select %p313, %s310, 9
      %s315 = smul.addr %s314, 20
      %s316 = smul.addr %s312, 200
      %s317 = sadd.s32 %s315, %s316
      %s318 = smul.addr %s317, 8
      %s319 = scalar_lea.vmem %s2, %s318
      %p320 = pneg %p113
      %p321 = pneg %p110
      %p322 = pneg %p134
      %p323 = pneg %p131
      %p324 = pneg %p155
      %p325 = pneg %p152
      %p326 = pneg %p185
      %p327 = pneg %p182
      %s328 = smul.u32 %s22, 8
      %s329 = sadd.s32 %s328, %s23
      %p330 = scmp.lt.s32.totalorder %s329, 15
      %s331 = scalar_select %p330, %s329, 15
      %s332 = smul.addr %s331, 8
      %s333 = smul.addr %s332, 8
      %s334 = scalar_lea.vmem %s5, %s333
      %p335 = pneg %p215
      %p336 = pneg %p212
      %s337 = smul.u32 %s22, 8
      %s338 = sadd.s32 %s337, %s23
      %p339 = scmp.lt.s32.totalorder %s338, 15
      %s340 = scalar_select %p339, %s338, 15
      %s341 = smul.addr %s340, 8
      %s342 = scalar_lea.vmem %s6, %s341
      %p343 = scmp.lt.s32.totalorder %s22, 1
      %s344 = scalar_select %p343, %s22, 1
      %p345 = scmp.lt.s32.totalorder %s23, 9
      %s346 = scalar_select %p345, %s23, 9
      %s347 = smul.addr %s346, 20
      %s348 = smul.addr %s344, 200
      %s349 = sadd.s32 %s347, %s348
      %s350 = smul.addr %s349, 8
      %s351 = scalar_lea.vmem %s0, %s350
      %s352 = sadd.s32 %s23, 1
      %p353 = scmp.lt.s32.totalorder %s22, 1
      %s354 = scalar_select %p353, %s22, 1
      %p355 = scmp.lt.s32.totalorder %s352, 9
      %s356 = scalar_select %p355, %s352, 9
      %s357 = smul.addr %s356, 20
      %s358 = smul.addr %s354, 200
      %s359 = sadd.s32 %s357, %s358
      %s360 = smul.addr %s359, 8
      %s361 = scalar_lea.vmem %s1, %s360
      %s362 = sadd.s32 %s23, 1
      %s363 = sadd.s32 %s23, 2
      %p364 = scmp.lt.s32.totalorder %s22, 1
      %s365 = scalar_select %p364, %s22, 1
      %p366 = scmp.lt.s32.totalorder %s363, 9
      %s367 = scalar_select %p366, %s363, 9
      %s368 = smul.addr %s367, 20
      %s369 = smul.addr %s365, 200
      %s370 = sadd.s32 %s368, %s369
      %s371 = smul.addr %s370, 8
      %s372 = scalar_lea.vmem %s2, %s371
      %s373 = sadd.s32 %s23, 2
      %s374 = smul.u32 %s22, 8
      %s375 = sadd.s32 %s374, %s23
      %p376 = scmp.lt.s32.totalorder %s375, 15
      %s377 = scalar_select %p376, %s375, 15
      %s378 = smul.addr %s377, 8
      %s379 = smul.addr %s378, 8
      %s380 = scalar_lea.vmem %s5, %s379
      %s381 = smul.u32 %s22, 8
      %s382 = sadd.s32 %s381, %s23
      %s383 = smul.u32 %s22, 8
      %s384 = sadd.s32 %s383, %s23
      %p385 = scmp.lt.s32.totalorder %s384, 15
      %s386 = scalar_select %p385, %s384, 15
      %s387 = smul.addr %s386, 8
      %s388 = scalar_lea.vmem %s6, %s387
      %s389 = smul.u32 %s22, 8
      %s390 = sadd.s32 %s389, %s23
      %v391 = vld [vmem:[%s351] sm:$0xff]
      %v392 = vld [vmem:[%s351 + $0x8] sm:$0x3]
      %v393 = vld [vmem:[%s351 + $0x10] sm:$0xff]
      %v394 = vld [vmem:[%s351 + $0x18] sm:$0x3]
      %v395 = vld [vmem:[%s351 + $0x20] sm:$0xff]
      %v396 = vld [vmem:[%s351 + $0x28] sm:$0x3]
      %v397 = vld [vmem:[%s351 + $0x30] sm:$0xff]
      %v398 = vld [vmem:[%s351 + $0x38] sm:$0x3]
      %v399 = vld [vmem:[%s351 + $0x40] sm:$0xff]
      %v400 = vld [vmem:[%s351 + $0x48] sm:$0x3]
      %v401 = vld [vmem:[%s351 + $0x50] sm:$0xff]
      %v402 = vld [vmem:[%s351 + $0x58] sm:$0x3]
      %v403 = vld [vmem:[%s351 + $0x60] sm:$0xff]
      %v404 = vld [vmem:[%s351 + $0x68] sm:$0x3]
      %v405 = vld [vmem:[%s351 + $0x70] sm:$0xff]
      %v406 = vld [vmem:[%s351 + $0x78] sm:$0x3]
      %v407 = vld [vmem:[%s351 + $0x80] sm:$0xff]
      %v408 = vld [vmem:[%s351 + $0x88] sm:$0x3]
      %v409 = vld [vmem:[%s351 + $0x90] sm:$0xff]
      %v410 = vld [vmem:[%s351 + $0x98] sm:$0x3]
      %v411 = vld [vmem:[%s3] sm:$0xf]
      %vm428 = vcmask 1046528
      %v429 = vrot.slane %v391, 1
      %v430 = vrot.slane %v392, 1
      %v431 = vsel %vm428, %v429, %v430
      %v432 = vrot.slane %v393, 1
      %v433 = vrot.slane %v394, 1
      %v434 = vsel %vm428, %v432, %v433
      %v435 = vrot.slane %v395, 1
      %v436 = vrot.slane %v396, 1
      %v437 = vsel %vm428, %v435, %v436
      %v438 = vrot.slane %v397, 1
      %v439 = vrot.slane %v398, 1
      %v440 = vsel %vm428, %v438, %v439
      %v441 = vrot.slane %v399, 1
      %v442 = vrot.slane %v400, 1
      %v443 = vsel %vm428, %v441, %v442
      %v444 = vrot.slane %v401, 1
      %v445 = vrot.slane %v402, 1
      %v446 = vsel %vm428, %v444, %v445
      %v447 = vrot.slane %v403, 1
      %v448 = vrot.slane %v404, 1
      %v449 = vsel %vm428, %v447, %v448
      %v450 = vrot.slane %v405, 1
      %v451 = vrot.slane %v406, 1
      %v452 = vsel %vm428, %v450, %v451
      %s453 = scalar_lea.vmem %s3, 4
      %v454 = vld [vmem:[%s453] sm:$0xf]
      %vm455 = vcmask 31744
      %v456 = vsel %vm455, %v431, 0
      %v458 = vsel %vm455, %v434, 0
      %v460 = vsel %vm455, %v437, 0
      %v462 = vsel %vm455, %v440, 0
      %v464 = vsel %vm455, %v443, 0
      %v466 = vsel %vm455, %v446, 0
      %v468 = vsel %vm455, %v449, 0
      %v470 = vsel %vm455, %v452, 0
      %vm472 = vcmask 1043456
      %v474 = vsel %vm472, %v454, 0
      %476 = vmatprep.subr.mxu0 0.0
      %477 = vmatpush1.msra.mxu0 0.0
      %478 = vmatprep.subr.mxu0 0.0
      %479 = vmatpush1.msra.mxu0 0.0
      %480 = vmatprep.subr.mxu0 0.0
      %481 = vmatpush1.msra.mxu0 0.0
      %482 = vmatprep.subr.mxu0 0.0
      %483 = vmatpush1.msra.mxu0 0.0
      %484 = vmatprep.subr.mxu0 0.0
      %485 = vmatpush1.msra.mxu0 0.0
      %486 = vmatprep.subr.mxu0 0.0
      %487 = vmatpush1.msra.mxu0 0.0
      %488 = vmatprep.subr.mxu0 0.0
      %489 = vmatpush1.msra.mxu0 0.0
      %490 = vmatprep.subr.mxu0 0.0
      %491 = vmatpush1.msra.mxu0 0.0
      %492 = vmatprep.subr.mxu0 0.0
      %493 = vmatpush1.msra.mxu0 0.0
      %494 = vmatprep.subr.mxu0 0.0
      %495 = vmatpush1.msra.mxu0 0.0
      %496 = vmatprep.subr.mxu0 0.0
      %497 = vmatpush1.msra.mxu0 0.0
      %498 = vmatprep.subr.mxu0 0.0
      %499 = vmatpush1.msra.mxu0 0.0
      %500 = vmatprep.subr.mxu0 0.0
      %501 = vmatpush1.msra.mxu0 0.0
      %502 = vmatprep.subr.mxu0 0.0
      %503 = vmatpush1.msra.mxu0 0.0
      %504 = vmatprep.subr.mxu0 0.0
      %505 = vmatpush1.msra.mxu0 0.0
      %506 = vmatprep.subr.mxu0 0.0
      %507 = vmatpush1.msra.mxu0 %v474
      %508 = vmatprep.subr.mxu0 0.0
      %509 = vmatpush2.msra.mxu0 0.0
      %510 = vmatprep.subr.mxu0 0.0
      %511 = vmatpush2.msra.mxu0 0.0
      %512 = vmatprep.subr.mxu0 0.0
      %513 = vmatpush2.msra.mxu0 0.0
      %514 = vmatprep.subr.mxu0 0.0
      %515 = vmatpush2.msra.mxu0 0.0
      %516 = vmatprep.subr.mxu0 0.0
      %517 = vmatpush2.msra.mxu0 0.0
      %518 = vmatprep.subr.mxu0 0.0
      %519 = vmatpush2.msra.mxu0 0.0
      %520 = vmatprep.subr.mxu0 0.0
      %521 = vmatpush2.msra.mxu0 0.0
      %522 = vmatprep.subr.mxu0 0.0
      %523 = vmatpush2.msra.mxu0 0.0
      %524 = vmatprep.subr.mxu0 0.0
      %525 = vmatpush2.msra.mxu0 0.0
      %526 = vmatprep.subr.mxu0 0.0
      %527 = vmatpush2.msra.mxu0 0.0
      %528 = vmatprep.subr.mxu0 0.0
      %529 = vmatpush2.msra.mxu0 0.0
      %530 = vmatprep.subr.mxu0 0.0
      %531 = vmatpush2.msra.mxu0 0.0
      %532 = vmatprep.subr.mxu0 0.0
      %533 = vmatpush2.msra.mxu0 0.0
      %534 = vmatprep.subr.mxu0 0.0
      %535 = vmatpush2.msra.mxu0 0.0
      %536 = vmatprep.subr.mxu0 0.0
      %537 = vmatpush2.msra.mxu0 0.0
      %538 = vmatprep.subr.mxu0 0.0
      %539 = vmatpush2.msra.mxu0 0.0
      %540 = vmatprep.mubr.f32.mxu0 0.0
      %541 = vmatmul.mubr.f32.gmra.mxu0 %v456
      %v542 = vpop.f32.mrf.mxu0
      %v543 = vadd.f32 0.0, %v542
      %v544 = vpop.f32.mrf.mxu0
      %545 = vmatprep.mubr.f32.mxu0 0.0
      %546 = vmatmul.mubr.f32.gmra.mxu0 %v458
      %v547 = vpop.f32.mrf.mxu0
      %v548 = vadd.f32 0.0, %v547
      %v549 = vpop.f32.mrf.mxu0
      %550 = vmatprep.mubr.f32.mxu0 0.0
      %551 = vmatmul.mubr.f32.gmra.mxu0 %v460
      %v552 = vpop.f32.mrf.mxu0
      %v553 = vadd.f32 0.0, %v552
      %v554 = vpop.f32.mrf.mxu0
      %555 = vmatprep.mubr.f32.mxu0 0.0
      %556 = vmatmul.mubr.f32.gmra.mxu0 %v462
      %v557 = vpop.f32.mrf.mxu0
      %v558 = vadd.f32 0.0, %v557
      %v559 = vpop.f32.mrf.mxu0
      %560 = vmatprep.mubr.f32.mxu0 0.0
      %561 = vmatmul.mubr.f32.gmra.mxu0 %v464
      %v562 = vpop.f32.mrf.mxu0
      %v563 = vadd.f32 0.0, %v562
      %v564 = vpop.f32.mrf.mxu0
      %565 = vmatprep.mubr.f32.mxu0 0.0
      %566 = vmatmul.mubr.f32.gmra.mxu0 %v466
      %v567 = vpop.f32.mrf.mxu0
      %v568 = vadd.f32 0.0, %v567
      %v569 = vpop.f32.mrf.mxu0
      %570 = vmatprep.mubr.f32.mxu0 0.0
      %571 = vmatmul.mubr.f32.gmra.mxu0 %v468
      %v572 = vpop.f32.mrf.mxu0
      %v573 = vadd.f32 0.0, %v572
      %v574 = vpop.f32.mrf.mxu0
      %575 = vmatprep.mubr.f32.mxu0 0.0
      %576 = vmatmul.mubr.f32.gmra.mxu0 %v470
      %v577 = vpop.f32.mrf.mxu0
      %v578 = vadd.f32 0.0, %v577
      %v579 = vpop.f32.mrf.mxu0
      %580 = vdwg.mxu0
      %v581 = vsel %vm455, %v391, 0
      %v583 = vsel %vm455, %v393, 0
      %v585 = vsel %vm455, %v395, 0
      %v587 = vsel %vm455, %v397, 0
      %v589 = vsel %vm455, %v399, 0
      %v591 = vsel %vm455, %v401, 0
      %v593 = vsel %vm455, %v403, 0
      %v595 = vsel %vm455, %v405, 0
      %v598 = vsel %vm472, %v411, 0
      %600 = vmatprep.subr.mxu0 0.0
      %601 = vmatpush1.msra.mxu0 0.0
      %602 = vmatprep.subr.mxu0 0.0
      %603 = vmatpush1.msra.mxu0 0.0
      %604 = vmatprep.subr.mxu0 0.0
      %605 = vmatpush1.msra.mxu0 0.0
      %606 = vmatprep.subr.mxu0 0.0
      %607 = vmatpush1.msra.mxu0 0.0
      %608 = vmatprep.subr.mxu0 0.0
      %609 = vmatpush1.msra.mxu0 0.0
      %610 = vmatprep.subr.mxu0 0.0
      %611 = vmatpush1.msra.mxu0 0.0
      %612 = vmatprep.subr.mxu0 0.0
      %613 = vmatpush1.msra.mxu0 0.0
      %614 = vmatprep.subr.mxu0 0.0
      %615 = vmatpush1.msra.mxu0 0.0
      %616 = vmatprep.subr.mxu0 0.0
      %617 = vmatpush1.msra.mxu0 0.0
      %618 = vmatprep.subr.mxu0 0.0
      %619 = vmatpush1.msra.mxu0 0.0
      %620 = vmatprep.subr.mxu0 0.0
      %621 = vmatpush1.msra.mxu0 0.0
      %622 = vmatprep.subr.mxu0 0.0
      %623 = vmatpush1.msra.mxu0 0.0
      %624 = vmatprep.subr.mxu0 0.0
      %625 = vmatpush1.msra.mxu0 0.0
      %626 = vmatprep.subr.mxu0 0.0
      %627 = vmatpush1.msra.mxu0 0.0
      %628 = vmatprep.subr.mxu0 0.0
      %629 = vmatpush1.msra.mxu0 0.0
      %630 = vmatprep.subr.mxu0 0.0
      %631 = vmatpush1.msra.mxu0 %v598
      %632 = vmatprep.subr.mxu0 0.0
      %633 = vmatpush2.msra.mxu0 0.0
      %634 = vmatprep.subr.mxu0 0.0
      %635 = vmatpush2.msra.mxu0 0.0
      %636 = vmatprep.subr.mxu0 0.0
      %637 = vmatpush2.msra.mxu0 0.0
      %638 = vmatprep.subr.mxu0 0.0
      %639 = vmatpush2.msra.mxu0 0.0
      %640 = vmatprep.subr.mxu0 0.0
      %641 = vmatpush2.msra.mxu0 0.0
      %642 = vmatprep.subr.mxu0 0.0
      %643 = vmatpush2.msra.mxu0 0.0
      %644 = vmatprep.subr.mxu0 0.0
      %645 = vmatpush2.msra.mxu0 0.0
      %646 = vmatprep.subr.mxu0 0.0
      %647 = vmatpush2.msra.mxu0 0.0
      %648 = vmatprep.subr.mxu0 0.0
      %649 = vmatpush2.msra.mxu0 0.0
      %650 = vmatprep.subr.mxu0 0.0
      %651 = vmatpush2.msra.mxu0 0.0
      %652 = vmatprep.subr.mxu0 0.0
      %653 = vmatpush2.msra.mxu0 0.0
      %654 = vmatprep.subr.mxu0 0.0
      %655 = vmatpush2.msra.mxu0 0.0
      %656 = vmatprep.subr.mxu0 0.0
      %657 = vmatpush2.msra.mxu0 0.0
      %658 = vmatprep.subr.mxu0 0.0
      %659 = vmatpush2.msra.mxu0 0.0
      %660 = vmatprep.subr.mxu0 0.0
      %661 = vmatpush2.msra.mxu0 0.0
      %662 = vmatprep.subr.mxu0 0.0
      %663 = vmatpush2.msra.mxu0 0.0
      %664 = vmatprep.mubr.f32.mxu0 0.0
      %665 = vmatmul.mubr.f32.gmra.mxu0 %v581
      %v666 = vpop.f32.mrf.mxu0
      %v667 = vadd.f32 %v543, %v666
      %v668 = vpop.f32.mrf.mxu0
      %669 = vmatprep.mubr.f32.mxu0 0.0
      %670 = vmatmul.mubr.f32.gmra.mxu0 %v583
      %v671 = vpop.f32.mrf.mxu0
      %v672 = vadd.f32 %v548, %v671
      %v673 = vpop.f32.mrf.mxu0
      %674 = vmatprep.mubr.f32.mxu0 0.0
      %675 = vmatmul.mubr.f32.gmra.mxu0 %v585
      %v676 = vpop.f32.mrf.mxu0
      %v677 = vadd.f32 %v553, %v676
      %v678 = vpop.f32.mrf.mxu0
      %679 = vmatprep.mubr.f32.mxu0 0.0
      %680 = vmatmul.mubr.f32.gmra.mxu0 %v587
      %v681 = vpop.f32.mrf.mxu0
      %v682 = vadd.f32 %v558, %v681
      %v683 = vpop.f32.mrf.mxu0
      %684 = vmatprep.mubr.f32.mxu0 0.0
      %685 = vmatmul.mubr.f32.gmra.mxu0 %v589
      %v686 = vpop.f32.mrf.mxu0
      %v687 = vadd.f32 %v563, %v686
      %v688 = vpop.f32.mrf.mxu0
      %689 = vmatprep.mubr.f32.mxu0 0.0
      %690 = vmatmul.mubr.f32.gmra.mxu0 %v591
      %v691 = vpop.f32.mrf.mxu0
      %v692 = vadd.f32 %v568, %v691
      %v693 = vpop.f32.mrf.mxu0
      %694 = vmatprep.mubr.f32.mxu0 0.0
      %695 = vmatmul.mubr.f32.gmra.mxu0 %v593
      %v696 = vpop.f32.mrf.mxu0
      %v697 = vadd.f32 %v573, %v696
      %v698 = vpop.f32.mrf.mxu0
      %699 = vmatprep.mubr.f32.mxu0 0.0
      %700 = vmatmul.mubr.f32.gmra.mxu0 %v595
      %v701 = vpop.f32.mrf.mxu0
      %v702 = vadd.f32 %v578, %v701
      %v703 = vpop.f32.mrf.mxu0
      %704 = vdwg.mxu0
      %vm705 = vcmask 1045504
      %v706 = vrot.slane %v391, 2
      %v707 = vrot.slane %v392, 2
      %v708 = vsel %vm705, %v706, %v707
      %v709 = vrot.slane %v393, 2
      %v710 = vrot.slane %v394, 2
      %v711 = vsel %vm705, %v709, %v710
      %v712 = vrot.slane %v395, 2
      %v713 = vrot.slane %v396, 2
      %v714 = vsel %vm705, %v712, %v713
      %v715 = vrot.slane %v397, 2
      %v716 = vrot.slane %v398, 2
      %v717 = vsel %vm705, %v715, %v716
      %v718 = vrot.slane %v399, 2
      %v719 = vrot.slane %v400, 2
      %v720 = vsel %vm705, %v718, %v719
      %v721 = vrot.slane %v401, 2
      %v722 = vrot.slane %v402, 2
      %v723 = vsel %vm705, %v721, %v722
      %v724 = vrot.slane %v403, 2
      %v725 = vrot.slane %v404, 2
      %v726 = vsel %vm705, %v724, %v725
      %v727 = vrot.slane %v405, 2
      %v728 = vrot.slane %v406, 2
      %v729 = vsel %vm705, %v727, %v728
      %s730 = scalar_lea.vmem %s3, 8
      %v731 = vld [vmem:[%s730] sm:$0xf]
      %v732 = vsel %vm455, %v708, 0
      %v734 = vsel %vm455, %v711, 0
      %v736 = vsel %vm455, %v714, 0
      %v738 = vsel %vm455, %v717, 0
      %v740 = vsel %vm455, %v720, 0
      %v742 = vsel %vm455, %v723, 0
      %v744 = vsel %vm455, %v726, 0
      %v746 = vsel %vm455, %v729, 0
      %v749 = vsel %vm472, %v731, 0
      %751 = vmatprep.subr.mxu0 0.0
      %752 = vmatpush1.msra.mxu0 0.0
      %753 = vmatprep.subr.mxu0 0.0
      %754 = vmatpush1.msra.mxu0 0.0
      %755 = vmatprep.subr.mxu0 0.0
      %756 = vmatpush1.msra.mxu0 0.0
      %757 = vmatprep.subr.mxu0 0.0
      %758 = vmatpush1.msra.mxu0 0.0
      %759 = vmatprep.subr.mxu0 0.0
      %760 = vmatpush1.msra.mxu0 0.0
      %761 = vmatprep.subr.mxu0 0.0
      %762 = vmatpush1.msra.mxu0 0.0
      %763 = vmatprep.subr.mxu0 0.0
      %764 = vmatpush1.msra.mxu0 0.0
      %765 = vmatprep.subr.mxu0 0.0
      %766 = vmatpush1.msra.mxu0 0.0
      %767 = vmatprep.subr.mxu0 0.0
      %768 = vmatpush1.msra.mxu0 0.0
      %769 = vmatprep.subr.mxu0 0.0
      %770 = vmatpush1.msra.mxu0 0.0
      %771 = vmatprep.subr.mxu0 0.0
      %772 = vmatpush1.msra.mxu0 0.0
      %773 = vmatprep.subr.mxu0 0.0
      %774 = vmatpush1.msra.mxu0 0.0
      %775 = vmatprep.subr.mxu0 0.0
      %776 = vmatpush1.msra.mxu0 0.0
      %777 = vmatprep.subr.mxu0 0.0
      %778 = vmatpush1.msra.mxu0 0.0
      %779 = vmatprep.subr.mxu0 0.0
      %780 = vmatpush1.msra.mxu0 0.0
      %781 = vmatprep.subr.mxu0 0.0
      %782 = vmatpush1.msra.mxu0 %v749
      %783 = vmatprep.subr.mxu0 0.0
      %784 = vmatpush2.msra.mxu0 0.0
      %785 = vmatprep.subr.mxu0 0.0
      %786 = vmatpush2.msra.mxu0 0.0
      %787 = vmatprep.subr.mxu0 0.0
      %788 = vmatpush2.msra.mxu0 0.0
      %789 = vmatprep.subr.mxu0 0.0
      %790 = vmatpush2.msra.mxu0 0.0
      %791 = vmatprep.subr.mxu0 0.0
      %792 = vmatpush2.msra.mxu0 0.0
      %793 = vmatprep.subr.mxu0 0.0
      %794 = vmatpush2.msra.mxu0 0.0
      %795 = vmatprep.subr.mxu0 0.0
      %796 = vmatpush2.msra.mxu0 0.0
      %797 = vmatprep.subr.mxu0 0.0
      %798 = vmatpush2.msra.mxu0 0.0
      %799 = vmatprep.subr.mxu0 0.0
      %800 = vmatpush2.msra.mxu0 0.0
      %801 = vmatprep.subr.mxu0 0.0
      %802 = vmatpush2.msra.mxu0 0.0
      %803 = vmatprep.subr.mxu0 0.0
      %804 = vmatpush2.msra.mxu0 0.0
      %805 = vmatprep.subr.mxu0 0.0
      %806 = vmatpush2.msra.mxu0 0.0
      %807 = vmatprep.subr.mxu0 0.0
      %808 = vmatpush2.msra.mxu0 0.0
      %809 = vmatprep.subr.mxu0 0.0
      %810 = vmatpush2.msra.mxu0 0.0
      %811 = vmatprep.subr.mxu0 0.0
      %812 = vmatpush2.msra.mxu0 0.0
      %813 = vmatprep.subr.mxu0 0.0
      %814 = vmatpush2.msra.mxu0 0.0
      %815 = vmatprep.mubr.f32.mxu0 0.0
      %816 = vmatmul.mubr.f32.gmra.mxu0 %v732
      %v817 = vpop.f32.mrf.mxu0
      %v818 = vadd.f32 0.0, %v817
      %v819 = vpop.f32.mrf.mxu0
      %820 = vmatprep.mubr.f32.mxu0 0.0
      %821 = vmatmul.mubr.f32.gmra.mxu0 %v734
      %v822 = vpop.f32.mrf.mxu0
      %v823 = vadd.f32 0.0, %v822
      %v824 = vpop.f32.mrf.mxu0
      %825 = vmatprep.mubr.f32.mxu0 0.0
      %826 = vmatmul.mubr.f32.gmra.mxu0 %v736
      %v827 = vpop.f32.mrf.mxu0
      %v828 = vadd.f32 0.0, %v827
      %v829 = vpop.f32.mrf.mxu0
      %830 = vmatprep.mubr.f32.mxu0 0.0
      %831 = vmatmul.mubr.f32.gmra.mxu0 %v738
      %v832 = vpop.f32.mrf.mxu0
      %v833 = vadd.f32 0.0, %v832
      %v834 = vpop.f32.mrf.mxu0
      %835 = vmatprep.mubr.f32.mxu0 0.0
      %836 = vmatmul.mubr.f32.gmra.mxu0 %v740
      %v837 = vpop.f32.mrf.mxu0
      %v838 = vadd.f32 0.0, %v837
      %v839 = vpop.f32.mrf.mxu0
      %840 = vmatprep.mubr.f32.mxu0 0.0
      %841 = vmatmul.mubr.f32.gmra.mxu0 %v742
      %v842 = vpop.f32.mrf.mxu0
      %v843 = vadd.f32 0.0, %v842
      %v844 = vpop.f32.mrf.mxu0
      %845 = vmatprep.mubr.f32.mxu0 0.0
      %846 = vmatmul.mubr.f32.gmra.mxu0 %v744
      %v847 = vpop.f32.mrf.mxu0
      %v848 = vadd.f32 0.0, %v847
      %v849 = vpop.f32.mrf.mxu0
      %850 = vmatprep.mubr.f32.mxu0 0.0
      %851 = vmatmul.mubr.f32.gmra.mxu0 %v746
      %v852 = vpop.f32.mrf.mxu0
      %v853 = vadd.f32 0.0, %v852
      %v854 = vpop.f32.mrf.mxu0
      %855 = vdwg.mxu0
      %v856 = vadd.f32 %v667, %v818
      %v857 = vadd.f32 %v672, %v823
      %v858 = vadd.f32 %v677, %v828
      %v859 = vadd.f32 %v682, %v833
      %v860 = vadd.f32 %v687, %v838
      %v861 = vadd.f32 %v692, %v843
      %v862 = vadd.f32 %v697, %v848
      %v863 = vadd.f32 %v702, %v853
      %s864 = scalar_lea.vmem %s3, 12
      %v865 = vld [vmem:[%s864] sm:$0xf]
      %v867 = vsel %vm455, %v407, 0
      %v870 = vsel %vm472, %v865, 0
      %872 = vmatprep.subr.mxu0 0.0
      %873 = vmatpush1.msra.mxu0 0.0
      %874 = vmatprep.subr.mxu0 0.0
      %875 = vmatpush1.msra.mxu0 0.0
      %876 = vmatprep.subr.mxu0 0.0
      %877 = vmatpush1.msra.mxu0 0.0
      %878 = vmatprep.subr.mxu0 0.0
      %879 = vmatpush1.msra.mxu0 0.0
      %880 = vmatprep.subr.mxu0 0.0
      %881 = vmatpush1.msra.mxu0 0.0
      %882 = vmatprep.subr.mxu0 0.0
      %883 = vmatpush1.msra.mxu0 0.0
      %884 = vmatprep.subr.mxu0 0.0
      %885 = vmatpush1.msra.mxu0 0.0
      %886 = vmatprep.subr.mxu0 0.0
      %887 = vmatpush1.msra.mxu0 0.0
      %888 = vmatprep.subr.mxu0 0.0
      %889 = vmatpush1.msra.mxu0 0.0
      %890 = vmatprep.subr.mxu0 0.0
      %891 = vmatpush1.msra.mxu0 0.0
      %892 = vmatprep.subr.mxu0 0.0
      %893 = vmatpush1.msra.mxu0 0.0
      %894 = vmatprep.subr.mxu0 0.0
      %895 = vmatpush1.msra.mxu0 0.0
      %896 = vmatprep.subr.mxu0 0.0
      %897 = vmatpush1.msra.mxu0 0.0
      %898 = vmatprep.subr.mxu0 0.0
      %899 = vmatpush1.msra.mxu0 0.0
      %900 = vmatprep.subr.mxu0 0.0
      %901 = vmatpush1.msra.mxu0 0.0
      %902 = vmatprep.subr.mxu0 0.0
      %903 = vmatpush1.msra.mxu0 %v870
      %904 = vmatprep.subr.mxu0 0.0
      %905 = vmatpush2.msra.mxu0 0.0
      %906 = vmatprep.subr.mxu0 0.0
      %907 = vmatpush2.msra.mxu0 0.0
      %908 = vmatprep.subr.mxu0 0.0
      %909 = vmatpush2.msra.mxu0 0.0
      %910 = vmatprep.subr.mxu0 0.0
      %911 = vmatpush2.msra.mxu0 0.0
      %912 = vmatprep.subr.mxu0 0.0
      %913 = vmatpush2.msra.mxu0 0.0
      %914 = vmatprep.subr.mxu0 0.0
      %915 = vmatpush2.msra.mxu0 0.0
      %916 = vmatprep.subr.mxu0 0.0
      %917 = vmatpush2.msra.mxu0 0.0
      %918 = vmatprep.subr.mxu0 0.0
      %919 = vmatpush2.msra.mxu0 0.0
      %920 = vmatprep.subr.mxu0 0.0
      %921 = vmatpush2.msra.mxu0 0.0
      %922 = vmatprep.subr.mxu0 0.0
      %923 = vmatpush2.msra.mxu0 0.0
      %924 = vmatprep.subr.mxu0 0.0
      %925 = vmatpush2.msra.mxu0 0.0
      %926 = vmatprep.subr.mxu0 0.0
      %927 = vmatpush2.msra.mxu0 0.0
      %928 = vmatprep.subr.mxu0 0.0
      %929 = vmatpush2.msra.mxu0 0.0
      %930 = vmatprep.subr.mxu0 0.0
      %931 = vmatpush2.msra.mxu0 0.0
      %932 = vmatprep.subr.mxu0 0.0
      %933 = vmatpush2.msra.mxu0 0.0
      %934 = vmatprep.subr.mxu0 0.0
      %935 = vmatpush2.msra.mxu0 0.0
      %936 = vmatprep.mubr.f32.mxu0 0.0
      %937 = vmatmul.mubr.f32.gmra.mxu0 %v583
      %v938 = vpop.f32.mrf.mxu0
      %v939 = vadd.f32 0.0, %v938
      %v940 = vpop.f32.mrf.mxu0
      %941 = vmatprep.mubr.f32.mxu0 0.0
      %942 = vmatmul.mubr.f32.gmra.mxu0 %v585
      %v943 = vpop.f32.mrf.mxu0
      %v944 = vadd.f32 0.0, %v943
      %v945 = vpop.f32.mrf.mxu0
      %946 = vmatprep.mubr.f32.mxu0 0.0
      %947 = vmatmul.mubr.f32.gmra.mxu0 %v587
      %v948 = vpop.f32.mrf.mxu0
      %v949 = vadd.f32 0.0, %v948
      %v950 = vpop.f32.mrf.mxu0
      %951 = vmatprep.mubr.f32.mxu0 0.0
      %952 = vmatmul.mubr.f32.gmra.mxu0 %v589
      %v953 = vpop.f32.mrf.mxu0
      %v954 = vadd.f32 0.0, %v953
      %v955 = vpop.f32.mrf.mxu0
      %956 = vmatprep.mubr.f32.mxu0 0.0
      %957 = vmatmul.mubr.f32.gmra.mxu0 %v591
      %v958 = vpop.f32.mrf.mxu0
      %v959 = vadd.f32 0.0, %v958
      %v960 = vpop.f32.mrf.mxu0
      %961 = vmatprep.mubr.f32.mxu0 0.0
      %962 = vmatmul.mubr.f32.gmra.mxu0 %v593
      %v963 = vpop.f32.mrf.mxu0
      %v964 = vadd.f32 0.0, %v963
      %v965 = vpop.f32.mrf.mxu0
      %966 = vmatprep.mubr.f32.mxu0 0.0
      %967 = vmatmul.mubr.f32.gmra.mxu0 %v595
      %v968 = vpop.f32.mrf.mxu0
      %v969 = vadd.f32 0.0, %v968
      %v970 = vpop.f32.mrf.mxu0
      %971 = vmatprep.mubr.f32.mxu0 0.0
      %972 = vmatmul.mubr.f32.gmra.mxu0 %v867
      %v973 = vpop.f32.mrf.mxu0
      %v974 = vadd.f32 0.0, %v973
      %v975 = vpop.f32.mrf.mxu0
      %976 = vdwg.mxu0
      %v977 = vadd.f32 %v856, %v939
      %v978 = vadd.f32 %v857, %v944
      %v979 = vadd.f32 %v858, %v949
      %v980 = vadd.f32 %v859, %v954
      %v981 = vadd.f32 %v860, %v959
      %v982 = vadd.f32 %v861, %v964
      %v983 = vadd.f32 %v862, %v969
      %v984 = vadd.f32 %v863, %v974
      %v986 = vrot.slane %v407, 1
      %v987 = vrot.slane %v408, 1
      %v988 = vsel %vm428, %v986, %v987
      %s989 = scalar_lea.vmem %s3, 16
      %v990 = vld [vmem:[%s989] sm:$0xf]
      %v991 = vsel %vm455, %v988, 0
      %v994 = vsel %vm472, %v990, 0
      %996 = vmatprep.subr.mxu0 0.0
      %997 = vmatpush1.msra.mxu0 0.0
      %998 = vmatprep.subr.mxu0 0.0
      %999 = vmatpush1.msra.mxu0 0.0
      %1000 = vmatprep.subr.mxu0 0.0
      %1001 = vmatpush1.msra.mxu0 0.0
      %1002 = vmatprep.subr.mxu0 0.0
      %1003 = vmatpush1.msra.mxu0 0.0
      %1004 = vmatprep.subr.mxu0 0.0
      %1005 = vmatpush1.msra.mxu0 0.0
      %1006 = vmatprep.subr.mxu0 0.0
      %1007 = vmatpush1.msra.mxu0 0.0
      %1008 = vmatprep.subr.mxu0 0.0
      %1009 = vmatpush1.msra.mxu0 0.0
      %1010 = vmatprep.subr.mxu0 0.0
      %1011 = vmatpush1.msra.mxu0 0.0
      %1012 = vmatprep.subr.mxu0 0.0
      %1013 = vmatpush1.msra.mxu0 0.0
      %1014 = vmatprep.subr.mxu0 0.0
      %1015 = vmatpush1.msra.mxu0 0.0
      %1016 = vmatprep.subr.mxu0 0.0
      %1017 = vmatpush1.msra.mxu0 0.0
      %1018 = vmatprep.subr.mxu0 0.0
      %1019 = vmatpush1.msra.mxu0 0.0
      %1020 = vmatprep.subr.mxu0 0.0
      %1021 = vmatpush1.msra.mxu0 0.0
      %1022 = vmatprep.subr.mxu0 0.0
      %1023 = vmatpush1.msra.mxu0 0.0
      %1024 = vmatprep.subr.mxu0 0.0
      %1025 = vmatpush1.msra.mxu0 0.0
      %1026 = vmatprep.subr.mxu0 0.0
      %1027 = vmatpush1.msra.mxu0 %v994
      %1028 = vmatprep.subr.mxu0 0.0
      %1029 = vmatpush2.msra.mxu0 0.0
      %1030 = vmatprep.subr.mxu0 0.0
      %1031 = vmatpush2.msra.mxu0 0.0
      %1032 = vmatprep.subr.mxu0 0.0
      %1033 = vmatpush2.msra.mxu0 0.0
      %1034 = vmatprep.subr.mxu0 0.0
      %1035 = vmatpush2.msra.mxu0 0.0
      %1036 = vmatprep.subr.mxu0 0.0
      %1037 = vmatpush2.msra.mxu0 0.0
      %1038 = vmatprep.subr.mxu0 0.0
      %1039 = vmatpush2.msra.mxu0 0.0
      %1040 = vmatprep.subr.mxu0 0.0
      %1041 = vmatpush2.msra.mxu0 0.0
      %1042 = vmatprep.subr.mxu0 0.0
      %1043 = vmatpush2.msra.mxu0 0.0
      %1044 = vmatprep.subr.mxu0 0.0
      %1045 = vmatpush2.msra.mxu0 0.0
      %1046 = vmatprep.subr.mxu0 0.0
      %1047 = vmatpush2.msra.mxu0 0.0
      %1048 = vmatprep.subr.mxu0 0.0
      %1049 = vmatpush2.msra.mxu0 0.0
      %1050 = vmatprep.subr.mxu0 0.0
      %1051 = vmatpush2.msra.mxu0 0.0
      %1052 = vmatprep.subr.mxu0 0.0
      %1053 = vmatpush2.msra.mxu0 0.0
      %1054 = vmatprep.subr.mxu0 0.0
      %1055 = vmatpush2.msra.mxu0 0.0
      %1056 = vmatprep.subr.mxu0 0.0
      %1057 = vmatpush2.msra.mxu0 0.0
      %1058 = vmatprep.subr.mxu0 0.0
      %1059 = vmatpush2.msra.mxu0 0.0
      %1060 = vmatprep.mubr.f32.mxu0 0.0
      %1061 = vmatmul.mubr.f32.gmra.mxu0 %v458
      %v1062 = vpop.f32.mrf.mxu0
      %v1063 = vadd.f32 0.0, %v1062
      %v1064 = vpop.f32.mrf.mxu0
      %1065 = vmatprep.mubr.f32.mxu0 0.0
      %1066 = vmatmul.mubr.f32.gmra.mxu0 %v460
      %v1067 = vpop.f32.mrf.mxu0
      %v1068 = vadd.f32 0.0, %v1067
      %v1069 = vpop.f32.mrf.mxu0
      %1070 = vmatprep.mubr.f32.mxu0 0.0
      %1071 = vmatmul.mubr.f32.gmra.mxu0 %v462
      %v1072 = vpop.f32.mrf.mxu0
      %v1073 = vadd.f32 0.0, %v1072
      %v1074 = vpop.f32.mrf.mxu0
      %1075 = vmatprep.mubr.f32.mxu0 0.0
      %1076 = vmatmul.mubr.f32.gmra.mxu0 %v464
      %v1077 = vpop.f32.mrf.mxu0
      %v1078 = vadd.f32 0.0, %v1077
      %v1079 = vpop.f32.mrf.mxu0
      %1080 = vmatprep.mubr.f32.mxu0 0.0
      %1081 = vmatmul.mubr.f32.gmra.mxu0 %v466
      %v1082 = vpop.f32.mrf.mxu0
      %v1083 = vadd.f32 0.0, %v1082
      %v1084 = vpop.f32.mrf.mxu0
      %1085 = vmatprep.mubr.f32.mxu0 0.0
      %1086 = vmatmul.mubr.f32.gmra.mxu0 %v468
      %v1087 = vpop.f32.mrf.mxu0
      %v1088 = vadd.f32 0.0, %v1087
      %v1089 = vpop.f32.mrf.mxu0
      %1090 = vmatprep.mubr.f32.mxu0 0.0
      %1091 = vmatmul.mubr.f32.gmra.mxu0 %v470
      %v1092 = vpop.f32.mrf.mxu0
      %v1093 = vadd.f32 0.0, %v1092
      %v1094 = vpop.f32.mrf.mxu0
      %1095 = vmatprep.mubr.f32.mxu0 0.0
      %1096 = vmatmul.mubr.f32.gmra.mxu0 %v991
      %v1097 = vpop.f32.mrf.mxu0
      %v1098 = vadd.f32 0.0, %v1097
      %v1099 = vpop.f32.mrf.mxu0
      %1100 = vdwg.mxu0
      %v1101 = vadd.f32 %v977, %v1063
      %v1102 = vadd.f32 %v978, %v1068
      %v1103 = vadd.f32 %v979, %v1073
      %v1104 = vadd.f32 %v980, %v1078
      %v1105 = vadd.f32 %v981, %v1083
      %v1106 = vadd.f32 %v982, %v1088
      %v1107 = vadd.f32 %v983, %v1093
      %v1108 = vadd.f32 %v984, %v1098
      %v1109 = vrot.slane %v407, 2
      %v1110 = vrot.slane %v408, 2
      %v1111 = vsel %vm705, %v1109, %v1110
      %s1112 = scalar_lea.vmem %s3, 20
      %v1113 = vld [vmem:[%s1112] sm:$0xf]
      %v1114 = vsel %vm455, %v1111, 0
      %v1117 = vsel %vm472, %v1113, 0
      %1119 = vmatprep.subr.mxu0 0.0
      %1120 = vmatpush1.msra.mxu0 0.0
      %1121 = vmatprep.subr.mxu0 0.0
      %1122 = vmatpush1.msra.mxu0 0.0
      %1123 = vmatprep.subr.mxu0 0.0
      %1124 = vmatpush1.msra.mxu0 0.0
      %1125 = vmatprep.subr.mxu0 0.0
      %1126 = vmatpush1.msra.mxu0 0.0
      %1127 = vmatprep.subr.mxu0 0.0
      %1128 = vmatpush1.msra.mxu0 0.0
      %1129 = vmatprep.subr.mxu0 0.0
      %1130 = vmatpush1.msra.mxu0 0.0
      %1131 = vmatprep.subr.mxu0 0.0
      %1132 = vmatpush1.msra.mxu0 0.0
      %1133 = vmatprep.subr.mxu0 0.0
      %1134 = vmatpush1.msra.mxu0 0.0
      %1135 = vmatprep.subr.mxu0 0.0
      %1136 = vmatpush1.msra.mxu0 0.0
      %1137 = vmatprep.subr.mxu0 0.0
      %1138 = vmatpush1.msra.mxu0 0.0
      %1139 = vmatprep.subr.mxu0 0.0
      %1140 = vmatpush1.msra.mxu0 0.0
      %1141 = vmatprep.subr.mxu0 0.0
      %1142 = vmatpush1.msra.mxu0 0.0
      %1143 = vmatprep.subr.mxu0 0.0
      %1144 = vmatpush1.msra.mxu0 0.0
      %1145 = vmatprep.subr.mxu0 0.0
      %1146 = vmatpush1.msra.mxu0 0.0
      %1147 = vmatprep.subr.mxu0 0.0
      %1148 = vmatpush1.msra.mxu0 0.0
      %1149 = vmatprep.subr.mxu0 0.0
      %1150 = vmatpush1.msra.mxu0 %v1117
      %1151 = vmatprep.subr.mxu0 0.0
      %1152 = vmatpush2.msra.mxu0 0.0
      %1153 = vmatprep.subr.mxu0 0.0
      %1154 = vmatpush2.msra.mxu0 0.0
      %1155 = vmatprep.subr.mxu0 0.0
      %1156 = vmatpush2.msra.mxu0 0.0
      %1157 = vmatprep.subr.mxu0 0.0
      %1158 = vmatpush2.msra.mxu0 0.0
      %1159 = vmatprep.subr.mxu0 0.0
      %1160 = vmatpush2.msra.mxu0 0.0
      %1161 = vmatprep.subr.mxu0 0.0
      %1162 = vmatpush2.msra.mxu0 0.0
      %1163 = vmatprep.subr.mxu0 0.0
      %1164 = vmatpush2.msra.mxu0 0.0
      %1165 = vmatprep.subr.mxu0 0.0
      %1166 = vmatpush2.msra.mxu0 0.0
      %1167 = vmatprep.subr.mxu0 0.0
      %1168 = vmatpush2.msra.mxu0 0.0
      %1169 = vmatprep.subr.mxu0 0.0
      %1170 = vmatpush2.msra.mxu0 0.0
      %1171 = vmatprep.subr.mxu0 0.0
      %1172 = vmatpush2.msra.mxu0 0.0
      %1173 = vmatprep.subr.mxu0 0.0
      %1174 = vmatpush2.msra.mxu0 0.0
      %1175 = vmatprep.subr.mxu0 0.0
      %1176 = vmatpush2.msra.mxu0 0.0
      %1177 = vmatprep.subr.mxu0 0.0
      %1178 = vmatpush2.msra.mxu0 0.0
      %1179 = vmatprep.subr.mxu0 0.0
      %1180 = vmatpush2.msra.mxu0 0.0
      %1181 = vmatprep.subr.mxu0 0.0
      %1182 = vmatpush2.msra.mxu0 0.0
      %1183 = vmatprep.mubr.f32.mxu0 0.0
      %1184 = vmatmul.mubr.f32.gmra.mxu0 %v734
      %v1185 = vpop.f32.mrf.mxu0
      %v1186 = vadd.f32 0.0, %v1185
      %v1187 = vpop.f32.mrf.mxu0
      %1188 = vmatprep.mubr.f32.mxu0 0.0
      %1189 = vmatmul.mubr.f32.gmra.mxu0 %v736
      %v1190 = vpop.f32.mrf.mxu0
      %v1191 = vadd.f32 0.0, %v1190
      %v1192 = vpop.f32.mrf.mxu0
      %1193 = vmatprep.mubr.f32.mxu0 0.0
      %1194 = vmatmul.mubr.f32.gmra.mxu0 %v738
      %v1195 = vpop.f32.mrf.mxu0
      %v1196 = vadd.f32 0.0, %v1195
      %v1197 = vpop.f32.mrf.mxu0
      %1198 = vmatprep.mubr.f32.mxu0 0.0
      %1199 = vmatmul.mubr.f32.gmra.mxu0 %v740
      %v1200 = vpop.f32.mrf.mxu0
      %v1201 = vadd.f32 0.0, %v1200
      %v1202 = vpop.f32.mrf.mxu0
      %1203 = vmatprep.mubr.f32.mxu0 0.0
      %1204 = vmatmul.mubr.f32.gmra.mxu0 %v742
      %v1205 = vpop.f32.mrf.mxu0
      %v1206 = vadd.f32 0.0, %v1205
      %v1207 = vpop.f32.mrf.mxu0
      %1208 = vmatprep.mubr.f32.mxu0 0.0
      %1209 = vmatmul.mubr.f32.gmra.mxu0 %v744
      %v1210 = vpop.f32.mrf.mxu0
      %v1211 = vadd.f32 0.0, %v1210
      %v1212 = vpop.f32.mrf.mxu0
      %1213 = vmatprep.mubr.f32.mxu0 0.0
      %1214 = vmatmul.mubr.f32.gmra.mxu0 %v746
      %v1215 = vpop.f32.mrf.mxu0
      %v1216 = vadd.f32 0.0, %v1215
      %v1217 = vpop.f32.mrf.mxu0
      %1218 = vmatprep.mubr.f32.mxu0 0.0
      %1219 = vmatmul.mubr.f32.gmra.mxu0 %v1114
      %v1220 = vpop.f32.mrf.mxu0
      %v1221 = vadd.f32 0.0, %v1220
      %v1222 = vpop.f32.mrf.mxu0
      %1223 = vdwg.mxu0
      %v1224 = vadd.f32 %v1101, %v1186
      %v1225 = vadd.f32 %v1102, %v1191
      %v1226 = vadd.f32 %v1103, %v1196
      %v1227 = vadd.f32 %v1104, %v1201
      %v1228 = vadd.f32 %v1105, %v1206
      %v1229 = vadd.f32 %v1106, %v1211
      %v1230 = vadd.f32 %v1107, %v1216
      %v1231 = vadd.f32 %v1108, %v1221
      %s1232 = scalar_lea.vmem %s3, 24
      %v1233 = vld [vmem:[%s1232] sm:$0xf]
      %v1235 = vsel %vm455, %v409, 0
      %v1238 = vsel %vm472, %v1233, 0
      %1240 = vmatprep.subr.mxu0 0.0
      %1241 = vmatpush1.msra.mxu0 0.0
      %1242 = vmatprep.subr.mxu0 0.0
      %1243 = vmatpush1.msra.mxu0 0.0
      %1244 = vmatprep.subr.mxu0 0.0
      %1245 = vmatpush1.msra.mxu0 0.0
      %1246 = vmatprep.subr.mxu0 0.0
      %1247 = vmatpush1.msra.mxu0 0.0
      %1248 = vmatprep.subr.mxu0 0.0
      %1249 = vmatpush1.msra.mxu0 0.0
      %1250 = vmatprep.subr.mxu0 0.0
      %1251 = vmatpush1.msra.mxu0 0.0
      %1252 = vmatprep.subr.mxu0 0.0
      %1253 = vmatpush1.msra.mxu0 0.0
      %1254 = vmatprep.subr.mxu0 0.0
      %1255 = vmatpush1.msra.mxu0 0.0
      %1256 = vmatprep.subr.mxu0 0.0
      %1257 = vmatpush1.msra.mxu0 0.0
      %1258 = vmatprep.subr.mxu0 0.0
      %1259 = vmatpush1.msra.mxu0 0.0
      %1260 = vmatprep.subr.mxu0 0.0
      %1261 = vmatpush1.msra.mxu0 0.0
      %1262 = vmatprep.subr.mxu0 0.0
      %1263 = vmatpush1.msra.mxu0 0.0
      %1264 = vmatprep.subr.mxu0 0.0
      %1265 = vmatpush1.msra.mxu0 0.0
      %1266 = vmatprep.subr.mxu0 0.0
      %1267 = vmatpush1.msra.mxu0 0.0
      %1268 = vmatprep.subr.mxu0 0.0
      %1269 = vmatpush1.msra.mxu0 0.0
      %1270 = vmatprep.subr.mxu0 0.0
      %1271 = vmatpush1.msra.mxu0 %v1238
      %1272 = vmatprep.subr.mxu0 0.0
      %1273 = vmatpush2.msra.mxu0 0.0
      %1274 = vmatprep.subr.mxu0 0.0
      %1275 = vmatpush2.msra.mxu0 0.0
      %1276 = vmatprep.subr.mxu0 0.0
      %1277 = vmatpush2.msra.mxu0 0.0
      %1278 = vmatprep.subr.mxu0 0.0
      %1279 = vmatpush2.msra.mxu0 0.0
      %1280 = vmatprep.subr.mxu0 0.0
      %1281 = vmatpush2.msra.mxu0 0.0
      %1282 = vmatprep.subr.mxu0 0.0
      %1283 = vmatpush2.msra.mxu0 0.0
      %1284 = vmatprep.subr.mxu0 0.0
      %1285 = vmatpush2.msra.mxu0 0.0
      %1286 = vmatprep.subr.mxu0 0.0
      %1287 = vmatpush2.msra.mxu0 0.0
      %1288 = vmatprep.subr.mxu0 0.0
      %1289 = vmatpush2.msra.mxu0 0.0
      %1290 = vmatprep.subr.mxu0 0.0
      %1291 = vmatpush2.msra.mxu0 0.0
      %1292 = vmatprep.subr.mxu0 0.0
      %1293 = vmatpush2.msra.mxu0 0.0
      %1294 = vmatprep.subr.mxu0 0.0
      %1295 = vmatpush2.msra.mxu0 0.0
      %1296 = vmatprep.subr.mxu0 0.0
      %1297 = vmatpush2.msra.mxu0 0.0
      %1298 = vmatprep.subr.mxu0 0.0
      %1299 = vmatpush2.msra.mxu0 0.0
      %1300 = vmatprep.subr.mxu0 0.0
      %1301 = vmatpush2.msra.mxu0 0.0
      %1302 = vmatprep.subr.mxu0 0.0
      %1303 = vmatpush2.msra.mxu0 0.0
      %1304 = vmatprep.mubr.f32.mxu0 0.0
      %1305 = vmatmul.mubr.f32.gmra.mxu0 %v585
      %v1306 = vpop.f32.mrf.mxu0
      %v1307 = vadd.f32 0.0, %v1306
      %v1308 = vpop.f32.mrf.mxu0
      %1309 = vmatprep.mubr.f32.mxu0 0.0
      %1310 = vmatmul.mubr.f32.gmra.mxu0 %v587
      %v1311 = vpop.f32.mrf.mxu0
      %v1312 = vadd.f32 0.0, %v1311
      %v1313 = vpop.f32.mrf.mxu0
      %1314 = vmatprep.mubr.f32.mxu0 0.0
      %1315 = vmatmul.mubr.f32.gmra.mxu0 %v589
      %v1316 = vpop.f32.mrf.mxu0
      %v1317 = vadd.f32 0.0, %v1316
      %v1318 = vpop.f32.mrf.mxu0
      %1319 = vmatprep.mubr.f32.mxu0 0.0
      %1320 = vmatmul.mubr.f32.gmra.mxu0 %v591
      %v1321 = vpop.f32.mrf.mxu0
      %v1322 = vadd.f32 0.0, %v1321
      %v1323 = vpop.f32.mrf.mxu0
      %1324 = vmatprep.mubr.f32.mxu0 0.0
      %1325 = vmatmul.mubr.f32.gmra.mxu0 %v593
      %v1326 = vpop.f32.mrf.mxu0
      %v1327 = vadd.f32 0.0, %v1326
      %v1328 = vpop.f32.mrf.mxu0
      %1329 = vmatprep.mubr.f32.mxu0 0.0
      %1330 = vmatmul.mubr.f32.gmra.mxu0 %v595
      %v1331 = vpop.f32.mrf.mxu0
      %v1332 = vadd.f32 0.0, %v1331
      %v1333 = vpop.f32.mrf.mxu0
      %1334 = vmatprep.mubr.f32.mxu0 0.0
      %1335 = vmatmul.mubr.f32.gmra.mxu0 %v867
      %v1336 = vpop.f32.mrf.mxu0
      %v1337 = vadd.f32 0.0, %v1336
      %v1338 = vpop.f32.mrf.mxu0
      %1339 = vmatprep.mubr.f32.mxu0 0.0
      %1340 = vmatmul.mubr.f32.gmra.mxu0 %v1235
      %v1341 = vpop.f32.mrf.mxu0
      %v1342 = vadd.f32 0.0, %v1341
      %v1343 = vpop.f32.mrf.mxu0
      %1344 = vdwg.mxu0
      %v1345 = vadd.f32 %v1224, %v1307
      %v1346 = vadd.f32 %v1225, %v1312
      %v1347 = vadd.f32 %v1226, %v1317
      %v1348 = vadd.f32 %v1227, %v1322
      %v1349 = vadd.f32 %v1228, %v1327
      %v1350 = vadd.f32 %v1229, %v1332
      %v1351 = vadd.f32 %v1230, %v1337
      %v1352 = vadd.f32 %v1231, %v1342
      %v1354 = vrot.slane %v409, 1
      %v1355 = vrot.slane %v410, 1
      %v1356 = vsel %vm428, %v1354, %v1355
      %s1357 = scalar_lea.vmem %s3, 28
      %v1358 = vld [vmem:[%s1357] sm:$0xf]
      %v1359 = vsel %vm455, %v1356, 0
      %v1362 = vsel %vm472, %v1358, 0
      %1364 = vmatprep.subr.mxu0 0.0
      %1365 = vmatpush1.msra.mxu0 0.0
      %1366 = vmatprep.subr.mxu0 0.0
      %1367 = vmatpush1.msra.mxu0 0.0
      %1368 = vmatprep.subr.mxu0 0.0
      %1369 = vmatpush1.msra.mxu0 0.0
      %1370 = vmatprep.subr.mxu0 0.0
      %1371 = vmatpush1.msra.mxu0 0.0
      %1372 = vmatprep.subr.mxu0 0.0
      %1373 = vmatpush1.msra.mxu0 0.0
      %1374 = vmatprep.subr.mxu0 0.0
      %1375 = vmatpush1.msra.mxu0 0.0
      %1376 = vmatprep.subr.mxu0 0.0
      %1377 = vmatpush1.msra.mxu0 0.0
      %1378 = vmatprep.subr.mxu0 0.0
      %1379 = vmatpush1.msra.mxu0 0.0
      %1380 = vmatprep.subr.mxu0 0.0
      %1381 = vmatpush1.msra.mxu0 0.0
      %1382 = vmatprep.subr.mxu0 0.0
      %1383 = vmatpush1.msra.mxu0 0.0
      %1384 = vmatprep.subr.mxu0 0.0
      %1385 = vmatpush1.msra.mxu0 0.0
      %1386 = vmatprep.subr.mxu0 0.0
      %1387 = vmatpush1.msra.mxu0 0.0
      %1388 = vmatprep.subr.mxu0 0.0
      %1389 = vmatpush1.msra.mxu0 0.0
      %1390 = vmatprep.subr.mxu0 0.0
      %1391 = vmatpush1.msra.mxu0 0.0
      %1392 = vmatprep.subr.mxu0 0.0
      %1393 = vmatpush1.msra.mxu0 0.0
      %1394 = vmatprep.subr.mxu0 0.0
      %1395 = vmatpush1.msra.mxu0 %v1362
      %1396 = vmatprep.subr.mxu0 0.0
      %1397 = vmatpush2.msra.mxu0 0.0
      %1398 = vmatprep.subr.mxu0 0.0
      %1399 = vmatpush2.msra.mxu0 0.0
      %1400 = vmatprep.subr.mxu0 0.0
      %1401 = vmatpush2.msra.mxu0 0.0
      %1402 = vmatprep.subr.mxu0 0.0
      %1403 = vmatpush2.msra.mxu0 0.0
      %1404 = vmatprep.subr.mxu0 0.0
      %1405 = vmatpush2.msra.mxu0 0.0
      %1406 = vmatprep.subr.mxu0 0.0
      %1407 = vmatpush2.msra.mxu0 0.0
      %1408 = vmatprep.subr.mxu0 0.0
      %1409 = vmatpush2.msra.mxu0 0.0
      %1410 = vmatprep.subr.mxu0 0.0
      %1411 = vmatpush2.msra.mxu0 0.0
      %1412 = vmatprep.subr.mxu0 0.0
      %1413 = vmatpush2.msra.mxu0 0.0
      %1414 = vmatprep.subr.mxu0 0.0
      %1415 = vmatpush2.msra.mxu0 0.0
      %1416 = vmatprep.subr.mxu0 0.0
      %1417 = vmatpush2.msra.mxu0 0.0
      %1418 = vmatprep.subr.mxu0 0.0
      %1419 = vmatpush2.msra.mxu0 0.0
      %1420 = vmatprep.subr.mxu0 0.0
      %1421 = vmatpush2.msra.mxu0 0.0
      %1422 = vmatprep.subr.mxu0 0.0
      %1423 = vmatpush2.msra.mxu0 0.0
      %1424 = vmatprep.subr.mxu0 0.0
      %1425 = vmatpush2.msra.mxu0 0.0
      %1426 = vmatprep.subr.mxu0 0.0
      %1427 = vmatpush2.msra.mxu0 0.0
      %1428 = vmatprep.mubr.f32.mxu0 0.0
      %1429 = vmatmul.mubr.f32.gmra.mxu0 %v460
      %v1430 = vpop.f32.mrf.mxu0
      %v1431 = vadd.f32 0.0, %v1430
      %v1432 = vpop.f32.mrf.mxu0
      %1433 = vmatprep.mubr.f32.mxu0 0.0
      %1434 = vmatmul.mubr.f32.gmra.mxu0 %v462
      %v1435 = vpop.f32.mrf.mxu0
      %v1436 = vadd.f32 0.0, %v1435
      %v1437 = vpop.f32.mrf.mxu0
      %1438 = vmatprep.mubr.f32.mxu0 0.0
      %1439 = vmatmul.mubr.f32.gmra.mxu0 %v464
      %v1440 = vpop.f32.mrf.mxu0
      %v1441 = vadd.f32 0.0, %v1440
      %v1442 = vpop.f32.mrf.mxu0
      %1443 = vmatprep.mubr.f32.mxu0 0.0
      %1444 = vmatmul.mubr.f32.gmra.mxu0 %v466
      %v1445 = vpop.f32.mrf.mxu0
      %v1446 = vadd.f32 0.0, %v1445
      %v1447 = vpop.f32.mrf.mxu0
      %1448 = vmatprep.mubr.f32.mxu0 0.0
      %1449 = vmatmul.mubr.f32.gmra.mxu0 %v468
      %v1450 = vpop.f32.mrf.mxu0
      %v1451 = vadd.f32 0.0, %v1450
      %v1452 = vpop.f32.mrf.mxu0
      %1453 = vmatprep.mubr.f32.mxu0 0.0
      %1454 = vmatmul.mubr.f32.gmra.mxu0 %v470
      %v1455 = vpop.f32.mrf.mxu0
      %v1456 = vadd.f32 0.0, %v1455
      %v1457 = vpop.f32.mrf.mxu0
      %1458 = vmatprep.mubr.f32.mxu0 0.0
      %1459 = vmatmul.mubr.f32.gmra.mxu0 %v991
      %v1460 = vpop.f32.mrf.mxu0
      %v1461 = vadd.f32 0.0, %v1460
      %v1462 = vpop.f32.mrf.mxu0
      %1463 = vmatprep.mubr.f32.mxu0 0.0
      %1464 = vmatmul.mubr.f32.gmra.mxu0 %v1359
      %v1465 = vpop.f32.mrf.mxu0
      %v1466 = vadd.f32 0.0, %v1465
      %v1467 = vpop.f32.mrf.mxu0
      %1468 = vdwg.mxu0
      %v1469 = vadd.f32 %v1345, %v1431
      %v1470 = vadd.f32 %v1346, %v1436
      %v1471 = vadd.f32 %v1347, %v1441
      %v1472 = vadd.f32 %v1348, %v1446
      %v1473 = vadd.f32 %v1349, %v1451
      %v1474 = vadd.f32 %v1350, %v1456
      %v1475 = vadd.f32 %v1351, %v1461
      %v1476 = vadd.f32 %v1352, %v1466
      %v1477 = vrot.slane %v409, 2
      %v1478 = vrot.slane %v410, 2
      %v1479 = vsel %vm705, %v1477, %v1478
      %s1480 = scalar_lea.vmem %s3, 32
      %v1481 = vld [vmem:[%s1480] sm:$0xf]
      %v1482 = vsel %vm455, %v1479, 0
      %v1485 = vsel %vm472, %v1481, 0
      %1487 = vmatprep.subr.mxu0 0.0
      %1488 = vmatpush1.msra.mxu0 0.0
      %1489 = vmatprep.subr.mxu0 0.0
      %1490 = vmatpush1.msra.mxu0 0.0
      %1491 = vmatprep.subr.mxu0 0.0
      %1492 = vmatpush1.msra.mxu0 0.0
      %1493 = vmatprep.subr.mxu0 0.0
      %1494 = vmatpush1.msra.mxu0 0.0
      %1495 = vmatprep.subr.mxu0 0.0
      %1496 = vmatpush1.msra.mxu0 0.0
      %1497 = vmatprep.subr.mxu0 0.0
      %1498 = vmatpush1.msra.mxu0 0.0
      %1499 = vmatprep.subr.mxu0 0.0
      %1500 = vmatpush1.msra.mxu0 0.0
      %1501 = vmatprep.subr.mxu0 0.0
      %1502 = vmatpush1.msra.mxu0 0.0
      %1503 = vmatprep.subr.mxu0 0.0
      %1504 = vmatpush1.msra.mxu0 0.0
      %1505 = vmatprep.subr.mxu0 0.0
      %1506 = vmatpush1.msra.mxu0 0.0
      %1507 = vmatprep.subr.mxu0 0.0
      %1508 = vmatpush1.msra.mxu0 0.0
      %1509 = vmatprep.subr.mxu0 0.0
      %1510 = vmatpush1.msra.mxu0 0.0
      %1511 = vmatprep.subr.mxu0 0.0
      %1512 = vmatpush1.msra.mxu0 0.0
      %1513 = vmatprep.subr.mxu0 0.0
      %1514 = vmatpush1.msra.mxu0 0.0
      %1515 = vmatprep.subr.mxu0 0.0
      %1516 = vmatpush1.msra.mxu0 0.0
      %1517 = vmatprep.subr.mxu0 0.0
      %1518 = vmatpush1.msra.mxu0 %v1485
      %1519 = vmatprep.subr.mxu0 0.0
      %1520 = vmatpush2.msra.mxu0 0.0
      %1521 = vmatprep.subr.mxu0 0.0
      %1522 = vmatpush2.msra.mxu0 0.0
      %1523 = vmatprep.subr.mxu0 0.0
      %1524 = vmatpush2.msra.mxu0 0.0
      %1525 = vmatprep.subr.mxu0 0.0
      %1526 = vmatpush2.msra.mxu0 0.0
      %1527 = vmatprep.subr.mxu0 0.0
      %1528 = vmatpush2.msra.mxu0 0.0
      %1529 = vmatprep.subr.mxu0 0.0
      %1530 = vmatpush2.msra.mxu0 0.0
      %1531 = vmatprep.subr.mxu0 0.0
      %1532 = vmatpush2.msra.mxu0 0.0
      %1533 = vmatprep.subr.mxu0 0.0
      %1534 = vmatpush2.msra.mxu0 0.0
      %1535 = vmatprep.subr.mxu0 0.0
      %1536 = vmatpush2.msra.mxu0 0.0
      %1537 = vmatprep.subr.mxu0 0.0
      %1538 = vmatpush2.msra.mxu0 0.0
      %1539 = vmatprep.subr.mxu0 0.0
      %1540 = vmatpush2.msra.mxu0 0.0
      %1541 = vmatprep.subr.mxu0 0.0
      %1542 = vmatpush2.msra.mxu0 0.0
      %1543 = vmatprep.subr.mxu0 0.0
      %1544 = vmatpush2.msra.mxu0 0.0
      %1545 = vmatprep.subr.mxu0 0.0
      %1546 = vmatpush2.msra.mxu0 0.0
      %1547 = vmatprep.subr.mxu0 0.0
      %1548 = vmatpush2.msra.mxu0 0.0
      %1549 = vmatprep.subr.mxu0 0.0
      %1550 = vmatpush2.msra.mxu0 0.0
      %1551 = vmatprep.mubr.f32.mxu0 0.0
      %1552 = vmatmul.mubr.f32.gmra.mxu0 %v736
      %v1553 = vpop.f32.mrf.mxu0
      %v1554 = vadd.f32 0.0, %v1553
      %v1555 = vpop.f32.mrf.mxu0
      %1556 = vmatprep.mubr.f32.mxu0 0.0
      %1557 = vmatmul.mubr.f32.gmra.mxu0 %v738
      %v1558 = vpop.f32.mrf.mxu0
      %v1559 = vadd.f32 0.0, %v1558
      %v1560 = vpop.f32.mrf.mxu0
      %1561 = vmatprep.mubr.f32.mxu0 0.0
      %1562 = vmatmul.mubr.f32.gmra.mxu0 %v740
      %v1563 = vpop.f32.mrf.mxu0
      %v1564 = vadd.f32 0.0, %v1563
      %v1565 = vpop.f32.mrf.mxu0
      %1566 = vmatprep.mubr.f32.mxu0 0.0
      %1567 = vmatmul.mubr.f32.gmra.mxu0 %v742
      %v1568 = vpop.f32.mrf.mxu0
      %v1569 = vadd.f32 0.0, %v1568
      %v1570 = vpop.f32.mrf.mxu0
      %1571 = vmatprep.mubr.f32.mxu0 0.0
      %1572 = vmatmul.mubr.f32.gmra.mxu0 %v744
      %v1573 = vpop.f32.mrf.mxu0
      %v1574 = vadd.f32 0.0, %v1573
      %v1575 = vpop.f32.mrf.mxu0
      %1576 = vmatprep.mubr.f32.mxu0 0.0
      %1577 = vmatmul.mubr.f32.gmra.mxu0 %v746
      %v1578 = vpop.f32.mrf.mxu0
      %v1579 = vadd.f32 0.0, %v1578
      %v1580 = vpop.f32.mrf.mxu0
      %1581 = vmatprep.mubr.f32.mxu0 0.0
      %1582 = vmatmul.mubr.f32.gmra.mxu0 %v1114
      %v1583 = vpop.f32.mrf.mxu0
      %v1584 = vadd.f32 0.0, %v1583
      %v1585 = vpop.f32.mrf.mxu0
      %1586 = vmatprep.mubr.f32.mxu0 0.0
      %1587 = vmatmul.mubr.f32.gmra.mxu0 %v1482
      %v1588 = vpop.f32.mrf.mxu0
      %v1589 = vadd.f32 0.0, %v1588
      %v1590 = vpop.f32.mrf.mxu0
      %1591 = vdwg.mxu0
      %v1592 = vadd.f32 %v1469, %v1554
      %v1593 = vadd.f32 %v1470, %v1559
      %v1594 = vadd.f32 %v1471, %v1564
      %v1595 = vadd.f32 %v1472, %v1569
      %v1596 = vadd.f32 %v1473, %v1574
      %v1597 = vadd.f32 %v1474, %v1579
      %v1598 = vadd.f32 %v1475, %v1584
      %v1599 = vadd.f32 %v1476, %v1589
      %v1600 = vld [vmem:[%s361] sm:$0xff]
      %v1601 = vld [vmem:[%s361 + $0x8] sm:$0x3]
      %v1602 = vld [vmem:[%s361 + $0x10] sm:$0xff]
      %v1603 = vld [vmem:[%s361 + $0x18] sm:$0x3]
      %v1604 = vld [vmem:[%s361 + $0x20] sm:$0xff]
      %v1605 = vld [vmem:[%s361 + $0x28] sm:$0x3]
      %v1606 = vld [vmem:[%s361 + $0x30] sm:$0xff]
      %v1607 = vld [vmem:[%s361 + $0x38] sm:$0x3]
      %v1608 = vld [vmem:[%s361 + $0x40] sm:$0xff]
      %v1609 = vld [vmem:[%s361 + $0x48] sm:$0x3]
      %v1610 = vld [vmem:[%s361 + $0x50] sm:$0xff]
      %v1611 = vld [vmem:[%s361 + $0x58] sm:$0x3]
      %v1612 = vld [vmem:[%s361 + $0x60] sm:$0xff]
      %v1613 = vld [vmem:[%s361 + $0x68] sm:$0x3]
      %v1614 = vld [vmem:[%s361 + $0x70] sm:$0xff]
      %v1615 = vld [vmem:[%s361 + $0x78] sm:$0x3]
      %v1616 = vld [vmem:[%s361 + $0x80] sm:$0xff]
      %v1617 = vld [vmem:[%s361 + $0x88] sm:$0x3]
      %v1618 = vld [vmem:[%s361 + $0x90] sm:$0xff]
      %v1619 = vld [vmem:[%s361 + $0x98] sm:$0x3]
      %s1620 = scalar_lea.vmem %s3, 36
      %v1621 = vld [vmem:[%s1620] sm:$0xf]
      %v1623 = vsel %vm455, %v1600, 0
      %v1626 = vsel %vm455, %v1602, 0
      %v1629 = vsel %vm455, %v1604, 0
      %v1632 = vsel %vm455, %v1606, 0
      %v1635 = vsel %vm455, %v1608, 0
      %v1638 = vsel %vm455, %v1610, 0
      %v1641 = vsel %vm455, %v1612, 0
      %v1644 = vsel %vm455, %v1614, 0
      %v1647 = vsel %vm472, %v1621, 0
      %1649 = vmatprep.subr.mxu0 0.0
      %1650 = vmatpush1.msra.mxu0 0.0
      %1651 = vmatprep.subr.mxu0 0.0
      %1652 = vmatpush1.msra.mxu0 0.0
      %1653 = vmatprep.subr.mxu0 0.0
      %1654 = vmatpush1.msra.mxu0 0.0
      %1655 = vmatprep.subr.mxu0 0.0
      %1656 = vmatpush1.msra.mxu0 0.0
      %1657 = vmatprep.subr.mxu0 0.0
      %1658 = vmatpush1.msra.mxu0 0.0
      %1659 = vmatprep.subr.mxu0 0.0
      %1660 = vmatpush1.msra.mxu0 0.0
      %1661 = vmatprep.subr.mxu0 0.0
      %1662 = vmatpush1.msra.mxu0 0.0
      %1663 = vmatprep.subr.mxu0 0.0
      %1664 = vmatpush1.msra.mxu0 0.0
      %1665 = vmatprep.subr.mxu0 0.0
      %1666 = vmatpush1.msra.mxu0 0.0
      %1667 = vmatprep.subr.mxu0 0.0
      %1668 = vmatpush1.msra.mxu0 0.0
      %1669 = vmatprep.subr.mxu0 0.0
      %1670 = vmatpush1.msra.mxu0 0.0
      %1671 = vmatprep.subr.mxu0 0.0
      %1672 = vmatpush1.msra.mxu0 0.0
      %1673 = vmatprep.subr.mxu0 0.0
      %1674 = vmatpush1.msra.mxu0 0.0
      %1675 = vmatprep.subr.mxu0 0.0
      %1676 = vmatpush1.msra.mxu0 0.0
      %1677 = vmatprep.subr.mxu0 0.0
      %1678 = vmatpush1.msra.mxu0 0.0
      %1679 = vmatprep.subr.mxu0 0.0
      %1680 = vmatpush1.msra.mxu0 %v1647
      %1681 = vmatprep.subr.mxu0 0.0
      %1682 = vmatpush2.msra.mxu0 0.0
      %1683 = vmatprep.subr.mxu0 0.0
      %1684 = vmatpush2.msra.mxu0 0.0
      %1685 = vmatprep.subr.mxu0 0.0
      %1686 = vmatpush2.msra.mxu0 0.0
      %1687 = vmatprep.subr.mxu0 0.0
      %1688 = vmatpush2.msra.mxu0 0.0
      %1689 = vmatprep.subr.mxu0 0.0
      %1690 = vmatpush2.msra.mxu0 0.0
      %1691 = vmatprep.subr.mxu0 0.0
      %1692 = vmatpush2.msra.mxu0 0.0
      %1693 = vmatprep.subr.mxu0 0.0
      %1694 = vmatpush2.msra.mxu0 0.0
      %1695 = vmatprep.subr.mxu0 0.0
      %1696 = vmatpush2.msra.mxu0 0.0
      %1697 = vmatprep.subr.mxu0 0.0
      %1698 = vmatpush2.msra.mxu0 0.0
      %1699 = vmatprep.subr.mxu0 0.0
      %1700 = vmatpush2.msra.mxu0 0.0
      %1701 = vmatprep.subr.mxu0 0.0
      %1702 = vmatpush2.msra.mxu0 0.0
      %1703 = vmatprep.subr.mxu0 0.0
      %1704 = vmatpush2.msra.mxu0 0.0
      %1705 = vmatprep.subr.mxu0 0.0
      %1706 = vmatpush2.msra.mxu0 0.0
      %1707 = vmatprep.subr.mxu0 0.0
      %1708 = vmatpush2.msra.mxu0 0.0
      %1709 = vmatprep.subr.mxu0 0.0
      %1710 = vmatpush2.msra.mxu0 0.0
      %1711 = vmatprep.subr.mxu0 0.0
      %1712 = vmatpush2.msra.mxu0 0.0
      %1713 = vmatprep.mubr.f32.mxu0 0.0
      %1714 = vmatmul.mubr.f32.gmra.mxu0 %v1623
      %v1715 = vpop.f32.mrf.mxu0
      %v1716 = vadd.f32 0.0, %v1715
      %v1717 = vpop.f32.mrf.mxu0
      %1718 = vmatprep.mubr.f32.mxu0 0.0
      %1719 = vmatmul.mubr.f32.gmra.mxu0 %v1626
      %v1720 = vpop.f32.mrf.mxu0
      %v1721 = vadd.f32 0.0, %v1720
      %v1722 = vpop.f32.mrf.mxu0
      %1723 = vmatprep.mubr.f32.mxu0 0.0
      %1724 = vmatmul.mubr.f32.gmra.mxu0 %v1629
      %v1725 = vpop.f32.mrf.mxu0
      %v1726 = vadd.f32 0.0, %v1725
      %v1727 = vpop.f32.mrf.mxu0
      %1728 = vmatprep.mubr.f32.mxu0 0.0
      %1729 = vmatmul.mubr.f32.gmra.mxu0 %v1632
      %v1730 = vpop.f32.mrf.mxu0
      %v1731 = vadd.f32 0.0, %v1730
      %v1732 = vpop.f32.mrf.mxu0
      %1733 = vmatprep.mubr.f32.mxu0 0.0
      %1734 = vmatmul.mubr.f32.gmra.mxu0 %v1635
      %v1735 = vpop.f32.mrf.mxu0
      %v1736 = vadd.f32 0.0, %v1735
      %v1737 = vpop.f32.mrf.mxu0
      %1738 = vmatprep.mubr.f32.mxu0 0.0
      %1739 = vmatmul.mubr.f32.gmra.mxu0 %v1638
      %v1740 = vpop.f32.mrf.mxu0
      %v1741 = vadd.f32 0.0, %v1740
      %v1742 = vpop.f32.mrf.mxu0
      %1743 = vmatprep.mubr.f32.mxu0 0.0
      %1744 = vmatmul.mubr.f32.gmra.mxu0 %v1641
      %v1745 = vpop.f32.mrf.mxu0
      %v1746 = vadd.f32 0.0, %v1745
      %v1747 = vpop.f32.mrf.mxu0
      %1748 = vmatprep.mubr.f32.mxu0 0.0
      %1749 = vmatmul.mubr.f32.gmra.mxu0 %v1644
      %v1750 = vpop.f32.mrf.mxu0
      %v1751 = vadd.f32 0.0, %v1750
      %v1752 = vpop.f32.mrf.mxu0
      %1753 = vdwg.mxu0
      %v1754 = vadd.f32 %v1592, %v1716
      %v1755 = vadd.f32 %v1593, %v1721
      %v1756 = vadd.f32 %v1594, %v1726
      %v1757 = vadd.f32 %v1595, %v1731
      %v1758 = vadd.f32 %v1596, %v1736
      %v1759 = vadd.f32 %v1597, %v1741
      %v1760 = vadd.f32 %v1598, %v1746
      %v1761 = vadd.f32 %v1599, %v1751
      %v1770 = vrot.slane %v1600, 1
      %v1771 = vrot.slane %v1601, 1
      %v1772 = vsel %vm428, %v1770, %v1771
      %v1773 = vrot.slane %v1602, 1
      %v1774 = vrot.slane %v1603, 1
      %v1775 = vsel %vm428, %v1773, %v1774
      %v1776 = vrot.slane %v1604, 1
      %v1777 = vrot.slane %v1605, 1
      %v1778 = vsel %vm428, %v1776, %v1777
      %v1779 = vrot.slane %v1606, 1
      %v1780 = vrot.slane %v1607, 1
      %v1781 = vsel %vm428, %v1779, %v1780
      %v1782 = vrot.slane %v1608, 1
      %v1783 = vrot.slane %v1609, 1
      %v1784 = vsel %vm428, %v1782, %v1783
      %v1785 = vrot.slane %v1610, 1
      %v1786 = vrot.slane %v1611, 1
      %v1787 = vsel %vm428, %v1785, %v1786
      %v1788 = vrot.slane %v1612, 1
      %v1789 = vrot.slane %v1613, 1
      %v1790 = vsel %vm428, %v1788, %v1789
      %v1791 = vrot.slane %v1614, 1
      %v1792 = vrot.slane %v1615, 1
      %v1793 = vsel %vm428, %v1791, %v1792
      %s1794 = scalar_lea.vmem %s3, 40
      %v1795 = vld [vmem:[%s1794] sm:$0xf]
      %v1796 = vsel %vm455, %v1772, 0
      %v1798 = vsel %vm455, %v1775, 0
      %v1800 = vsel %vm455, %v1778, 0
      %v1802 = vsel %vm455, %v1781, 0
      %v1804 = vsel %vm455, %v1784, 0
      %v1806 = vsel %vm455, %v1787, 0
      %v1808 = vsel %vm455, %v1790, 0
      %v1810 = vsel %vm455, %v1793, 0
      %v1813 = vsel %vm472, %v1795, 0
      %1815 = vmatprep.subr.mxu0 0.0
      %1816 = vmatpush1.msra.mxu0 0.0
      %1817 = vmatprep.subr.mxu0 0.0
      %1818 = vmatpush1.msra.mxu0 0.0
      %1819 = vmatprep.subr.mxu0 0.0
      %1820 = vmatpush1.msra.mxu0 0.0
      %1821 = vmatprep.subr.mxu0 0.0
      %1822 = vmatpush1.msra.mxu0 0.0
      %1823 = vmatprep.subr.mxu0 0.0
      %1824 = vmatpush1.msra.mxu0 0.0
      %1825 = vmatprep.subr.mxu0 0.0
      %1826 = vmatpush1.msra.mxu0 0.0
      %1827 = vmatprep.subr.mxu0 0.0
      %1828 = vmatpush1.msra.mxu0 0.0
      %1829 = vmatprep.subr.mxu0 0.0
      %1830 = vmatpush1.msra.mxu0 0.0
      %1831 = vmatprep.subr.mxu0 0.0
      %1832 = vmatpush1.msra.mxu0 0.0
      %1833 = vmatprep.subr.mxu0 0.0
      %1834 = vmatpush1.msra.mxu0 0.0
      %1835 = vmatprep.subr.mxu0 0.0
      %1836 = vmatpush1.msra.mxu0 0.0
      %1837 = vmatprep.subr.mxu0 0.0
      %1838 = vmatpush1.msra.mxu0 0.0
      %1839 = vmatprep.subr.mxu0 0.0
      %1840 = vmatpush1.msra.mxu0 0.0
      %1841 = vmatprep.subr.mxu0 0.0
      %1842 = vmatpush1.msra.mxu0 0.0
      %1843 = vmatprep.subr.mxu0 0.0
      %1844 = vmatpush1.msra.mxu0 0.0
      %1845 = vmatprep.subr.mxu0 0.0
      %1846 = vmatpush1.msra.mxu0 %v1813
      %1847 = vmatprep.subr.mxu0 0.0
      %1848 = vmatpush2.msra.mxu0 0.0
      %1849 = vmatprep.subr.mxu0 0.0
      %1850 = vmatpush2.msra.mxu0 0.0
      %1851 = vmatprep.subr.mxu0 0.0
      %1852 = vmatpush2.msra.mxu0 0.0
      %1853 = vmatprep.subr.mxu0 0.0
      %1854 = vmatpush2.msra.mxu0 0.0
      %1855 = vmatprep.subr.mxu0 0.0
      %1856 = vmatpush2.msra.mxu0 0.0
      %1857 = vmatprep.subr.mxu0 0.0
      %1858 = vmatpush2.msra.mxu0 0.0
      %1859 = vmatprep.subr.mxu0 0.0
      %1860 = vmatpush2.msra.mxu0 0.0
      %1861 = vmatprep.subr.mxu0 0.0
      %1862 = vmatpush2.msra.mxu0 0.0
      %1863 = vmatprep.subr.mxu0 0.0
      %1864 = vmatpush2.msra.mxu0 0.0
      %1865 = vmatprep.subr.mxu0 0.0
      %1866 = vmatpush2.msra.mxu0 0.0
      %1867 = vmatprep.subr.mxu0 0.0
      %1868 = vmatpush2.msra.mxu0 0.0
      %1869 = vmatprep.subr.mxu0 0.0
      %1870 = vmatpush2.msra.mxu0 0.0
      %1871 = vmatprep.subr.mxu0 0.0
      %1872 = vmatpush2.msra.mxu0 0.0
      %1873 = vmatprep.subr.mxu0 0.0
      %1874 = vmatpush2.msra.mxu0 0.0
      %1875 = vmatprep.subr.mxu0 0.0
      %1876 = vmatpush2.msra.mxu0 0.0
      %1877 = vmatprep.subr.mxu0 0.0
      %1878 = vmatpush2.msra.mxu0 0.0
      %1879 = vmatprep.mubr.f32.mxu0 0.0
      %1880 = vmatmul.mubr.f32.gmra.mxu0 %v1796
      %v1881 = vpop.f32.mrf.mxu0
      %v1882 = vadd.f32 0.0, %v1881
      %v1883 = vpop.f32.mrf.mxu0
      %1884 = vmatprep.mubr.f32.mxu0 0.0
      %1885 = vmatmul.mubr.f32.gmra.mxu0 %v1798
      %v1886 = vpop.f32.mrf.mxu0
      %v1887 = vadd.f32 0.0, %v1886
      %v1888 = vpop.f32.mrf.mxu0
      %1889 = vmatprep.mubr.f32.mxu0 0.0
      %1890 = vmatmul.mubr.f32.gmra.mxu0 %v1800
      %v1891 = vpop.f32.mrf.mxu0
      %v1892 = vadd.f32 0.0, %v1891
      %v1893 = vpop.f32.mrf.mxu0
      %1894 = vmatprep.mubr.f32.mxu0 0.0
      %1895 = vmatmul.mubr.f32.gmra.mxu0 %v1802
      %v1896 = vpop.f32.mrf.mxu0
      %v1897 = vadd.f32 0.0, %v1896
      %v1898 = vpop.f32.mrf.mxu0
      %1899 = vmatprep.mubr.f32.mxu0 0.0
      %1900 = vmatmul.mubr.f32.gmra.mxu0 %v1804
      %v1901 = vpop.f32.mrf.mxu0
      %v1902 = vadd.f32 0.0, %v1901
      %v1903 = vpop.f32.mrf.mxu0
      %1904 = vmatprep.mubr.f32.mxu0 0.0
      %1905 = vmatmul.mubr.f32.gmra.mxu0 %v1806
      %v1906 = vpop.f32.mrf.mxu0
      %v1907 = vadd.f32 0.0, %v1906
      %v1908 = vpop.f32.mrf.mxu0
      %1909 = vmatprep.mubr.f32.mxu0 0.0
      %1910 = vmatmul.mubr.f32.gmra.mxu0 %v1808
      %v1911 = vpop.f32.mrf.mxu0
      %v1912 = vadd.f32 0.0, %v1911
      %v1913 = vpop.f32.mrf.mxu0
      %1914 = vmatprep.mubr.f32.mxu0 0.0
      %1915 = vmatmul.mubr.f32.gmra.mxu0 %v1810
      %v1916 = vpop.f32.mrf.mxu0
      %v1917 = vadd.f32 0.0, %v1916
      %v1918 = vpop.f32.mrf.mxu0
      %1919 = vdwg.mxu0
      %v1920 = vadd.f32 %v1754, %v1882
      %v1921 = vadd.f32 %v1755, %v1887
      %v1922 = vadd.f32 %v1756, %v1892
      %v1923 = vadd.f32 %v1757, %v1897
      %v1924 = vadd.f32 %v1758, %v1902
      %v1925 = vadd.f32 %v1759, %v1907
      %v1926 = vadd.f32 %v1760, %v1912
      %v1927 = vadd.f32 %v1761, %v1917
      %v1928 = vrot.slane %v1600, 2
      %v1929 = vrot.slane %v1601, 2
      %v1930 = vsel %vm705, %v1928, %v1929
      %v1931 = vrot.slane %v1602, 2
      %v1932 = vrot.slane %v1603, 2
      %v1933 = vsel %vm705, %v1931, %v1932
      %v1934 = vrot.slane %v1604, 2
      %v1935 = vrot.slane %v1605, 2
      %v1936 = vsel %vm705, %v1934, %v1935
      %v1937 = vrot.slane %v1606, 2
      %v1938 = vrot.slane %v1607, 2
      %v1939 = vsel %vm705, %v1937, %v1938
      %v1940 = vrot.slane %v1608, 2
      %v1941 = vrot.slane %v1609, 2
      %v1942 = vsel %vm705, %v1940, %v1941
      %v1943 = vrot.slane %v1610, 2
      %v1944 = vrot.slane %v1611, 2
      %v1945 = vsel %vm705, %v1943, %v1944
      %v1946 = vrot.slane %v1612, 2
      %v1947 = vrot.slane %v1613, 2
      %v1948 = vsel %vm705, %v1946, %v1947
      %v1949 = vrot.slane %v1614, 2
      %v1950 = vrot.slane %v1615, 2
      %v1951 = vsel %vm705, %v1949, %v1950
      %s1952 = scalar_lea.vmem %s3, 44
      %v1953 = vld [vmem:[%s1952] sm:$0xf]
      %v1954 = vsel %vm455, %v1930, 0
      %v1956 = vsel %vm455, %v1933, 0
      %v1958 = vsel %vm455, %v1936, 0
      %v1960 = vsel %vm455, %v1939, 0
      %v1962 = vsel %vm455, %v1942, 0
      %v1964 = vsel %vm455, %v1945, 0
      %v1966 = vsel %vm455, %v1948, 0
      %v1968 = vsel %vm455, %v1951, 0
      %v1971 = vsel %vm472, %v1953, 0
      %1973 = vmatprep.subr.mxu0 0.0
      %1974 = vmatpush1.msra.mxu0 0.0
      %1975 = vmatprep.subr.mxu0 0.0
      %1976 = vmatpush1.msra.mxu0 0.0
      %1977 = vmatprep.subr.mxu0 0.0
      %1978 = vmatpush1.msra.mxu0 0.0
      %1979 = vmatprep.subr.mxu0 0.0
      %1980 = vmatpush1.msra.mxu0 0.0
      %1981 = vmatprep.subr.mxu0 0.0
      %1982 = vmatpush1.msra.mxu0 0.0
      %1983 = vmatprep.subr.mxu0 0.0
      %1984 = vmatpush1.msra.mxu0 0.0
      %1985 = vmatprep.subr.mxu0 0.0
      %1986 = vmatpush1.msra.mxu0 0.0
      %1987 = vmatprep.subr.mxu0 0.0
      %1988 = vmatpush1.msra.mxu0 0.0
      %1989 = vmatprep.subr.mxu0 0.0
      %1990 = vmatpush1.msra.mxu0 0.0
      %1991 = vmatprep.subr.mxu0 0.0
      %1992 = vmatpush1.msra.mxu0 0.0
      %1993 = vmatprep.subr.mxu0 0.0
      %1994 = vmatpush1.msra.mxu0 0.0
      %1995 = vmatprep.subr.mxu0 0.0
      %1996 = vmatpush1.msra.mxu0 0.0
      %1997 = vmatprep.subr.mxu0 0.0
      %1998 = vmatpush1.msra.mxu0 0.0
      %1999 = vmatprep.subr.mxu0 0.0
      %2000 = vmatpush1.msra.mxu0 0.0
      %2001 = vmatprep.subr.mxu0 0.0
      %2002 = vmatpush1.msra.mxu0 0.0
      %2003 = vmatprep.subr.mxu0 0.0
      %2004 = vmatpush1.msra.mxu0 %v1971
      %2005 = vmatprep.subr.mxu0 0.0
      %2006 = vmatpush2.msra.mxu0 0.0
      %2007 = vmatprep.subr.mxu0 0.0
      %2008 = vmatpush2.msra.mxu0 0.0
      %2009 = vmatprep.subr.mxu0 0.0
      %2010 = vmatpush2.msra.mxu0 0.0
      %2011 = vmatprep.subr.mxu0 0.0
      %2012 = vmatpush2.msra.mxu0 0.0
      %2013 = vmatprep.subr.mxu0 0.0
      %2014 = vmatpush2.msra.mxu0 0.0
      %2015 = vmatprep.subr.mxu0 0.0
      %2016 = vmatpush2.msra.mxu0 0.0
      %2017 = vmatprep.subr.mxu0 0.0
      %2018 = vmatpush2.msra.mxu0 0.0
      %2019 = vmatprep.subr.mxu0 0.0
      %2020 = vmatpush2.msra.mxu0 0.0
      %2021 = vmatprep.subr.mxu0 0.0
      %2022 = vmatpush2.msra.mxu0 0.0
      %2023 = vmatprep.subr.mxu0 0.0
      %2024 = vmatpush2.msra.mxu0 0.0
      %2025 = vmatprep.subr.mxu0 0.0
      %2026 = vmatpush2.msra.mxu0 0.0
      %2027 = vmatprep.subr.mxu0 0.0
      %2028 = vmatpush2.msra.mxu0 0.0
      %2029 = vmatprep.subr.mxu0 0.0
      %2030 = vmatpush2.msra.mxu0 0.0
      %2031 = vmatprep.subr.mxu0 0.0
      %2032 = vmatpush2.msra.mxu0 0.0
      %2033 = vmatprep.subr.mxu0 0.0
      %2034 = vmatpush2.msra.mxu0 0.0
      %2035 = vmatprep.subr.mxu0 0.0
      %2036 = vmatpush2.msra.mxu0 0.0
      %2037 = vmatprep.mubr.f32.mxu0 0.0
      %2038 = vmatmul.mubr.f32.gmra.mxu0 %v1954
      %v2039 = vpop.f32.mrf.mxu0
      %v2040 = vadd.f32 0.0, %v2039
      %v2041 = vpop.f32.mrf.mxu0
      %2042 = vmatprep.mubr.f32.mxu0 0.0
      %2043 = vmatmul.mubr.f32.gmra.mxu0 %v1956
      %v2044 = vpop.f32.mrf.mxu0
      %v2045 = vadd.f32 0.0, %v2044
      %v2046 = vpop.f32.mrf.mxu0
      %2047 = vmatprep.mubr.f32.mxu0 0.0
      %2048 = vmatmul.mubr.f32.gmra.mxu0 %v1958
      %v2049 = vpop.f32.mrf.mxu0
      %v2050 = vadd.f32 0.0, %v2049
      %v2051 = vpop.f32.mrf.mxu0
      %2052 = vmatprep.mubr.f32.mxu0 0.0
      %2053 = vmatmul.mubr.f32.gmra.mxu0 %v1960
      %v2054 = vpop.f32.mrf.mxu0
      %v2055 = vadd.f32 0.0, %v2054
      %v2056 = vpop.f32.mrf.mxu0
      %2057 = vmatprep.mubr.f32.mxu0 0.0
      %2058 = vmatmul.mubr.f32.gmra.mxu0 %v1962
      %v2059 = vpop.f32.mrf.mxu0
      %v2060 = vadd.f32 0.0, %v2059
      %v2061 = vpop.f32.mrf.mxu0
      %2062 = vmatprep.mubr.f32.mxu0 0.0
      %2063 = vmatmul.mubr.f32.gmra.mxu0 %v1964
      %v2064 = vpop.f32.mrf.mxu0
      %v2065 = vadd.f32 0.0, %v2064
      %v2066 = vpop.f32.mrf.mxu0
      %2067 = vmatprep.mubr.f32.mxu0 0.0
      %2068 = vmatmul.mubr.f32.gmra.mxu0 %v1966
      %v2069 = vpop.f32.mrf.mxu0
      %v2070 = vadd.f32 0.0, %v2069
      %v2071 = vpop.f32.mrf.mxu0
      %2072 = vmatprep.mubr.f32.mxu0 0.0
      %2073 = vmatmul.mubr.f32.gmra.mxu0 %v1968
      %v2074 = vpop.f32.mrf.mxu0
      %v2075 = vadd.f32 0.0, %v2074
      %v2076 = vpop.f32.mrf.mxu0
      %2077 = vdwg.mxu0
      %v2078 = vadd.f32 %v1920, %v2040
      %v2079 = vadd.f32 %v1921, %v2045
      %v2080 = vadd.f32 %v1922, %v2050
      %v2081 = vadd.f32 %v1923, %v2055
      %v2082 = vadd.f32 %v1924, %v2060
      %v2083 = vadd.f32 %v1925, %v2065
      %v2084 = vadd.f32 %v1926, %v2070
      %v2085 = vadd.f32 %v1927, %v2075
      %s2086 = scalar_lea.vmem %s3, 48
      %v2087 = vld [vmem:[%s2086] sm:$0xf]
      %v2089 = vsel %vm455, %v1616, 0
      %v2092 = vsel %vm472, %v2087, 0
      %2094 = vmatprep.subr.mxu0 0.0
      %2095 = vmatpush1.msra.mxu0 0.0
      %2096 = vmatprep.subr.mxu0 0.0
      %2097 = vmatpush1.msra.mxu0 0.0
      %2098 = vmatprep.subr.mxu0 0.0
      %2099 = vmatpush1.msra.mxu0 0.0
      %2100 = vmatprep.subr.mxu0 0.0
      %2101 = vmatpush1.msra.mxu0 0.0
      %2102 = vmatprep.subr.mxu0 0.0
      %2103 = vmatpush1.msra.mxu0 0.0
      %2104 = vmatprep.subr.mxu0 0.0
      %2105 = vmatpush1.msra.mxu0 0.0
      %2106 = vmatprep.subr.mxu0 0.0
      %2107 = vmatpush1.msra.mxu0 0.0
      %2108 = vmatprep.subr.mxu0 0.0
      %2109 = vmatpush1.msra.mxu0 0.0
      %2110 = vmatprep.subr.mxu0 0.0
      %2111 = vmatpush1.msra.mxu0 0.0
      %2112 = vmatprep.subr.mxu0 0.0
      %2113 = vmatpush1.msra.mxu0 0.0
      %2114 = vmatprep.subr.mxu0 0.0
      %2115 = vmatpush1.msra.mxu0 0.0
      %2116 = vmatprep.subr.mxu0 0.0
      %2117 = vmatpush1.msra.mxu0 0.0
      %2118 = vmatprep.subr.mxu0 0.0
      %2119 = vmatpush1.msra.mxu0 0.0
      %2120 = vmatprep.subr.mxu0 0.0
      %2121 = vmatpush1.msra.mxu0 0.0
      %2122 = vmatprep.subr.mxu0 0.0
      %2123 = vmatpush1.msra.mxu0 0.0
      %2124 = vmatprep.subr.mxu0 0.0
      %2125 = vmatpush1.msra.mxu0 %v2092
      %2126 = vmatprep.subr.mxu0 0.0
      %2127 = vmatpush2.msra.mxu0 0.0
      %2128 = vmatprep.subr.mxu0 0.0
      %2129 = vmatpush2.msra.mxu0 0.0
      %2130 = vmatprep.subr.mxu0 0.0
      %2131 = vmatpush2.msra.mxu0 0.0
      %2132 = vmatprep.subr.mxu0 0.0
      %2133 = vmatpush2.msra.mxu0 0.0
      %2134 = vmatprep.subr.mxu0 0.0
      %2135 = vmatpush2.msra.mxu0 0.0
      %2136 = vmatprep.subr.mxu0 0.0
      %2137 = vmatpush2.msra.mxu0 0.0
      %2138 = vmatprep.subr.mxu0 0.0
      %2139 = vmatpush2.msra.mxu0 0.0
      %2140 = vmatprep.subr.mxu0 0.0
      %2141 = vmatpush2.msra.mxu0 0.0
      %2142 = vmatprep.subr.mxu0 0.0
      %2143 = vmatpush2.msra.mxu0 0.0
      %2144 = vmatprep.subr.mxu0 0.0
      %2145 = vmatpush2.msra.mxu0 0.0
      %2146 = vmatprep.subr.mxu0 0.0
      %2147 = vmatpush2.msra.mxu0 0.0
      %2148 = vmatprep.subr.mxu0 0.0
      %2149 = vmatpush2.msra.mxu0 0.0
      %2150 = vmatprep.subr.mxu0 0.0
      %2151 = vmatpush2.msra.mxu0 0.0
      %2152 = vmatprep.subr.mxu0 0.0
      %2153 = vmatpush2.msra.mxu0 0.0
      %2154 = vmatprep.subr.mxu0 0.0
      %2155 = vmatpush2.msra.mxu0 0.0
      %2156 = vmatprep.subr.mxu0 0.0
      %2157 = vmatpush2.msra.mxu0 0.0
      %2158 = vmatprep.mubr.f32.mxu0 0.0
      %2159 = vmatmul.mubr.f32.gmra.mxu0 %v1626
      %v2160 = vpop.f32.mrf.mxu0
      %v2161 = vadd.f32 0.0, %v2160
      %v2162 = vpop.f32.mrf.mxu0
      %2163 = vmatprep.mubr.f32.mxu0 0.0
      %2164 = vmatmul.mubr.f32.gmra.mxu0 %v1629
      %v2165 = vpop.f32.mrf.mxu0
      %v2166 = vadd.f32 0.0, %v2165
      %v2167 = vpop.f32.mrf.mxu0
      %2168 = vmatprep.mubr.f32.mxu0 0.0
      %2169 = vmatmul.mubr.f32.gmra.mxu0 %v1632
      %v2170 = vpop.f32.mrf.mxu0
      %v2171 = vadd.f32 0.0, %v2170
      %v2172 = vpop.f32.mrf.mxu0
      %2173 = vmatprep.mubr.f32.mxu0 0.0
      %2174 = vmatmul.mubr.f32.gmra.mxu0 %v1635
      %v2175 = vpop.f32.mrf.mxu0
      %v2176 = vadd.f32 0.0, %v2175
      %v2177 = vpop.f32.mrf.mxu0
      %2178 = vmatprep.mubr.f32.mxu0 0.0
      %2179 = vmatmul.mubr.f32.gmra.mxu0 %v1638
      %v2180 = vpop.f32.mrf.mxu0
      %v2181 = vadd.f32 0.0, %v2180
      %v2182 = vpop.f32.mrf.mxu0
      %2183 = vmatprep.mubr.f32.mxu0 0.0
      %2184 = vmatmul.mubr.f32.gmra.mxu0 %v1641
      %v2185 = vpop.f32.mrf.mxu0
      %v2186 = vadd.f32 0.0, %v2185
      %v2187 = vpop.f32.mrf.mxu0
      %2188 = vmatprep.mubr.f32.mxu0 0.0
      %2189 = vmatmul.mubr.f32.gmra.mxu0 %v1644
      %v2190 = vpop.f32.mrf.mxu0
      %v2191 = vadd.f32 0.0, %v2190
      %v2192 = vpop.f32.mrf.mxu0
      %2193 = vmatprep.mubr.f32.mxu0 0.0
      %2194 = vmatmul.mubr.f32.gmra.mxu0 %v2089
      %v2195 = vpop.f32.mrf.mxu0
      %v2196 = vadd.f32 0.0, %v2195
      %v2197 = vpop.f32.mrf.mxu0
      %2198 = vdwg.mxu0
      %v2199 = vadd.f32 %v2078, %v2161
      %v2200 = vadd.f32 %v2079, %v2166
      %v2201 = vadd.f32 %v2080, %v2171
      %v2202 = vadd.f32 %v2081, %v2176
      %v2203 = vadd.f32 %v2082, %v2181
      %v2204 = vadd.f32 %v2083, %v2186
      %v2205 = vadd.f32 %v2084, %v2191
      %v2206 = vadd.f32 %v2085, %v2196
      %v2208 = vrot.slane %v1616, 1
      %v2209 = vrot.slane %v1617, 1
      %v2210 = vsel %vm428, %v2208, %v2209
      %s2211 = scalar_lea.vmem %s3, 52
      %v2212 = vld [vmem:[%s2211] sm:$0xf]
      %v2213 = vsel %vm455, %v2210, 0
      %v2216 = vsel %vm472, %v2212, 0
      %2218 = vmatprep.subr.mxu0 0.0
      %2219 = vmatpush1.msra.mxu0 0.0
      %2220 = vmatprep.subr.mxu0 0.0
      %2221 = vmatpush1.msra.mxu0 0.0
      %2222 = vmatprep.subr.mxu0 0.0
      %2223 = vmatpush1.msra.mxu0 0.0
      %2224 = vmatprep.subr.mxu0 0.0
      %2225 = vmatpush1.msra.mxu0 0.0
      %2226 = vmatprep.subr.mxu0 0.0
      %2227 = vmatpush1.msra.mxu0 0.0
      %2228 = vmatprep.subr.mxu0 0.0
      %2229 = vmatpush1.msra.mxu0 0.0
      %2230 = vmatprep.subr.mxu0 0.0
      %2231 = vmatpush1.msra.mxu0 0.0
      %2232 = vmatprep.subr.mxu0 0.0
      %2233 = vmatpush1.msra.mxu0 0.0
      %2234 = vmatprep.subr.mxu0 0.0
      %2235 = vmatpush1.msra.mxu0 0.0
      %2236 = vmatprep.subr.mxu0 0.0
      %2237 = vmatpush1.msra.mxu0 0.0
      %2238 = vmatprep.subr.mxu0 0.0
      %2239 = vmatpush1.msra.mxu0 0.0
      %2240 = vmatprep.subr.mxu0 0.0
      %2241 = vmatpush1.msra.mxu0 0.0
      %2242 = vmatprep.subr.mxu0 0.0
      %2243 = vmatpush1.msra.mxu0 0.0
      %2244 = vmatprep.subr.mxu0 0.0
      %2245 = vmatpush1.msra.mxu0 0.0
      %2246 = vmatprep.subr.mxu0 0.0
      %2247 = vmatpush1.msra.mxu0 0.0
      %2248 = vmatprep.subr.mxu0 0.0
      %2249 = vmatpush1.msra.mxu0 %v2216
      %2250 = vmatprep.subr.mxu0 0.0
      %2251 = vmatpush2.msra.mxu0 0.0
      %2252 = vmatprep.subr.mxu0 0.0
      %2253 = vmatpush2.msra.mxu0 0.0
      %2254 = vmatprep.subr.mxu0 0.0
      %2255 = vmatpush2.msra.mxu0 0.0
      %2256 = vmatprep.subr.mxu0 0.0
      %2257 = vmatpush2.msra.mxu0 0.0
      %2258 = vmatprep.subr.mxu0 0.0
      %2259 = vmatpush2.msra.mxu0 0.0
      %2260 = vmatprep.subr.mxu0 0.0
      %2261 = vmatpush2.msra.mxu0 0.0
      %2262 = vmatprep.subr.mxu0 0.0
      %2263 = vmatpush2.msra.mxu0 0.0
      %2264 = vmatprep.subr.mxu0 0.0
      %2265 = vmatpush2.msra.mxu0 0.0
      %2266 = vmatprep.subr.mxu0 0.0
      %2267 = vmatpush2.msra.mxu0 0.0
      %2268 = vmatprep.subr.mxu0 0.0
      %2269 = vmatpush2.msra.mxu0 0.0
      %2270 = vmatprep.subr.mxu0 0.0
      %2271 = vmatpush2.msra.mxu0 0.0
      %2272 = vmatprep.subr.mxu0 0.0
      %2273 = vmatpush2.msra.mxu0 0.0
      %2274 = vmatprep.subr.mxu0 0.0
      %2275 = vmatpush2.msra.mxu0 0.0
      %2276 = vmatprep.subr.mxu0 0.0
      %2277 = vmatpush2.msra.mxu0 0.0
      %2278 = vmatprep.subr.mxu0 0.0
      %2279 = vmatpush2.msra.mxu0 0.0
      %2280 = vmatprep.subr.mxu0 0.0
      %2281 = vmatpush2.msra.mxu0 0.0
      %2282 = vmatprep.mubr.f32.mxu0 0.0
      %2283 = vmatmul.mubr.f32.gmra.mxu0 %v1798
      %v2284 = vpop.f32.mrf.mxu0
      %v2285 = vadd.f32 0.0, %v2284
      %v2286 = vpop.f32.mrf.mxu0
      %2287 = vmatprep.mubr.f32.mxu0 0.0
      %2288 = vmatmul.mubr.f32.gmra.mxu0 %v1800
      %v2289 = vpop.f32.mrf.mxu0
      %v2290 = vadd.f32 0.0, %v2289
      %v2291 = vpop.f32.mrf.mxu0
      %2292 = vmatprep.mubr.f32.mxu0 0.0
      %2293 = vmatmul.mubr.f32.gmra.mxu0 %v1802
      %v2294 = vpop.f32.mrf.mxu0
      %v2295 = vadd.f32 0.0, %v2294
      %v2296 = vpop.f32.mrf.mxu0
      %2297 = vmatprep.mubr.f32.mxu0 0.0
      %2298 = vmatmul.mubr.f32.gmra.mxu0 %v1804
      %v2299 = vpop.f32.mrf.mxu0
      %v2300 = vadd.f32 0.0, %v2299
      %v2301 = vpop.f32.mrf.mxu0
      %2302 = vmatprep.mubr.f32.mxu0 0.0
      %2303 = vmatmul.mubr.f32.gmra.mxu0 %v1806
      %v2304 = vpop.f32.mrf.mxu0
      %v2305 = vadd.f32 0.0, %v2304
      %v2306 = vpop.f32.mrf.mxu0
      %2307 = vmatprep.mubr.f32.mxu0 0.0
      %2308 = vmatmul.mubr.f32.gmra.mxu0 %v1808
      %v2309 = vpop.f32.mrf.mxu0
      %v2310 = vadd.f32 0.0, %v2309
      %v2311 = vpop.f32.mrf.mxu0
      %2312 = vmatprep.mubr.f32.mxu0 0.0
      %2313 = vmatmul.mubr.f32.gmra.mxu0 %v1810
      %v2314 = vpop.f32.mrf.mxu0
      %v2315 = vadd.f32 0.0, %v2314
      %v2316 = vpop.f32.mrf.mxu0
      %2317 = vmatprep.mubr.f32.mxu0 0.0
      %2318 = vmatmul.mubr.f32.gmra.mxu0 %v2213
      %v2319 = vpop.f32.mrf.mxu0
      %v2320 = vadd.f32 0.0, %v2319
      %v2321 = vpop.f32.mrf.mxu0
      %2322 = vdwg.mxu0
      %v2323 = vadd.f32 %v2199, %v2285
      %v2324 = vadd.f32 %v2200, %v2290
      %v2325 = vadd.f32 %v2201, %v2295
      %v2326 = vadd.f32 %v2202, %v2300
      %v2327 = vadd.f32 %v2203, %v2305
      %v2328 = vadd.f32 %v2204, %v2310
      %v2329 = vadd.f32 %v2205, %v2315
      %v2330 = vadd.f32 %v2206, %v2320
      %v2331 = vrot.slane %v1616, 2
      %v2332 = vrot.slane %v1617, 2
      %v2333 = vsel %vm705, %v2331, %v2332
      %s2334 = scalar_lea.vmem %s3, 56
      %v2335 = vld [vmem:[%s2334] sm:$0xf]
      %v2336 = vsel %vm455, %v2333, 0
      %v2339 = vsel %vm472, %v2335, 0
      %2341 = vmatprep.subr.mxu0 0.0
      %2342 = vmatpush1.msra.mxu0 0.0
      %2343 = vmatprep.subr.mxu0 0.0
      %2344 = vmatpush1.msra.mxu0 0.0
      %2345 = vmatprep.subr.mxu0 0.0
      %2346 = vmatpush1.msra.mxu0 0.0
      %2347 = vmatprep.subr.mxu0 0.0
      %2348 = vmatpush1.msra.mxu0 0.0
      %2349 = vmatprep.subr.mxu0 0.0
      %2350 = vmatpush1.msra.mxu0 0.0
      %2351 = vmatprep.subr.mxu0 0.0
      %2352 = vmatpush1.msra.mxu0 0.0
      %2353 = vmatprep.subr.mxu0 0.0
      %2354 = vmatpush1.msra.mxu0 0.0
      %2355 = vmatprep.subr.mxu0 0.0
      %2356 = vmatpush1.msra.mxu0 0.0
      %2357 = vmatprep.subr.mxu0 0.0
      %2358 = vmatpush1.msra.mxu0 0.0
      %2359 = vmatprep.subr.mxu0 0.0
      %2360 = vmatpush1.msra.mxu0 0.0
      %2361 = vmatprep.subr.mxu0 0.0
      %2362 = vmatpush1.msra.mxu0 0.0
      %2363 = vmatprep.subr.mxu0 0.0
      %2364 = vmatpush1.msra.mxu0 0.0
      %2365 = vmatprep.subr.mxu0 0.0
      %2366 = vmatpush1.msra.mxu0 0.0
      %2367 = vmatprep.subr.mxu0 0.0
      %2368 = vmatpush1.msra.mxu0 0.0
      %2369 = vmatprep.subr.mxu0 0.0
      %2370 = vmatpush1.msra.mxu0 0.0
      %2371 = vmatprep.subr.mxu0 0.0
      %2372 = vmatpush1.msra.mxu0 %v2339
      %2373 = vmatprep.subr.mxu0 0.0
      %2374 = vmatpush2.msra.mxu0 0.0
      %2375 = vmatprep.subr.mxu0 0.0
      %2376 = vmatpush2.msra.mxu0 0.0
      %2377 = vmatprep.subr.mxu0 0.0
      %2378 = vmatpush2.msra.mxu0 0.0
      %2379 = vmatprep.subr.mxu0 0.0
      %2380 = vmatpush2.msra.mxu0 0.0
      %2381 = vmatprep.subr.mxu0 0.0
      %2382 = vmatpush2.msra.mxu0 0.0
      %2383 = vmatprep.subr.mxu0 0.0
      %2384 = vmatpush2.msra.mxu0 0.0
      %2385 = vmatprep.subr.mxu0 0.0
      %2386 = vmatpush2.msra.mxu0 0.0
      %2387 = vmatprep.subr.mxu0 0.0
      %2388 = vmatpush2.msra.mxu0 0.0
      %2389 = vmatprep.subr.mxu0 0.0
      %2390 = vmatpush2.msra.mxu0 0.0
      %2391 = vmatprep.subr.mxu0 0.0
      %2392 = vmatpush2.msra.mxu0 0.0
      %2393 = vmatprep.subr.mxu0 0.0
      %2394 = vmatpush2.msra.mxu0 0.0
      %2395 = vmatprep.subr.mxu0 0.0
      %2396 = vmatpush2.msra.mxu0 0.0
      %2397 = vmatprep.subr.mxu0 0.0
      %2398 = vmatpush2.msra.mxu0 0.0
      %2399 = vmatprep.subr.mxu0 0.0
      %2400 = vmatpush2.msra.mxu0 0.0
      %2401 = vmatprep.subr.mxu0 0.0
      %2402 = vmatpush2.msra.mxu0 0.0
      %2403 = vmatprep.subr.mxu0 0.0
      %2404 = vmatpush2.msra.mxu0 0.0
      %2405 = vmatprep.mubr.f32.mxu0 0.0
      %2406 = vmatmul.mubr.f32.gmra.mxu0 %v1956
      %v2407 = vpop.f32.mrf.mxu0
      %v2408 = vadd.f32 0.0, %v2407
      %v2409 = vpop.f32.mrf.mxu0
      %2410 = vmatprep.mubr.f32.mxu0 0.0
      %2411 = vmatmul.mubr.f32.gmra.mxu0 %v1958
      %v2412 = vpop.f32.mrf.mxu0
      %v2413 = vadd.f32 0.0, %v2412
      %v2414 = vpop.f32.mrf.mxu0
      %2415 = vmatprep.mubr.f32.mxu0 0.0
      %2416 = vmatmul.mubr.f32.gmra.mxu0 %v1960
      %v2417 = vpop.f32.mrf.mxu0
      %v2418 = vadd.f32 0.0, %v2417
      %v2419 = vpop.f32.mrf.mxu0
      %2420 = vmatprep.mubr.f32.mxu0 0.0
      %2421 = vmatmul.mubr.f32.gmra.mxu0 %v1962
      %v2422 = vpop.f32.mrf.mxu0
      %v2423 = vadd.f32 0.0, %v2422
      %v2424 = vpop.f32.mrf.mxu0
      %2425 = vmatprep.mubr.f32.mxu0 0.0
      %2426 = vmatmul.mubr.f32.gmra.mxu0 %v1964
      %v2427 = vpop.f32.mrf.mxu0
      %v2428 = vadd.f32 0.0, %v2427
      %v2429 = vpop.f32.mrf.mxu0
      %2430 = vmatprep.mubr.f32.mxu0 0.0
      %2431 = vmatmul.mubr.f32.gmra.mxu0 %v1966
      %v2432 = vpop.f32.mrf.mxu0
      %v2433 = vadd.f32 0.0, %v2432
      %v2434 = vpop.f32.mrf.mxu0
      %2435 = vmatprep.mubr.f32.mxu0 0.0
      %2436 = vmatmul.mubr.f32.gmra.mxu0 %v1968
      %v2437 = vpop.f32.mrf.mxu0
      %v2438 = vadd.f32 0.0, %v2437
      %v2439 = vpop.f32.mrf.mxu0
      %2440 = vmatprep.mubr.f32.mxu0 0.0
      %2441 = vmatmul.mubr.f32.gmra.mxu0 %v2336
      %v2442 = vpop.f32.mrf.mxu0
      %v2443 = vadd.f32 0.0, %v2442
      %v2444 = vpop.f32.mrf.mxu0
      %2445 = vdwg.mxu0
      %v2446 = vadd.f32 %v2323, %v2408
      %v2447 = vadd.f32 %v2324, %v2413
      %v2448 = vadd.f32 %v2325, %v2418
      %v2449 = vadd.f32 %v2326, %v2423
      %v2450 = vadd.f32 %v2327, %v2428
      %v2451 = vadd.f32 %v2328, %v2433
      %v2452 = vadd.f32 %v2329, %v2438
      %v2453 = vadd.f32 %v2330, %v2443
      %s2454 = scalar_lea.vmem %s3, 60
      %v2455 = vld [vmem:[%s2454] sm:$0xf]
      %v2457 = vsel %vm455, %v1618, 0
      %v2460 = vsel %vm472, %v2455, 0
      %2462 = vmatprep.subr.mxu0 0.0
      %2463 = vmatpush1.msra.mxu0 0.0
      %2464 = vmatprep.subr.mxu0 0.0
      %2465 = vmatpush1.msra.mxu0 0.0
      %2466 = vmatprep.subr.mxu0 0.0
      %2467 = vmatpush1.msra.mxu0 0.0
      %2468 = vmatprep.subr.mxu0 0.0
      %2469 = vmatpush1.msra.mxu0 0.0
      %2470 = vmatprep.subr.mxu0 0.0
      %2471 = vmatpush1.msra.mxu0 0.0
      %2472 = vmatprep.subr.mxu0 0.0
      %2473 = vmatpush1.msra.mxu0 0.0
      %2474 = vmatprep.subr.mxu0 0.0
      %2475 = vmatpush1.msra.mxu0 0.0
      %2476 = vmatprep.subr.mxu0 0.0
      %2477 = vmatpush1.msra.mxu0 0.0
      %2478 = vmatprep.subr.mxu0 0.0
      %2479 = vmatpush1.msra.mxu0 0.0
      %2480 = vmatprep.subr.mxu0 0.0
      %2481 = vmatpush1.msra.mxu0 0.0
      %2482 = vmatprep.subr.mxu0 0.0
      %2483 = vmatpush1.msra.mxu0 0.0
      %2484 = vmatprep.subr.mxu0 0.0
      %2485 = vmatpush1.msra.mxu0 0.0
      %2486 = vmatprep.subr.mxu0 0.0
      %2487 = vmatpush1.msra.mxu0 0.0
      %2488 = vmatprep.subr.mxu0 0.0
      %2489 = vmatpush1.msra.mxu0 0.0
      %2490 = vmatprep.subr.mxu0 0.0
      %2491 = vmatpush1.msra.mxu0 0.0
      %2492 = vmatprep.subr.mxu0 0.0
      %2493 = vmatpush1.msra.mxu0 %v2460
      %2494 = vmatprep.subr.mxu0 0.0
      %2495 = vmatpush2.msra.mxu0 0.0
      %2496 = vmatprep.subr.mxu0 0.0
      %2497 = vmatpush2.msra.mxu0 0.0
      %2498 = vmatprep.subr.mxu0 0.0
      %2499 = vmatpush2.msra.mxu0 0.0
      %2500 = vmatprep.subr.mxu0 0.0
      %2501 = vmatpush2.msra.mxu0 0.0
      %2502 = vmatprep.subr.mxu0 0.0
      %2503 = vmatpush2.msra.mxu0 0.0
      %2504 = vmatprep.subr.mxu0 0.0
      %2505 = vmatpush2.msra.mxu0 0.0
      %2506 = vmatprep.subr.mxu0 0.0
      %2507 = vmatpush2.msra.mxu0 0.0
      %2508 = vmatprep.subr.mxu0 0.0
      %2509 = vmatpush2.msra.mxu0 0.0
      %2510 = vmatprep.subr.mxu0 0.0
      %2511 = vmatpush2.msra.mxu0 0.0
      %2512 = vmatprep.subr.mxu0 0.0
      %2513 = vmatpush2.msra.mxu0 0.0
      %2514 = vmatprep.subr.mxu0 0.0
      %2515 = vmatpush2.msra.mxu0 0.0
      %2516 = vmatprep.subr.mxu0 0.0
      %2517 = vmatpush2.msra.mxu0 0.0
      %2518 = vmatprep.subr.mxu0 0.0
      %2519 = vmatpush2.msra.mxu0 0.0
      %2520 = vmatprep.subr.mxu0 0.0
      %2521 = vmatpush2.msra.mxu0 0.0
      %2522 = vmatprep.subr.mxu0 0.0
      %2523 = vmatpush2.msra.mxu0 0.0
      %2524 = vmatprep.subr.mxu0 0.0
      %2525 = vmatpush2.msra.mxu0 0.0
      %2526 = vmatprep.mubr.f32.mxu0 0.0
      %2527 = vmatmul.mubr.f32.gmra.mxu0 %v1629
      %v2528 = vpop.f32.mrf.mxu0
      %v2529 = vadd.f32 0.0, %v2528
      %v2530 = vpop.f32.mrf.mxu0
      %2531 = vmatprep.mubr.f32.mxu0 0.0
      %2532 = vmatmul.mubr.f32.gmra.mxu0 %v1632
      %v2533 = vpop.f32.mrf.mxu0
      %v2534 = vadd.f32 0.0, %v2533
      %v2535 = vpop.f32.mrf.mxu0
      %2536 = vmatprep.mubr.f32.mxu0 0.0
      %2537 = vmatmul.mubr.f32.gmra.mxu0 %v1635
      %v2538 = vpop.f32.mrf.mxu0
      %v2539 = vadd.f32 0.0, %v2538
      %v2540 = vpop.f32.mrf.mxu0
      %2541 = vmatprep.mubr.f32.mxu0 0.0
      %2542 = vmatmul.mubr.f32.gmra.mxu0 %v1638
      %v2543 = vpop.f32.mrf.mxu0
      %v2544 = vadd.f32 0.0, %v2543
      %v2545 = vpop.f32.mrf.mxu0
      %2546 = vmatprep.mubr.f32.mxu0 0.0
      %2547 = vmatmul.mubr.f32.gmra.mxu0 %v1641
      %v2548 = vpop.f32.mrf.mxu0
      %v2549 = vadd.f32 0.0, %v2548
      %v2550 = vpop.f32.mrf.mxu0
      %2551 = vmatprep.mubr.f32.mxu0 0.0
      %2552 = vmatmul.mubr.f32.gmra.mxu0 %v1644
      %v2553 = vpop.f32.mrf.mxu0
      %v2554 = vadd.f32 0.0, %v2553
      %v2555 = vpop.f32.mrf.mxu0
      %2556 = vmatprep.mubr.f32.mxu0 0.0
      %2557 = vmatmul.mubr.f32.gmra.mxu0 %v2089
      %v2558 = vpop.f32.mrf.mxu0
      %v2559 = vadd.f32 0.0, %v2558
      %v2560 = vpop.f32.mrf.mxu0
      %2561 = vmatprep.mubr.f32.mxu0 0.0
      %2562 = vmatmul.mubr.f32.gmra.mxu0 %v2457
      %v2563 = vpop.f32.mrf.mxu0
      %v2564 = vadd.f32 0.0, %v2563
      %v2565 = vpop.f32.mrf.mxu0
      %2566 = vdwg.mxu0
      %v2567 = vadd.f32 %v2446, %v2529
      %v2568 = vadd.f32 %v2447, %v2534
      %v2569 = vadd.f32 %v2448, %v2539
      %v2570 = vadd.f32 %v2449, %v2544
      %v2571 = vadd.f32 %v2450, %v2549
      %v2572 = vadd.f32 %v2451, %v2554
      %v2573 = vadd.f32 %v2452, %v2559
      %v2574 = vadd.f32 %v2453, %v2564
      %v2576 = vrot.slane %v1618, 1
      %v2577 = vrot.slane %v1619, 1
      %v2578 = vsel %vm428, %v2576, %v2577
      %s2579 = scalar_lea.vmem %s3, 64
      %v2580 = vld [vmem:[%s2579] sm:$0xf]
      %v2581 = vsel %vm455, %v2578, 0
      %v2584 = vsel %vm472, %v2580, 0
      %2586 = vmatprep.subr.mxu0 0.0
      %2587 = vmatpush1.msra.mxu0 0.0
      %2588 = vmatprep.subr.mxu0 0.0
      %2589 = vmatpush1.msra.mxu0 0.0
      %2590 = vmatprep.subr.mxu0 0.0
      %2591 = vmatpush1.msra.mxu0 0.0
      %2592 = vmatprep.subr.mxu0 0.0
      %2593 = vmatpush1.msra.mxu0 0.0
      %2594 = vmatprep.subr.mxu0 0.0
      %2595 = vmatpush1.msra.mxu0 0.0
      %2596 = vmatprep.subr.mxu0 0.0
      %2597 = vmatpush1.msra.mxu0 0.0
      %2598 = vmatprep.subr.mxu0 0.0
      %2599 = vmatpush1.msra.mxu0 0.0
      %2600 = vmatprep.subr.mxu0 0.0
      %2601 = vmatpush1.msra.mxu0 0.0
      %2602 = vmatprep.subr.mxu0 0.0
      %2603 = vmatpush1.msra.mxu0 0.0
      %2604 = vmatprep.subr.mxu0 0.0
      %2605 = vmatpush1.msra.mxu0 0.0
      %2606 = vmatprep.subr.mxu0 0.0
      %2607 = vmatpush1.msra.mxu0 0.0
      %2608 = vmatprep.subr.mxu0 0.0
      %2609 = vmatpush1.msra.mxu0 0.0
      %2610 = vmatprep.subr.mxu0 0.0
      %2611 = vmatpush1.msra.mxu0 0.0
      %2612 = vmatprep.subr.mxu0 0.0
      %2613 = vmatpush1.msra.mxu0 0.0
      %2614 = vmatprep.subr.mxu0 0.0
      %2615 = vmatpush1.msra.mxu0 0.0
      %2616 = vmatprep.subr.mxu0 0.0
      %2617 = vmatpush1.msra.mxu0 %v2584
      %2618 = vmatprep.subr.mxu0 0.0
      %2619 = vmatpush2.msra.mxu0 0.0
      %2620 = vmatprep.subr.mxu0 0.0
      %2621 = vmatpush2.msra.mxu0 0.0
      %2622 = vmatprep.subr.mxu0 0.0
      %2623 = vmatpush2.msra.mxu0 0.0
      %2624 = vmatprep.subr.mxu0 0.0
      %2625 = vmatpush2.msra.mxu0 0.0
      %2626 = vmatprep.subr.mxu0 0.0
      %2627 = vmatpush2.msra.mxu0 0.0
      %2628 = vmatprep.subr.mxu0 0.0
      %2629 = vmatpush2.msra.mxu0 0.0
      %2630 = vmatprep.subr.mxu0 0.0
      %2631 = vmatpush2.msra.mxu0 0.0
      %2632 = vmatprep.subr.mxu0 0.0
      %2633 = vmatpush2.msra.mxu0 0.0
      %2634 = vmatprep.subr.mxu0 0.0
      %2635 = vmatpush2.msra.mxu0 0.0
      %2636 = vmatprep.subr.mxu0 0.0
      %2637 = vmatpush2.msra.mxu0 0.0
      %2638 = vmatprep.subr.mxu0 0.0
      %2639 = vmatpush2.msra.mxu0 0.0
      %2640 = vmatprep.subr.mxu0 0.0
      %2641 = vmatpush2.msra.mxu0 0.0
      %2642 = vmatprep.subr.mxu0 0.0
      %2643 = vmatpush2.msra.mxu0 0.0
      %2644 = vmatprep.subr.mxu0 0.0
      %2645 = vmatpush2.msra.mxu0 0.0
      %2646 = vmatprep.subr.mxu0 0.0
      %2647 = vmatpush2.msra.mxu0 0.0
      %2648 = vmatprep.subr.mxu0 0.0
      %2649 = vmatpush2.msra.mxu0 0.0
      %2650 = vmatprep.mubr.f32.mxu0 0.0
      %2651 = vmatmul.mubr.f32.gmra.mxu0 %v1800
      %v2652 = vpop.f32.mrf.mxu0
      %v2653 = vadd.f32 0.0, %v2652
      %v2654 = vpop.f32.mrf.mxu0
      %2655 = vmatprep.mubr.f32.mxu0 0.0
      %2656 = vmatmul.mubr.f32.gmra.mxu0 %v1802
      %v2657 = vpop.f32.mrf.mxu0
      %v2658 = vadd.f32 0.0, %v2657
      %v2659 = vpop.f32.mrf.mxu0
      %2660 = vmatprep.mubr.f32.mxu0 0.0
      %2661 = vmatmul.mubr.f32.gmra.mxu0 %v1804
      %v2662 = vpop.f32.mrf.mxu0
      %v2663 = vadd.f32 0.0, %v2662
      %v2664 = vpop.f32.mrf.mxu0
      %2665 = vmatprep.mubr.f32.mxu0 0.0
      %2666 = vmatmul.mubr.f32.gmra.mxu0 %v1806
      %v2667 = vpop.f32.mrf.mxu0
      %v2668 = vadd.f32 0.0, %v2667
      %v2669 = vpop.f32.mrf.mxu0
      %2670 = vmatprep.mubr.f32.mxu0 0.0
      %2671 = vmatmul.mubr.f32.gmra.mxu0 %v1808
      %v2672 = vpop.f32.mrf.mxu0
      %v2673 = vadd.f32 0.0, %v2672
      %v2674 = vpop.f32.mrf.mxu0
      %2675 = vmatprep.mubr.f32.mxu0 0.0
      %2676 = vmatmul.mubr.f32.gmra.mxu0 %v1810
      %v2677 = vpop.f32.mrf.mxu0
      %v2678 = vadd.f32 0.0, %v2677
      %v2679 = vpop.f32.mrf.mxu0
      %2680 = vmatprep.mubr.f32.mxu0 0.0
      %2681 = vmatmul.mubr.f32.gmra.mxu0 %v2213
      %v2682 = vpop.f32.mrf.mxu0
      %v2683 = vadd.f32 0.0, %v2682
      %v2684 = vpop.f32.mrf.mxu0
      %2685 = vmatprep.mubr.f32.mxu0 0.0
      %2686 = vmatmul.mubr.f32.gmra.mxu0 %v2581
      %v2687 = vpop.f32.mrf.mxu0
      %v2688 = vadd.f32 0.0, %v2687
      %v2689 = vpop.f32.mrf.mxu0
      %2690 = vdwg.mxu0
      %v2691 = vadd.f32 %v2567, %v2653
      %v2692 = vadd.f32 %v2568, %v2658
      %v2693 = vadd.f32 %v2569, %v2663
      %v2694 = vadd.f32 %v2570, %v2668
      %v2695 = vadd.f32 %v2571, %v2673
      %v2696 = vadd.f32 %v2572, %v2678
      %v2697 = vadd.f32 %v2573, %v2683
      %v2698 = vadd.f32 %v2574, %v2688
      %v2699 = vrot.slane %v1618, 2
      %v2700 = vrot.slane %v1619, 2
      %v2701 = vsel %vm705, %v2699, %v2700
      %s2702 = scalar_lea.vmem %s3, 68
      %v2703 = vld [vmem:[%s2702] sm:$0xf]
      %v2704 = vsel %vm455, %v2701, 0
      %v2707 = vsel %vm472, %v2703, 0
      %2709 = vmatprep.subr.mxu0 0.0
      %2710 = vmatpush1.msra.mxu0 0.0
      %2711 = vmatprep.subr.mxu0 0.0
      %2712 = vmatpush1.msra.mxu0 0.0
      %2713 = vmatprep.subr.mxu0 0.0
      %2714 = vmatpush1.msra.mxu0 0.0
      %2715 = vmatprep.subr.mxu0 0.0
      %2716 = vmatpush1.msra.mxu0 0.0
      %2717 = vmatprep.subr.mxu0 0.0
      %2718 = vmatpush1.msra.mxu0 0.0
      %2719 = vmatprep.subr.mxu0 0.0
      %2720 = vmatpush1.msra.mxu0 0.0
      %2721 = vmatprep.subr.mxu0 0.0
      %2722 = vmatpush1.msra.mxu0 0.0
      %2723 = vmatprep.subr.mxu0 0.0
      %2724 = vmatpush1.msra.mxu0 0.0
      %2725 = vmatprep.subr.mxu0 0.0
      %2726 = vmatpush1.msra.mxu0 0.0
      %2727 = vmatprep.subr.mxu0 0.0
      %2728 = vmatpush1.msra.mxu0 0.0
      %2729 = vmatprep.subr.mxu0 0.0
      %2730 = vmatpush1.msra.mxu0 0.0
      %2731 = vmatprep.subr.mxu0 0.0
      %2732 = vmatpush1.msra.mxu0 0.0
      %2733 = vmatprep.subr.mxu0 0.0
      %2734 = vmatpush1.msra.mxu0 0.0
      %2735 = vmatprep.subr.mxu0 0.0
      %2736 = vmatpush1.msra.mxu0 0.0
      %2737 = vmatprep.subr.mxu0 0.0
      %2738 = vmatpush1.msra.mxu0 0.0
      %2739 = vmatprep.subr.mxu0 0.0
      %2740 = vmatpush1.msra.mxu0 %v2707
      %2741 = vmatprep.subr.mxu0 0.0
      %2742 = vmatpush2.msra.mxu0 0.0
      %2743 = vmatprep.subr.mxu0 0.0
      %2744 = vmatpush2.msra.mxu0 0.0
      %2745 = vmatprep.subr.mxu0 0.0
      %2746 = vmatpush2.msra.mxu0 0.0
      %2747 = vmatprep.subr.mxu0 0.0
      %2748 = vmatpush2.msra.mxu0 0.0
      %2749 = vmatprep.subr.mxu0 0.0
      %2750 = vmatpush2.msra.mxu0 0.0
      %2751 = vmatprep.subr.mxu0 0.0
      %2752 = vmatpush2.msra.mxu0 0.0
      %2753 = vmatprep.subr.mxu0 0.0
      %2754 = vmatpush2.msra.mxu0 0.0
      %2755 = vmatprep.subr.mxu0 0.0
      %2756 = vmatpush2.msra.mxu0 0.0
      %2757 = vmatprep.subr.mxu0 0.0
      %2758 = vmatpush2.msra.mxu0 0.0
      %2759 = vmatprep.subr.mxu0 0.0
      %2760 = vmatpush2.msra.mxu0 0.0
      %2761 = vmatprep.subr.mxu0 0.0
      %2762 = vmatpush2.msra.mxu0 0.0
      %2763 = vmatprep.subr.mxu0 0.0
      %2764 = vmatpush2.msra.mxu0 0.0
      %2765 = vmatprep.subr.mxu0 0.0
      %2766 = vmatpush2.msra.mxu0 0.0
      %2767 = vmatprep.subr.mxu0 0.0
      %2768 = vmatpush2.msra.mxu0 0.0
      %2769 = vmatprep.subr.mxu0 0.0
      %2770 = vmatpush2.msra.mxu0 0.0
      %2771 = vmatprep.subr.mxu0 0.0
      %2772 = vmatpush2.msra.mxu0 0.0
      %2773 = vmatprep.mubr.f32.mxu0 0.0
      %2774 = vmatmul.mubr.f32.gmra.mxu0 %v1958
      %v2775 = vpop.f32.mrf.mxu0
      %v2776 = vadd.f32 0.0, %v2775
      %v2777 = vpop.f32.mrf.mxu0
      %2778 = vmatprep.mubr.f32.mxu0 0.0
      %2779 = vmatmul.mubr.f32.gmra.mxu0 %v1960
      %v2780 = vpop.f32.mrf.mxu0
      %v2781 = vadd.f32 0.0, %v2780
      %v2782 = vpop.f32.mrf.mxu0
      %2783 = vmatprep.mubr.f32.mxu0 0.0
      %2784 = vmatmul.mubr.f32.gmra.mxu0 %v1962
      %v2785 = vpop.f32.mrf.mxu0
      %v2786 = vadd.f32 0.0, %v2785
      %v2787 = vpop.f32.mrf.mxu0
      %2788 = vmatprep.mubr.f32.mxu0 0.0
      %2789 = vmatmul.mubr.f32.gmra.mxu0 %v1964
      %v2790 = vpop.f32.mrf.mxu0
      %v2791 = vadd.f32 0.0, %v2790
      %v2792 = vpop.f32.mrf.mxu0
      %2793 = vmatprep.mubr.f32.mxu0 0.0
      %2794 = vmatmul.mubr.f32.gmra.mxu0 %v1966
      %v2795 = vpop.f32.mrf.mxu0
      %v2796 = vadd.f32 0.0, %v2795
      %v2797 = vpop.f32.mrf.mxu0
      %2798 = vmatprep.mubr.f32.mxu0 0.0
      %2799 = vmatmul.mubr.f32.gmra.mxu0 %v1968
      %v2800 = vpop.f32.mrf.mxu0
      %v2801 = vadd.f32 0.0, %v2800
      %v2802 = vpop.f32.mrf.mxu0
      %2803 = vmatprep.mubr.f32.mxu0 0.0
      %2804 = vmatmul.mubr.f32.gmra.mxu0 %v2336
      %v2805 = vpop.f32.mrf.mxu0
      %v2806 = vadd.f32 0.0, %v2805
      %v2807 = vpop.f32.mrf.mxu0
      %2808 = vmatprep.mubr.f32.mxu0 0.0
      %2809 = vmatmul.mubr.f32.gmra.mxu0 %v2704
      %v2810 = vpop.f32.mrf.mxu0
      %v2811 = vadd.f32 0.0, %v2810
      %v2812 = vpop.f32.mrf.mxu0
      %2813 = vdwg.mxu0
      %v2814 = vadd.f32 %v2691, %v2776
      %v2815 = vadd.f32 %v2692, %v2781
      %v2816 = vadd.f32 %v2693, %v2786
      %v2817 = vadd.f32 %v2694, %v2791
      %v2818 = vadd.f32 %v2695, %v2796
      %v2819 = vadd.f32 %v2696, %v2801
      %v2820 = vadd.f32 %v2697, %v2806
      %v2821 = vadd.f32 %v2698, %v2811
      %v2822 = vld [vmem:[%s372] sm:$0xff]
      %v2823 = vld [vmem:[%s372 + $0x8] sm:$0x3]
      %v2824 = vld [vmem:[%s372 + $0x10] sm:$0xff]
      %v2825 = vld [vmem:[%s372 + $0x18] sm:$0x3]
      %v2826 = vld [vmem:[%s372 + $0x20] sm:$0xff]
      %v2827 = vld [vmem:[%s372 + $0x28] sm:$0x3]
      %v2828 = vld [vmem:[%s372 + $0x30] sm:$0xff]
      %v2829 = vld [vmem:[%s372 + $0x38] sm:$0x3]
      %v2830 = vld [vmem:[%s372 + $0x40] sm:$0xff]
      %v2831 = vld [vmem:[%s372 + $0x48] sm:$0x3]
      %v2832 = vld [vmem:[%s372 + $0x50] sm:$0xff]
      %v2833 = vld [vmem:[%s372 + $0x58] sm:$0x3]
      %v2834 = vld [vmem:[%s372 + $0x60] sm:$0xff]
      %v2835 = vld [vmem:[%s372 + $0x68] sm:$0x3]
      %v2836 = vld [vmem:[%s372 + $0x70] sm:$0xff]
      %v2837 = vld [vmem:[%s372 + $0x78] sm:$0x3]
      %v2838 = vld [vmem:[%s372 + $0x80] sm:$0xff]
      %v2839 = vld [vmem:[%s372 + $0x88] sm:$0x3]
      %v2840 = vld [vmem:[%s372 + $0x90] sm:$0xff]
      %v2841 = vld [vmem:[%s372 + $0x98] sm:$0x3]
      %s2842 = scalar_lea.vmem %s3, 72
      %v2843 = vld [vmem:[%s2842] sm:$0xf]
      %v2845 = vsel %vm455, %v2822, 0
      %v2848 = vsel %vm455, %v2824, 0
      %v2851 = vsel %vm455, %v2826, 0
      %v2854 = vsel %vm455, %v2828, 0
      %v2857 = vsel %vm455, %v2830, 0
      %v2860 = vsel %vm455, %v2832, 0
      %v2863 = vsel %vm455, %v2834, 0
      %v2866 = vsel %vm455, %v2836, 0
      %v2869 = vsel %vm472, %v2843, 0
      %2871 = vmatprep.subr.mxu0 0.0
      %2872 = vmatpush1.msra.mxu0 0.0
      %2873 = vmatprep.subr.mxu0 0.0
      %2874 = vmatpush1.msra.mxu0 0.0
      %2875 = vmatprep.subr.mxu0 0.0
      %2876 = vmatpush1.msra.mxu0 0.0
      %2877 = vmatprep.subr.mxu0 0.0
      %2878 = vmatpush1.msra.mxu0 0.0
      %2879 = vmatprep.subr.mxu0 0.0
      %2880 = vmatpush1.msra.mxu0 0.0
      %2881 = vmatprep.subr.mxu0 0.0
      %2882 = vmatpush1.msra.mxu0 0.0
      %2883 = vmatprep.subr.mxu0 0.0
      %2884 = vmatpush1.msra.mxu0 0.0
      %2885 = vmatprep.subr.mxu0 0.0
      %2886 = vmatpush1.msra.mxu0 0.0
      %2887 = vmatprep.subr.mxu0 0.0
      %2888 = vmatpush1.msra.mxu0 0.0
      %2889 = vmatprep.subr.mxu0 0.0
      %2890 = vmatpush1.msra.mxu0 0.0
      %2891 = vmatprep.subr.mxu0 0.0
      %2892 = vmatpush1.msra.mxu0 0.0
      %2893 = vmatprep.subr.mxu0 0.0
      %2894 = vmatpush1.msra.mxu0 0.0
      %2895 = vmatprep.subr.mxu0 0.0
      %2896 = vmatpush1.msra.mxu0 0.0
      %2897 = vmatprep.subr.mxu0 0.0
      %2898 = vmatpush1.msra.mxu0 0.0
      %2899 = vmatprep.subr.mxu0 0.0
      %2900 = vmatpush1.msra.mxu0 0.0
      %2901 = vmatprep.subr.mxu0 0.0
      %2902 = vmatpush1.msra.mxu0 %v2869
      %2903 = vmatprep.subr.mxu0 0.0
      %2904 = vmatpush2.msra.mxu0 0.0
      %2905 = vmatprep.subr.mxu0 0.0
      %2906 = vmatpush2.msra.mxu0 0.0
      %2907 = vmatprep.subr.mxu0 0.0
      %2908 = vmatpush2.msra.mxu0 0.0
      %2909 = vmatprep.subr.mxu0 0.0
      %2910 = vmatpush2.msra.mxu0 0.0
      %2911 = vmatprep.subr.mxu0 0.0
      %2912 = vmatpush2.msra.mxu0 0.0
      %2913 = vmatprep.subr.mxu0 0.0
      %2914 = vmatpush2.msra.mxu0 0.0
      %2915 = vmatprep.subr.mxu0 0.0
      %2916 = vmatpush2.msra.mxu0 0.0
      %2917 = vmatprep.subr.mxu0 0.0
      %2918 = vmatpush2.msra.mxu0 0.0
      %2919 = vmatprep.subr.mxu0 0.0
      %2920 = vmatpush2.msra.mxu0 0.0
      %2921 = vmatprep.subr.mxu0 0.0
      %2922 = vmatpush2.msra.mxu0 0.0
      %2923 = vmatprep.subr.mxu0 0.0
      %2924 = vmatpush2.msra.mxu0 0.0
      %2925 = vmatprep.subr.mxu0 0.0
      %2926 = vmatpush2.msra.mxu0 0.0
      %2927 = vmatprep.subr.mxu0 0.0
      %2928 = vmatpush2.msra.mxu0 0.0
      %2929 = vmatprep.subr.mxu0 0.0
      %2930 = vmatpush2.msra.mxu0 0.0
      %2931 = vmatprep.subr.mxu0 0.0
      %2932 = vmatpush2.msra.mxu0 0.0
      %2933 = vmatprep.subr.mxu0 0.0
      %2934 = vmatpush2.msra.mxu0 0.0
      %2935 = vmatprep.mubr.f32.mxu0 0.0
      %2936 = vmatmul.mubr.f32.gmra.mxu0 %v2845
      %v2937 = vpop.f32.mrf.mxu0
      %v2938 = vadd.f32 0.0, %v2937
      %v2939 = vpop.f32.mrf.mxu0
      %2940 = vmatprep.mubr.f32.mxu0 0.0
      %2941 = vmatmul.mubr.f32.gmra.mxu0 %v2848
      %v2942 = vpop.f32.mrf.mxu0
      %v2943 = vadd.f32 0.0, %v2942
      %v2944 = vpop.f32.mrf.mxu0
      %2945 = vmatprep.mubr.f32.mxu0 0.0
      %2946 = vmatmul.mubr.f32.gmra.mxu0 %v2851
      %v2947 = vpop.f32.mrf.mxu0
      %v2948 = vadd.f32 0.0, %v2947
      %v2949 = vpop.f32.mrf.mxu0
      %2950 = vmatprep.mubr.f32.mxu0 0.0
      %2951 = vmatmul.mubr.f32.gmra.mxu0 %v2854
      %v2952 = vpop.f32.mrf.mxu0
      %v2953 = vadd.f32 0.0, %v2952
      %v2954 = vpop.f32.mrf.mxu0
      %2955 = vmatprep.mubr.f32.mxu0 0.0
      %2956 = vmatmul.mubr.f32.gmra.mxu0 %v2857
      %v2957 = vpop.f32.mrf.mxu0
      %v2958 = vadd.f32 0.0, %v2957
      %v2959 = vpop.f32.mrf.mxu0
      %2960 = vmatprep.mubr.f32.mxu0 0.0
      %2961 = vmatmul.mubr.f32.gmra.mxu0 %v2860
      %v2962 = vpop.f32.mrf.mxu0
      %v2963 = vadd.f32 0.0, %v2962
      %v2964 = vpop.f32.mrf.mxu0
      %2965 = vmatprep.mubr.f32.mxu0 0.0
      %2966 = vmatmul.mubr.f32.gmra.mxu0 %v2863
      %v2967 = vpop.f32.mrf.mxu0
      %v2968 = vadd.f32 0.0, %v2967
      %v2969 = vpop.f32.mrf.mxu0
      %2970 = vmatprep.mubr.f32.mxu0 0.0
      %2971 = vmatmul.mubr.f32.gmra.mxu0 %v2866
      %v2972 = vpop.f32.mrf.mxu0
      %v2973 = vadd.f32 0.0, %v2972
      %v2974 = vpop.f32.mrf.mxu0
      %2975 = vdwg.mxu0
      %v2976 = vadd.f32 %v2814, %v2938
      %v2977 = vadd.f32 %v2815, %v2943
      %v2978 = vadd.f32 %v2816, %v2948
      %v2979 = vadd.f32 %v2817, %v2953
      %v2980 = vadd.f32 %v2818, %v2958
      %v2981 = vadd.f32 %v2819, %v2963
      %v2982 = vadd.f32 %v2820, %v2968
      %v2983 = vadd.f32 %v2821, %v2973
      %v2992 = vrot.slane %v2822, 1
      %v2993 = vrot.slane %v2823, 1
      %v2994 = vsel %vm428, %v2992, %v2993
      %v2995 = vrot.slane %v2824, 1
      %v2996 = vrot.slane %v2825, 1
      %v2997 = vsel %vm428, %v2995, %v2996
      %v2998 = vrot.slane %v2826, 1
      %v2999 = vrot.slane %v2827, 1
      %v3000 = vsel %vm428, %v2998, %v2999
      %v3001 = vrot.slane %v2828, 1
      %v3002 = vrot.slane %v2829, 1
      %v3003 = vsel %vm428, %v3001, %v3002
      %v3004 = vrot.slane %v2830, 1
      %v3005 = vrot.slane %v2831, 1
      %v3006 = vsel %vm428, %v3004, %v3005
      %v3007 = vrot.slane %v2832, 1
      %v3008 = vrot.slane %v2833, 1
      %v3009 = vsel %vm428, %v3007, %v3008
      %v3010 = vrot.slane %v2834, 1
      %v3011 = vrot.slane %v2835, 1
      %v3012 = vsel %vm428, %v3010, %v3011
      %v3013 = vrot.slane %v2836, 1
      %v3014 = vrot.slane %v2837, 1
      %v3015 = vsel %vm428, %v3013, %v3014
      %s3016 = scalar_lea.vmem %s3, 76
      %v3017 = vld [vmem:[%s3016] sm:$0xf]
      %v3018 = vsel %vm455, %v2994, 0
      %v3020 = vsel %vm455, %v2997, 0
      %v3022 = vsel %vm455, %v3000, 0
      %v3024 = vsel %vm455, %v3003, 0
      %v3026 = vsel %vm455, %v3006, 0
      %v3028 = vsel %vm455, %v3009, 0
      %v3030 = vsel %vm455, %v3012, 0
      %v3032 = vsel %vm455, %v3015, 0
      %v3035 = vsel %vm472, %v3017, 0
      %3037 = vmatprep.subr.mxu0 0.0
      %3038 = vmatpush1.msra.mxu0 0.0
      %3039 = vmatprep.subr.mxu0 0.0
      %3040 = vmatpush1.msra.mxu0 0.0
      %3041 = vmatprep.subr.mxu0 0.0
      %3042 = vmatpush1.msra.mxu0 0.0
      %3043 = vmatprep.subr.mxu0 0.0
      %3044 = vmatpush1.msra.mxu0 0.0
      %3045 = vmatprep.subr.mxu0 0.0
      %3046 = vmatpush1.msra.mxu0 0.0
      %3047 = vmatprep.subr.mxu0 0.0
      %3048 = vmatpush1.msra.mxu0 0.0
      %3049 = vmatprep.subr.mxu0 0.0
      %3050 = vmatpush1.msra.mxu0 0.0
      %3051 = vmatprep.subr.mxu0 0.0
      %3052 = vmatpush1.msra.mxu0 0.0
      %3053 = vmatprep.subr.mxu0 0.0
      %3054 = vmatpush1.msra.mxu0 0.0
      %3055 = vmatprep.subr.mxu0 0.0
      %3056 = vmatpush1.msra.mxu0 0.0
      %3057 = vmatprep.subr.mxu0 0.0
      %3058 = vmatpush1.msra.mxu0 0.0
      %3059 = vmatprep.subr.mxu0 0.0
      %3060 = vmatpush1.msra.mxu0 0.0
      %3061 = vmatprep.subr.mxu0 0.0
      %3062 = vmatpush1.msra.mxu0 0.0
      %3063 = vmatprep.subr.mxu0 0.0
      %3064 = vmatpush1.msra.mxu0 0.0
      %3065 = vmatprep.subr.mxu0 0.0
      %3066 = vmatpush1.msra.mxu0 0.0
      %3067 = vmatprep.subr.mxu0 0.0
      %3068 = vmatpush1.msra.mxu0 %v3035
      %3069 = vmatprep.subr.mxu0 0.0
      %3070 = vmatpush2.msra.mxu0 0.0
      %3071 = vmatprep.subr.mxu0 0.0
      %3072 = vmatpush2.msra.mxu0 0.0
      %3073 = vmatprep.subr.mxu0 0.0
      %3074 = vmatpush2.msra.mxu0 0.0
      %3075 = vmatprep.subr.mxu0 0.0
      %3076 = vmatpush2.msra.mxu0 0.0
      %3077 = vmatprep.subr.mxu0 0.0
      %3078 = vmatpush2.msra.mxu0 0.0
      %3079 = vmatprep.subr.mxu0 0.0
      %3080 = vmatpush2.msra.mxu0 0.0
      %3081 = vmatprep.subr.mxu0 0.0
      %3082 = vmatpush2.msra.mxu0 0.0
      %3083 = vmatprep.subr.mxu0 0.0
      %3084 = vmatpush2.msra.mxu0 0.0
      %3085 = vmatprep.subr.mxu0 0.0
      %3086 = vmatpush2.msra.mxu0 0.0
      %3087 = vmatprep.subr.mxu0 0.0
      %3088 = vmatpush2.msra.mxu0 0.0
      %3089 = vmatprep.subr.mxu0 0.0
      %3090 = vmatpush2.msra.mxu0 0.0
      %3091 = vmatprep.subr.mxu0 0.0
      %3092 = vmatpush2.msra.mxu0 0.0
      %3093 = vmatprep.subr.mxu0 0.0
      %3094 = vmatpush2.msra.mxu0 0.0
      %3095 = vmatprep.subr.mxu0 0.0
      %3096 = vmatpush2.msra.mxu0 0.0
      %3097 = vmatprep.subr.mxu0 0.0
      %3098 = vmatpush2.msra.mxu0 0.0
      %3099 = vmatprep.subr.mxu0 0.0
      %3100 = vmatpush2.msra.mxu0 0.0
      %3101 = vmatprep.mubr.f32.mxu0 0.0
      %3102 = vmatmul.mubr.f32.gmra.mxu0 %v3018
      %v3103 = vpop.f32.mrf.mxu0
      %v3104 = vadd.f32 0.0, %v3103
      %v3105 = vpop.f32.mrf.mxu0
      %3106 = vmatprep.mubr.f32.mxu0 0.0
      %3107 = vmatmul.mubr.f32.gmra.mxu0 %v3020
      %v3108 = vpop.f32.mrf.mxu0
      %v3109 = vadd.f32 0.0, %v3108
      %v3110 = vpop.f32.mrf.mxu0
      %3111 = vmatprep.mubr.f32.mxu0 0.0
      %3112 = vmatmul.mubr.f32.gmra.mxu0 %v3022
      %v3113 = vpop.f32.mrf.mxu0
      %v3114 = vadd.f32 0.0, %v3113
      %v3115 = vpop.f32.mrf.mxu0
      %3116 = vmatprep.mubr.f32.mxu0 0.0
      %3117 = vmatmul.mubr.f32.gmra.mxu0 %v3024
      %v3118 = vpop.f32.mrf.mxu0
      %v3119 = vadd.f32 0.0, %v3118
      %v3120 = vpop.f32.mrf.mxu0
      %3121 = vmatprep.mubr.f32.mxu0 0.0
      %3122 = vmatmul.mubr.f32.gmra.mxu0 %v3026
      %v3123 = vpop.f32.mrf.mxu0
      %v3124 = vadd.f32 0.0, %v3123
      %v3125 = vpop.f32.mrf.mxu0
      %3126 = vmatprep.mubr.f32.mxu0 0.0
      %3127 = vmatmul.mubr.f32.gmra.mxu0 %v3028
      %v3128 = vpop.f32.mrf.mxu0
      %v3129 = vadd.f32 0.0, %v3128
      %v3130 = vpop.f32.mrf.mxu0
      %3131 = vmatprep.mubr.f32.mxu0 0.0
      %3132 = vmatmul.mubr.f32.gmra.mxu0 %v3030
      %v3133 = vpop.f32.mrf.mxu0
      %v3134 = vadd.f32 0.0, %v3133
      %v3135 = vpop.f32.mrf.mxu0
      %3136 = vmatprep.mubr.f32.mxu0 0.0
      %3137 = vmatmul.mubr.f32.gmra.mxu0 %v3032
      %v3138 = vpop.f32.mrf.mxu0
      %v3139 = vadd.f32 0.0, %v3138
      %v3140 = vpop.f32.mrf.mxu0
      %3141 = vdwg.mxu0
      %v3142 = vadd.f32 %v2976, %v3104
      %v3143 = vadd.f32 %v2977, %v3109
      %v3144 = vadd.f32 %v2978, %v3114
      %v3145 = vadd.f32 %v2979, %v3119
      %v3146 = vadd.f32 %v2980, %v3124
      %v3147 = vadd.f32 %v2981, %v3129
      %v3148 = vadd.f32 %v2982, %v3134
      %v3149 = vadd.f32 %v2983, %v3139
      %v3150 = vrot.slane %v2822, 2
      %v3151 = vrot.slane %v2823, 2
      %v3152 = vsel %vm705, %v3150, %v3151
      %v3153 = vrot.slane %v2824, 2
      %v3154 = vrot.slane %v2825, 2
      %v3155 = vsel %vm705, %v3153, %v3154
      %v3156 = vrot.slane %v2826, 2
      %v3157 = vrot.slane %v2827, 2
      %v3158 = vsel %vm705, %v3156, %v3157
      %v3159 = vrot.slane %v2828, 2
      %v3160 = vrot.slane %v2829, 2
      %v3161 = vsel %vm705, %v3159, %v3160
      %v3162 = vrot.slane %v2830, 2
      %v3163 = vrot.slane %v2831, 2
      %v3164 = vsel %vm705, %v3162, %v3163
      %v3165 = vrot.slane %v2832, 2
      %v3166 = vrot.slane %v2833, 2
      %v3167 = vsel %vm705, %v3165, %v3166
      %v3168 = vrot.slane %v2834, 2
      %v3169 = vrot.slane %v2835, 2
      %v3170 = vsel %vm705, %v3168, %v3169
      %v3171 = vrot.slane %v2836, 2
      %v3172 = vrot.slane %v2837, 2
      %v3173 = vsel %vm705, %v3171, %v3172
      %s3174 = scalar_lea.vmem %s3, 80
      %v3175 = vld [vmem:[%s3174] sm:$0xf]
      %v3176 = vsel %vm455, %v3152, 0
      %v3178 = vsel %vm455, %v3155, 0
      %v3180 = vsel %vm455, %v3158, 0
      %v3182 = vsel %vm455, %v3161, 0
      %v3184 = vsel %vm455, %v3164, 0
      %v3186 = vsel %vm455, %v3167, 0
      %v3188 = vsel %vm455, %v3170, 0
      %v3190 = vsel %vm455, %v3173, 0
      %v3193 = vsel %vm472, %v3175, 0
      %3195 = vmatprep.subr.mxu0 0.0
      %3196 = vmatpush1.msra.mxu0 0.0
      %3197 = vmatprep.subr.mxu0 0.0
      %3198 = vmatpush1.msra.mxu0 0.0
      %3199 = vmatprep.subr.mxu0 0.0
      %3200 = vmatpush1.msra.mxu0 0.0
      %3201 = vmatprep.subr.mxu0 0.0
      %3202 = vmatpush1.msra.mxu0 0.0
      %3203 = vmatprep.subr.mxu0 0.0
      %3204 = vmatpush1.msra.mxu0 0.0
      %3205 = vmatprep.subr.mxu0 0.0
      %3206 = vmatpush1.msra.mxu0 0.0
      %3207 = vmatprep.subr.mxu0 0.0
      %3208 = vmatpush1.msra.mxu0 0.0
      %3209 = vmatprep.subr.mxu0 0.0
      %3210 = vmatpush1.msra.mxu0 0.0
      %3211 = vmatprep.subr.mxu0 0.0
      %3212 = vmatpush1.msra.mxu0 0.0
      %3213 = vmatprep.subr.mxu0 0.0
      %3214 = vmatpush1.msra.mxu0 0.0
      %3215 = vmatprep.subr.mxu0 0.0
      %3216 = vmatpush1.msra.mxu0 0.0
      %3217 = vmatprep.subr.mxu0 0.0
      %3218 = vmatpush1.msra.mxu0 0.0
      %3219 = vmatprep.subr.mxu0 0.0
      %3220 = vmatpush1.msra.mxu0 0.0
      %3221 = vmatprep.subr.mxu0 0.0
      %3222 = vmatpush1.msra.mxu0 0.0
      %3223 = vmatprep.subr.mxu0 0.0
      %3224 = vmatpush1.msra.mxu0 0.0
      %3225 = vmatprep.subr.mxu0 0.0
      %3226 = vmatpush1.msra.mxu0 %v3193
      %3227 = vmatprep.subr.mxu0 0.0
      %3228 = vmatpush2.msra.mxu0 0.0
      %3229 = vmatprep.subr.mxu0 0.0
      %3230 = vmatpush2.msra.mxu0 0.0
      %3231 = vmatprep.subr.mxu0 0.0
      %3232 = vmatpush2.msra.mxu0 0.0
      %3233 = vmatprep.subr.mxu0 0.0
      %3234 = vmatpush2.msra.mxu0 0.0
      %3235 = vmatprep.subr.mxu0 0.0
      %3236 = vmatpush2.msra.mxu0 0.0
      %3237 = vmatprep.subr.mxu0 0.0
      %3238 = vmatpush2.msra.mxu0 0.0
      %3239 = vmatprep.subr.mxu0 0.0
      %3240 = vmatpush2.msra.mxu0 0.0
      %3241 = vmatprep.subr.mxu0 0.0
      %3242 = vmatpush2.msra.mxu0 0.0
      %3243 = vmatprep.subr.mxu0 0.0
      %3244 = vmatpush2.msra.mxu0 0.0
      %3245 = vmatprep.subr.mxu0 0.0
      %3246 = vmatpush2.msra.mxu0 0.0
      %3247 = vmatprep.subr.mxu0 0.0
      %3248 = vmatpush2.msra.mxu0 0.0
      %3249 = vmatprep.subr.mxu0 0.0
      %3250 = vmatpush2.msra.mxu0 0.0
      %3251 = vmatprep.subr.mxu0 0.0
      %3252 = vmatpush2.msra.mxu0 0.0
      %3253 = vmatprep.subr.mxu0 0.0
      %3254 = vmatpush2.msra.mxu0 0.0
      %3255 = vmatprep.subr.mxu0 0.0
      %3256 = vmatpush2.msra.mxu0 0.0
      %3257 = vmatprep.subr.mxu0 0.0
      %3258 = vmatpush2.msra.mxu0 0.0
      %3259 = vmatprep.mubr.f32.mxu0 0.0
      %3260 = vmatmul.mubr.f32.gmra.mxu0 %v3176
      %v3261 = vpop.f32.mrf.mxu0
      %v3262 = vadd.f32 0.0, %v3261
      %v3263 = vpop.f32.mrf.mxu0
      %3264 = vmatprep.mubr.f32.mxu0 0.0
      %3265 = vmatmul.mubr.f32.gmra.mxu0 %v3178
      %v3266 = vpop.f32.mrf.mxu0
      %v3267 = vadd.f32 0.0, %v3266
      %v3268 = vpop.f32.mrf.mxu0
      %3269 = vmatprep.mubr.f32.mxu0 0.0
      %3270 = vmatmul.mubr.f32.gmra.mxu0 %v3180
      %v3271 = vpop.f32.mrf.mxu0
      %v3272 = vadd.f32 0.0, %v3271
      %v3273 = vpop.f32.mrf.mxu0
      %3274 = vmatprep.mubr.f32.mxu0 0.0
      %3275 = vmatmul.mubr.f32.gmra.mxu0 %v3182
      %v3276 = vpop.f32.mrf.mxu0
      %v3277 = vadd.f32 0.0, %v3276
      %v3278 = vpop.f32.mrf.mxu0
      %3279 = vmatprep.mubr.f32.mxu0 0.0
      %3280 = vmatmul.mubr.f32.gmra.mxu0 %v3184
      %v3281 = vpop.f32.mrf.mxu0
      %v3282 = vadd.f32 0.0, %v3281
      %v3283 = vpop.f32.mrf.mxu0
      %3284 = vmatprep.mubr.f32.mxu0 0.0
      %3285 = vmatmul.mubr.f32.gmra.mxu0 %v3186
      %v3286 = vpop.f32.mrf.mxu0
      %v3287 = vadd.f32 0.0, %v3286
      %v3288 = vpop.f32.mrf.mxu0
      %3289 = vmatprep.mubr.f32.mxu0 0.0
      %3290 = vmatmul.mubr.f32.gmra.mxu0 %v3188
      %v3291 = vpop.f32.mrf.mxu0
      %v3292 = vadd.f32 0.0, %v3291
      %v3293 = vpop.f32.mrf.mxu0
      %3294 = vmatprep.mubr.f32.mxu0 0.0
      %3295 = vmatmul.mubr.f32.gmra.mxu0 %v3190
      %v3296 = vpop.f32.mrf.mxu0
      %v3297 = vadd.f32 0.0, %v3296
      %v3298 = vpop.f32.mrf.mxu0
      %3299 = vdwg.mxu0
      %v3300 = vadd.f32 %v3142, %v3262
      %v3301 = vadd.f32 %v3143, %v3267
      %v3302 = vadd.f32 %v3144, %v3272
      %v3303 = vadd.f32 %v3145, %v3277
      %v3304 = vadd.f32 %v3146, %v3282
      %v3305 = vadd.f32 %v3147, %v3287
      %v3306 = vadd.f32 %v3148, %v3292
      %v3307 = vadd.f32 %v3149, %v3297
      %s3308 = scalar_lea.vmem %s3, 84
      %v3309 = vld [vmem:[%s3308] sm:$0xf]
      %v3311 = vsel %vm455, %v2838, 0
      %v3314 = vsel %vm472, %v3309, 0
      %3316 = vmatprep.subr.mxu0 0.0
      %3317 = vmatpush1.msra.mxu0 0.0
      %3318 = vmatprep.subr.mxu0 0.0
      %3319 = vmatpush1.msra.mxu0 0.0
      %3320 = vmatprep.subr.mxu0 0.0
      %3321 = vmatpush1.msra.mxu0 0.0
      %3322 = vmatprep.subr.mxu0 0.0
      %3323 = vmatpush1.msra.mxu0 0.0
      %3324 = vmatprep.subr.mxu0 0.0
      %3325 = vmatpush1.msra.mxu0 0.0
      %3326 = vmatprep.subr.mxu0 0.0
      %3327 = vmatpush1.msra.mxu0 0.0
      %3328 = vmatprep.subr.mxu0 0.0
      %3329 = vmatpush1.msra.mxu0 0.0
      %3330 = vmatprep.subr.mxu0 0.0
      %3331 = vmatpush1.msra.mxu0 0.0
      %3332 = vmatprep.subr.mxu0 0.0
      %3333 = vmatpush1.msra.mxu0 0.0
      %3334 = vmatprep.subr.mxu0 0.0
      %3335 = vmatpush1.msra.mxu0 0.0
      %3336 = vmatprep.subr.mxu0 0.0
      %3337 = vmatpush1.msra.mxu0 0.0
      %3338 = vmatprep.subr.mxu0 0.0
      %3339 = vmatpush1.msra.mxu0 0.0
      %3340 = vmatprep.subr.mxu0 0.0
      %3341 = vmatpush1.msra.mxu0 0.0
      %3342 = vmatprep.subr.mxu0 0.0
      %3343 = vmatpush1.msra.mxu0 0.0
      %3344 = vmatprep.subr.mxu0 0.0
      %3345 = vmatpush1.msra.mxu0 0.0
      %3346 = vmatprep.subr.mxu0 0.0
      %3347 = vmatpush1.msra.mxu0 %v3314
      %3348 = vmatprep.subr.mxu0 0.0
      %3349 = vmatpush2.msra.mxu0 0.0
      %3350 = vmatprep.subr.mxu0 0.0
      %3351 = vmatpush2.msra.mxu0 0.0
      %3352 = vmatprep.subr.mxu0 0.0
      %3353 = vmatpush2.msra.mxu0 0.0
      %3354 = vmatprep.subr.mxu0 0.0
      %3355 = vmatpush2.msra.mxu0 0.0
      %3356 = vmatprep.subr.mxu0 0.0
      %3357 = vmatpush2.msra.mxu0 0.0
      %3358 = vmatprep.subr.mxu0 0.0
      %3359 = vmatpush2.msra.mxu0 0.0
      %3360 = vmatprep.subr.mxu0 0.0
      %3361 = vmatpush2.msra.mxu0 0.0
      %3362 = vmatprep.subr.mxu0 0.0
      %3363 = vmatpush2.msra.mxu0 0.0
      %3364 = vmatprep.subr.mxu0 0.0
      %3365 = vmatpush2.msra.mxu0 0.0
      %3366 = vmatprep.subr.mxu0 0.0
      %3367 = vmatpush2.msra.mxu0 0.0
      %3368 = vmatprep.subr.mxu0 0.0
      %3369 = vmatpush2.msra.mxu0 0.0
      %3370 = vmatprep.subr.mxu0 0.0
      %3371 = vmatpush2.msra.mxu0 0.0
      %3372 = vmatprep.subr.mxu0 0.0
      %3373 = vmatpush2.msra.mxu0 0.0
      %3374 = vmatprep.subr.mxu0 0.0
      %3375 = vmatpush2.msra.mxu0 0.0
      %3376 = vmatprep.subr.mxu0 0.0
      %3377 = vmatpush2.msra.mxu0 0.0
      %3378 = vmatprep.subr.mxu0 0.0
      %3379 = vmatpush2.msra.mxu0 0.0
      %3380 = vmatprep.mubr.f32.mxu0 0.0
      %3381 = vmatmul.mubr.f32.gmra.mxu0 %v2848
      %v3382 = vpop.f32.mrf.mxu0
      %v3383 = vadd.f32 0.0, %v3382
      %v3384 = vpop.f32.mrf.mxu0
      %3385 = vmatprep.mubr.f32.mxu0 0.0
      %3386 = vmatmul.mubr.f32.gmra.mxu0 %v2851
      %v3387 = vpop.f32.mrf.mxu0
      %v3388 = vadd.f32 0.0, %v3387
      %v3389 = vpop.f32.mrf.mxu0
      %3390 = vmatprep.mubr.f32.mxu0 0.0
      %3391 = vmatmul.mubr.f32.gmra.mxu0 %v2854
      %v3392 = vpop.f32.mrf.mxu0
      %v3393 = vadd.f32 0.0, %v3392
      %v3394 = vpop.f32.mrf.mxu0
      %3395 = vmatprep.mubr.f32.mxu0 0.0
      %3396 = vmatmul.mubr.f32.gmra.mxu0 %v2857
      %v3397 = vpop.f32.mrf.mxu0
      %v3398 = vadd.f32 0.0, %v3397
      %v3399 = vpop.f32.mrf.mxu0
      %3400 = vmatprep.mubr.f32.mxu0 0.0
      %3401 = vmatmul.mubr.f32.gmra.mxu0 %v2860
      %v3402 = vpop.f32.mrf.mxu0
      %v3403 = vadd.f32 0.0, %v3402
      %v3404 = vpop.f32.mrf.mxu0
      %3405 = vmatprep.mubr.f32.mxu0 0.0
      %3406 = vmatmul.mubr.f32.gmra.mxu0 %v2863
      %v3407 = vpop.f32.mrf.mxu0
      %v3408 = vadd.f32 0.0, %v3407
      %v3409 = vpop.f32.mrf.mxu0
      %3410 = vmatprep.mubr.f32.mxu0 0.0
      %3411 = vmatmul.mubr.f32.gmra.mxu0 %v2866
      %v3412 = vpop.f32.mrf.mxu0
      %v3413 = vadd.f32 0.0, %v3412
      %v3414 = vpop.f32.mrf.mxu0
      %3415 = vmatprep.mubr.f32.mxu0 0.0
      %3416 = vmatmul.mubr.f32.gmra.mxu0 %v3311
      %v3417 = vpop.f32.mrf.mxu0
      %v3418 = vadd.f32 0.0, %v3417
      %v3419 = vpop.f32.mrf.mxu0
      %3420 = vdwg.mxu0
      %v3421 = vadd.f32 %v3300, %v3383
      %v3422 = vadd.f32 %v3301, %v3388
      %v3423 = vadd.f32 %v3302, %v3393
      %v3424 = vadd.f32 %v3303, %v3398
      %v3425 = vadd.f32 %v3304, %v3403
      %v3426 = vadd.f32 %v3305, %v3408
      %v3427 = vadd.f32 %v3306, %v3413
      %v3428 = vadd.f32 %v3307, %v3418
      %v3430 = vrot.slane %v2838, 1
      %v3431 = vrot.slane %v2839, 1
      %v3432 = vsel %vm428, %v3430, %v3431
      %s3433 = scalar_lea.vmem %s3, 88
      %v3434 = vld [vmem:[%s3433] sm:$0xf]
      %v3435 = vsel %vm455, %v3432, 0
      %v3438 = vsel %vm472, %v3434, 0
      %3440 = vmatprep.subr.mxu0 0.0
      %3441 = vmatpush1.msra.mxu0 0.0
      %3442 = vmatprep.subr.mxu0 0.0
      %3443 = vmatpush1.msra.mxu0 0.0
      %3444 = vmatprep.subr.mxu0 0.0
      %3445 = vmatpush1.msra.mxu0 0.0
      %3446 = vmatprep.subr.mxu0 0.0
      %3447 = vmatpush1.msra.mxu0 0.0
      %3448 = vmatprep.subr.mxu0 0.0
      %3449 = vmatpush1.msra.mxu0 0.0
      %3450 = vmatprep.subr.mxu0 0.0
      %3451 = vmatpush1.msra.mxu0 0.0
      %3452 = vmatprep.subr.mxu0 0.0
      %3453 = vmatpush1.msra.mxu0 0.0
      %3454 = vmatprep.subr.mxu0 0.0
      %3455 = vmatpush1.msra.mxu0 0.0
      %3456 = vmatprep.subr.mxu0 0.0
      %3457 = vmatpush1.msra.mxu0 0.0
      %3458 = vmatprep.subr.mxu0 0.0
      %3459 = vmatpush1.msra.mxu0 0.0
      %3460 = vmatprep.subr.mxu0 0.0
      %3461 = vmatpush1.msra.mxu0 0.0
      %3462 = vmatprep.subr.mxu0 0.0
      %3463 = vmatpush1.msra.mxu0 0.0
      %3464 = vmatprep.subr.mxu0 0.0
      %3465 = vmatpush1.msra.mxu0 0.0
      %3466 = vmatprep.subr.mxu0 0.0
      %3467 = vmatpush1.msra.mxu0 0.0
      %3468 = vmatprep.subr.mxu0 0.0
      %3469 = vmatpush1.msra.mxu0 0.0
      %3470 = vmatprep.subr.mxu0 0.0
      %3471 = vmatpush1.msra.mxu0 %v3438
      %3472 = vmatprep.subr.mxu0 0.0
      %3473 = vmatpush2.msra.mxu0 0.0
      %3474 = vmatprep.subr.mxu0 0.0
      %3475 = vmatpush2.msra.mxu0 0.0
      %3476 = vmatprep.subr.mxu0 0.0
      %3477 = vmatpush2.msra.mxu0 0.0
      %3478 = vmatprep.subr.mxu0 0.0
      %3479 = vmatpush2.msra.mxu0 0.0
      %3480 = vmatprep.subr.mxu0 0.0
      %3481 = vmatpush2.msra.mxu0 0.0
      %3482 = vmatprep.subr.mxu0 0.0
      %3483 = vmatpush2.msra.mxu0 0.0
      %3484 = vmatprep.subr.mxu0 0.0
      %3485 = vmatpush2.msra.mxu0 0.0
      %3486 = vmatprep.subr.mxu0 0.0
      %3487 = vmatpush2.msra.mxu0 0.0
      %3488 = vmatprep.subr.mxu0 0.0
      %3489 = vmatpush2.msra.mxu0 0.0
      %3490 = vmatprep.subr.mxu0 0.0
      %3491 = vmatpush2.msra.mxu0 0.0
      %3492 = vmatprep.subr.mxu0 0.0
      %3493 = vmatpush2.msra.mxu0 0.0
      %3494 = vmatprep.subr.mxu0 0.0
      %3495 = vmatpush2.msra.mxu0 0.0
      %3496 = vmatprep.subr.mxu0 0.0
      %3497 = vmatpush2.msra.mxu0 0.0
      %3498 = vmatprep.subr.mxu0 0.0
      %3499 = vmatpush2.msra.mxu0 0.0
      %3500 = vmatprep.subr.mxu0 0.0
      %3501 = vmatpush2.msra.mxu0 0.0
      %3502 = vmatprep.subr.mxu0 0.0
      %3503 = vmatpush2.msra.mxu0 0.0
      %3504 = vmatprep.mubr.f32.mxu0 0.0
      %3505 = vmatmul.mubr.f32.gmra.mxu0 %v3020
      %v3506 = vpop.f32.mrf.mxu0
      %v3507 = vadd.f32 0.0, %v3506
      %v3508 = vpop.f32.mrf.mxu0
      %3509 = vmatprep.mubr.f32.mxu0 0.0
      %3510 = vmatmul.mubr.f32.gmra.mxu0 %v3022
      %v3511 = vpop.f32.mrf.mxu0
      %v3512 = vadd.f32 0.0, %v3511
      %v3513 = vpop.f32.mrf.mxu0
      %3514 = vmatprep.mubr.f32.mxu0 0.0
      %3515 = vmatmul.mubr.f32.gmra.mxu0 %v3024
      %v3516 = vpop.f32.mrf.mxu0
      %v3517 = vadd.f32 0.0, %v3516
      %v3518 = vpop.f32.mrf.mxu0
      %3519 = vmatprep.mubr.f32.mxu0 0.0
      %3520 = vmatmul.mubr.f32.gmra.mxu0 %v3026
      %v3521 = vpop.f32.mrf.mxu0
      %v3522 = vadd.f32 0.0, %v3521
      %v3523 = vpop.f32.mrf.mxu0
      %3524 = vmatprep.mubr.f32.mxu0 0.0
      %3525 = vmatmul.mubr.f32.gmra.mxu0 %v3028
      %v3526 = vpop.f32.mrf.mxu0
      %v3527 = vadd.f32 0.0, %v3526
      %v3528 = vpop.f32.mrf.mxu0
      %3529 = vmatprep.mubr.f32.mxu0 0.0
      %3530 = vmatmul.mubr.f32.gmra.mxu0 %v3030
      %v3531 = vpop.f32.mrf.mxu0
      %v3532 = vadd.f32 0.0, %v3531
      %v3533 = vpop.f32.mrf.mxu0
      %3534 = vmatprep.mubr.f32.mxu0 0.0
      %3535 = vmatmul.mubr.f32.gmra.mxu0 %v3032
      %v3536 = vpop.f32.mrf.mxu0
      %v3537 = vadd.f32 0.0, %v3536
      %v3538 = vpop.f32.mrf.mxu0
      %3539 = vmatprep.mubr.f32.mxu0 0.0
      %3540 = vmatmul.mubr.f32.gmra.mxu0 %v3435
      %v3541 = vpop.f32.mrf.mxu0
      %v3542 = vadd.f32 0.0, %v3541
      %v3543 = vpop.f32.mrf.mxu0
      %3544 = vdwg.mxu0
      %v3545 = vadd.f32 %v3421, %v3507
      %v3546 = vadd.f32 %v3422, %v3512
      %v3547 = vadd.f32 %v3423, %v3517
      %v3548 = vadd.f32 %v3424, %v3522
      %v3549 = vadd.f32 %v3425, %v3527
      %v3550 = vadd.f32 %v3426, %v3532
      %v3551 = vadd.f32 %v3427, %v3537
      %v3552 = vadd.f32 %v3428, %v3542
      %v3553 = vrot.slane %v2838, 2
      %v3554 = vrot.slane %v2839, 2
      %v3555 = vsel %vm705, %v3553, %v3554
      %s3556 = scalar_lea.vmem %s3, 92
      %v3557 = vld [vmem:[%s3556] sm:$0xf]
      %v3558 = vsel %vm455, %v3555, 0
      %v3561 = vsel %vm472, %v3557, 0
      %3563 = vmatprep.subr.mxu0 0.0
      %3564 = vmatpush1.msra.mxu0 0.0
      %3565 = vmatprep.subr.mxu0 0.0
      %3566 = vmatpush1.msra.mxu0 0.0
      %3567 = vmatprep.subr.mxu0 0.0
      %3568 = vmatpush1.msra.mxu0 0.0
      %3569 = vmatprep.subr.mxu0 0.0
      %3570 = vmatpush1.msra.mxu0 0.0
      %3571 = vmatprep.subr.mxu0 0.0
      %3572 = vmatpush1.msra.mxu0 0.0
      %3573 = vmatprep.subr.mxu0 0.0
      %3574 = vmatpush1.msra.mxu0 0.0
      %3575 = vmatprep.subr.mxu0 0.0
      %3576 = vmatpush1.msra.mxu0 0.0
      %3577 = vmatprep.subr.mxu0 0.0
      %3578 = vmatpush1.msra.mxu0 0.0
      %3579 = vmatprep.subr.mxu0 0.0
      %3580 = vmatpush1.msra.mxu0 0.0
      %3581 = vmatprep.subr.mxu0 0.0
      %3582 = vmatpush1.msra.mxu0 0.0
      %3583 = vmatprep.subr.mxu0 0.0
      %3584 = vmatpush1.msra.mxu0 0.0
      %3585 = vmatprep.subr.mxu0 0.0
      %3586 = vmatpush1.msra.mxu0 0.0
      %3587 = vmatprep.subr.mxu0 0.0
      %3588 = vmatpush1.msra.mxu0 0.0
      %3589 = vmatprep.subr.mxu0 0.0
      %3590 = vmatpush1.msra.mxu0 0.0
      %3591 = vmatprep.subr.mxu0 0.0
      %3592 = vmatpush1.msra.mxu0 0.0
      %3593 = vmatprep.subr.mxu0 0.0
      %3594 = vmatpush1.msra.mxu0 %v3561
      %3595 = vmatprep.subr.mxu0 0.0
      %3596 = vmatpush2.msra.mxu0 0.0
      %3597 = vmatprep.subr.mxu0 0.0
      %3598 = vmatpush2.msra.mxu0 0.0
      %3599 = vmatprep.subr.mxu0 0.0
      %3600 = vmatpush2.msra.mxu0 0.0
      %3601 = vmatprep.subr.mxu0 0.0
      %3602 = vmatpush2.msra.mxu0 0.0
      %3603 = vmatprep.subr.mxu0 0.0
      %3604 = vmatpush2.msra.mxu0 0.0
      %3605 = vmatprep.subr.mxu0 0.0
      %3606 = vmatpush2.msra.mxu0 0.0
      %3607 = vmatprep.subr.mxu0 0.0
      %3608 = vmatpush2.msra.mxu0 0.0
      %3609 = vmatprep.subr.mxu0 0.0
      %3610 = vmatpush2.msra.mxu0 0.0
      %3611 = vmatprep.subr.mxu0 0.0
      %3612 = vmatpush2.msra.mxu0 0.0
      %3613 = vmatprep.subr.mxu0 0.0
      %3614 = vmatpush2.msra.mxu0 0.0
      %3615 = vmatprep.subr.mxu0 0.0
      %3616 = vmatpush2.msra.mxu0 0.0
      %3617 = vmatprep.subr.mxu0 0.0
      %3618 = vmatpush2.msra.mxu0 0.0
      %3619 = vmatprep.subr.mxu0 0.0
      %3620 = vmatpush2.msra.mxu0 0.0
      %3621 = vmatprep.subr.mxu0 0.0
      %3622 = vmatpush2.msra.mxu0 0.0
      %3623 = vmatprep.subr.mxu0 0.0
      %3624 = vmatpush2.msra.mxu0 0.0
      %3625 = vmatprep.subr.mxu0 0.0
      %3626 = vmatpush2.msra.mxu0 0.0
      %3627 = vmatprep.mubr.f32.mxu0 0.0
      %3628 = vmatmul.mubr.f32.gmra.mxu0 %v3178
      %v3629 = vpop.f32.mrf.mxu0
      %v3630 = vadd.f32 0.0, %v3629
      %v3631 = vpop.f32.mrf.mxu0
      %3632 = vmatprep.mubr.f32.mxu0 0.0
      %3633 = vmatmul.mubr.f32.gmra.mxu0 %v3180
      %v3634 = vpop.f32.mrf.mxu0
      %v3635 = vadd.f32 0.0, %v3634
      %v3636 = vpop.f32.mrf.mxu0
      %3637 = vmatprep.mubr.f32.mxu0 0.0
      %3638 = vmatmul.mubr.f32.gmra.mxu0 %v3182
      %v3639 = vpop.f32.mrf.mxu0
      %v3640 = vadd.f32 0.0, %v3639
      %v3641 = vpop.f32.mrf.mxu0
      %3642 = vmatprep.mubr.f32.mxu0 0.0
      %3643 = vmatmul.mubr.f32.gmra.mxu0 %v3184
      %v3644 = vpop.f32.mrf.mxu0
      %v3645 = vadd.f32 0.0, %v3644
      %v3646 = vpop.f32.mrf.mxu0
      %3647 = vmatprep.mubr.f32.mxu0 0.0
      %3648 = vmatmul.mubr.f32.gmra.mxu0 %v3186
      %v3649 = vpop.f32.mrf.mxu0
      %v3650 = vadd.f32 0.0, %v3649
      %v3651 = vpop.f32.mrf.mxu0
      %3652 = vmatprep.mubr.f32.mxu0 0.0
      %3653 = vmatmul.mubr.f32.gmra.mxu0 %v3188
      %v3654 = vpop.f32.mrf.mxu0
      %v3655 = vadd.f32 0.0, %v3654
      %v3656 = vpop.f32.mrf.mxu0
      %3657 = vmatprep.mubr.f32.mxu0 0.0
      %3658 = vmatmul.mubr.f32.gmra.mxu0 %v3190
      %v3659 = vpop.f32.mrf.mxu0
      %v3660 = vadd.f32 0.0, %v3659
      %v3661 = vpop.f32.mrf.mxu0
      %3662 = vmatprep.mubr.f32.mxu0 0.0
      %3663 = vmatmul.mubr.f32.gmra.mxu0 %v3558
      %v3664 = vpop.f32.mrf.mxu0
      %v3665 = vadd.f32 0.0, %v3664
      %v3666 = vpop.f32.mrf.mxu0
      %3667 = vdwg.mxu0
      %v3668 = vadd.f32 %v3545, %v3630
      %v3669 = vadd.f32 %v3546, %v3635
      %v3670 = vadd.f32 %v3547, %v3640
      %v3671 = vadd.f32 %v3548, %v3645
      %v3672 = vadd.f32 %v3549, %v3650
      %v3673 = vadd.f32 %v3550, %v3655
      %v3674 = vadd.f32 %v3551, %v3660
      %v3675 = vadd.f32 %v3552, %v3665
      %s3676 = scalar_lea.vmem %s3, 96
      %v3677 = vld [vmem:[%s3676] sm:$0xf]
      %v3679 = vsel %vm455, %v2840, 0
      %v3682 = vsel %vm472, %v3677, 0
      %3684 = vmatprep.subr.mxu0 0.0
      %3685 = vmatpush1.msra.mxu0 0.0
      %3686 = vmatprep.subr.mxu0 0.0
      %3687 = vmatpush1.msra.mxu0 0.0
      %3688 = vmatprep.subr.mxu0 0.0
      %3689 = vmatpush1.msra.mxu0 0.0
      %3690 = vmatprep.subr.mxu0 0.0
      %3691 = vmatpush1.msra.mxu0 0.0
      %3692 = vmatprep.subr.mxu0 0.0
      %3693 = vmatpush1.msra.mxu0 0.0
      %3694 = vmatprep.subr.mxu0 0.0
      %3695 = vmatpush1.msra.mxu0 0.0
      %3696 = vmatprep.subr.mxu0 0.0
      %3697 = vmatpush1.msra.mxu0 0.0
      %3698 = vmatprep.subr.mxu0 0.0
      %3699 = vmatpush1.msra.mxu0 0.0
      %3700 = vmatprep.subr.mxu0 0.0
      %3701 = vmatpush1.msra.mxu0 0.0
      %3702 = vmatprep.subr.mxu0 0.0
      %3703 = vmatpush1.msra.mxu0 0.0
      %3704 = vmatprep.subr.mxu0 0.0
      %3705 = vmatpush1.msra.mxu0 0.0
      %3706 = vmatprep.subr.mxu0 0.0
      %3707 = vmatpush1.msra.mxu0 0.0
      %3708 = vmatprep.subr.mxu0 0.0
      %3709 = vmatpush1.msra.mxu0 0.0
      %3710 = vmatprep.subr.mxu0 0.0
      %3711 = vmatpush1.msra.mxu0 0.0
      %3712 = vmatprep.subr.mxu0 0.0
      %3713 = vmatpush1.msra.mxu0 0.0
      %3714 = vmatprep.subr.mxu0 0.0
      %3715 = vmatpush1.msra.mxu0 %v3682
      %3716 = vmatprep.subr.mxu0 0.0
      %3717 = vmatpush2.msra.mxu0 0.0
      %3718 = vmatprep.subr.mxu0 0.0
      %3719 = vmatpush2.msra.mxu0 0.0
      %3720 = vmatprep.subr.mxu0 0.0
      %3721 = vmatpush2.msra.mxu0 0.0
      %3722 = vmatprep.subr.mxu0 0.0
      %3723 = vmatpush2.msra.mxu0 0.0
      %3724 = vmatprep.subr.mxu0 0.0
      %3725 = vmatpush2.msra.mxu0 0.0
      %3726 = vmatprep.subr.mxu0 0.0
      %3727 = vmatpush2.msra.mxu0 0.0
      %3728 = vmatprep.subr.mxu0 0.0
      %3729 = vmatpush2.msra.mxu0 0.0
      %3730 = vmatprep.subr.mxu0 0.0
      %3731 = vmatpush2.msra.mxu0 0.0
      %3732 = vmatprep.subr.mxu0 0.0
      %3733 = vmatpush2.msra.mxu0 0.0
      %3734 = vmatprep.subr.mxu0 0.0
      %3735 = vmatpush2.msra.mxu0 0.0
      %3736 = vmatprep.subr.mxu0 0.0
      %3737 = vmatpush2.msra.mxu0 0.0
      %3738 = vmatprep.subr.mxu0 0.0
      %3739 = vmatpush2.msra.mxu0 0.0
      %3740 = vmatprep.subr.mxu0 0.0
      %3741 = vmatpush2.msra.mxu0 0.0
      %3742 = vmatprep.subr.mxu0 0.0
      %3743 = vmatpush2.msra.mxu0 0.0
      %3744 = vmatprep.subr.mxu0 0.0
      %3745 = vmatpush2.msra.mxu0 0.0
      %3746 = vmatprep.subr.mxu0 0.0
      %3747 = vmatpush2.msra.mxu0 0.0
      %3748 = vmatprep.mubr.f32.mxu0 0.0
      %3749 = vmatmul.mubr.f32.gmra.mxu0 %v2851
      %v3750 = vpop.f32.mrf.mxu0
      %v3751 = vadd.f32 0.0, %v3750
      %v3752 = vpop.f32.mrf.mxu0
      %3753 = vmatprep.mubr.f32.mxu0 0.0
      %3754 = vmatmul.mubr.f32.gmra.mxu0 %v2854
      %v3755 = vpop.f32.mrf.mxu0
      %v3756 = vadd.f32 0.0, %v3755
      %v3757 = vpop.f32.mrf.mxu0
      %3758 = vmatprep.mubr.f32.mxu0 0.0
      %3759 = vmatmul.mubr.f32.gmra.mxu0 %v2857
      %v3760 = vpop.f32.mrf.mxu0
      %v3761 = vadd.f32 0.0, %v3760
      %v3762 = vpop.f32.mrf.mxu0
      %3763 = vmatprep.mubr.f32.mxu0 0.0
      %3764 = vmatmul.mubr.f32.gmra.mxu0 %v2860
      %v3765 = vpop.f32.mrf.mxu0
      %v3766 = vadd.f32 0.0, %v3765
      %v3767 = vpop.f32.mrf.mxu0
      %3768 = vmatprep.mubr.f32.mxu0 0.0
      %3769 = vmatmul.mubr.f32.gmra.mxu0 %v2863
      %v3770 = vpop.f32.mrf.mxu0
      %v3771 = vadd.f32 0.0, %v3770
      %v3772 = vpop.f32.mrf.mxu0
      %3773 = vmatprep.mubr.f32.mxu0 0.0
      %3774 = vmatmul.mubr.f32.gmra.mxu0 %v2866
      %v3775 = vpop.f32.mrf.mxu0
      %v3776 = vadd.f32 0.0, %v3775
      %v3777 = vpop.f32.mrf.mxu0
      %3778 = vmatprep.mubr.f32.mxu0 0.0
      %3779 = vmatmul.mubr.f32.gmra.mxu0 %v3311
      %v3780 = vpop.f32.mrf.mxu0
      %v3781 = vadd.f32 0.0, %v3780
      %v3782 = vpop.f32.mrf.mxu0
      %3783 = vmatprep.mubr.f32.mxu0 0.0
      %3784 = vmatmul.mubr.f32.gmra.mxu0 %v3679
      %v3785 = vpop.f32.mrf.mxu0
      %v3786 = vadd.f32 0.0, %v3785
      %v3787 = vpop.f32.mrf.mxu0
      %3788 = vdwg.mxu0
      %v3789 = vadd.f32 %v3668, %v3751
      %v3790 = vadd.f32 %v3669, %v3756
      %v3791 = vadd.f32 %v3670, %v3761
      %v3792 = vadd.f32 %v3671, %v3766
      %v3793 = vadd.f32 %v3672, %v3771
      %v3794 = vadd.f32 %v3673, %v3776
      %v3795 = vadd.f32 %v3674, %v3781
      %v3796 = vadd.f32 %v3675, %v3786
      %v3798 = vrot.slane %v2840, 1
      %v3799 = vrot.slane %v2841, 1
      %v3800 = vsel %vm428, %v3798, %v3799
      %s3801 = scalar_lea.vmem %s3, 100
      %v3802 = vld [vmem:[%s3801] sm:$0xf]
      %v3803 = vsel %vm455, %v3800, 0
      %v3806 = vsel %vm472, %v3802, 0
      %3808 = vmatprep.subr.mxu0 0.0
      %3809 = vmatpush1.msra.mxu0 0.0
      %3810 = vmatprep.subr.mxu0 0.0
      %3811 = vmatpush1.msra.mxu0 0.0
      %3812 = vmatprep.subr.mxu0 0.0
      %3813 = vmatpush1.msra.mxu0 0.0
      %3814 = vmatprep.subr.mxu0 0.0
      %3815 = vmatpush1.msra.mxu0 0.0
      %3816 = vmatprep.subr.mxu0 0.0
      %3817 = vmatpush1.msra.mxu0 0.0
      %3818 = vmatprep.subr.mxu0 0.0
      %3819 = vmatpush1.msra.mxu0 0.0
      %3820 = vmatprep.subr.mxu0 0.0
      %3821 = vmatpush1.msra.mxu0 0.0
      %3822 = vmatprep.subr.mxu0 0.0
      %3823 = vmatpush1.msra.mxu0 0.0
      %3824 = vmatprep.subr.mxu0 0.0
      %3825 = vmatpush1.msra.mxu0 0.0
      %3826 = vmatprep.subr.mxu0 0.0
      %3827 = vmatpush1.msra.mxu0 0.0
      %3828 = vmatprep.subr.mxu0 0.0
      %3829 = vmatpush1.msra.mxu0 0.0
      %3830 = vmatprep.subr.mxu0 0.0
      %3831 = vmatpush1.msra.mxu0 0.0
      %3832 = vmatprep.subr.mxu0 0.0
      %3833 = vmatpush1.msra.mxu0 0.0
      %3834 = vmatprep.subr.mxu0 0.0
      %3835 = vmatpush1.msra.mxu0 0.0
      %3836 = vmatprep.subr.mxu0 0.0
      %3837 = vmatpush1.msra.mxu0 0.0
      %3838 = vmatprep.subr.mxu0 0.0
      %3839 = vmatpush1.msra.mxu0 %v3806
      %3840 = vmatprep.subr.mxu0 0.0
      %3841 = vmatpush2.msra.mxu0 0.0
      %3842 = vmatprep.subr.mxu0 0.0
      %3843 = vmatpush2.msra.mxu0 0.0
      %3844 = vmatprep.subr.mxu0 0.0
      %3845 = vmatpush2.msra.mxu0 0.0
      %3846 = vmatprep.subr.mxu0 0.0
      %3847 = vmatpush2.msra.mxu0 0.0
      %3848 = vmatprep.subr.mxu0 0.0
      %3849 = vmatpush2.msra.mxu0 0.0
      %3850 = vmatprep.subr.mxu0 0.0
      %3851 = vmatpush2.msra.mxu0 0.0
      %3852 = vmatprep.subr.mxu0 0.0
      %3853 = vmatpush2.msra.mxu0 0.0
      %3854 = vmatprep.subr.mxu0 0.0
      %3855 = vmatpush2.msra.mxu0 0.0
      %3856 = vmatprep.subr.mxu0 0.0
      %3857 = vmatpush2.msra.mxu0 0.0
      %3858 = vmatprep.subr.mxu0 0.0
      %3859 = vmatpush2.msra.mxu0 0.0
      %3860 = vmatprep.subr.mxu0 0.0
      %3861 = vmatpush2.msra.mxu0 0.0
      %3862 = vmatprep.subr.mxu0 0.0
      %3863 = vmatpush2.msra.mxu0 0.0
      %3864 = vmatprep.subr.mxu0 0.0
      %3865 = vmatpush2.msra.mxu0 0.0
      %3866 = vmatprep.subr.mxu0 0.0
      %3867 = vmatpush2.msra.mxu0 0.0
      %3868 = vmatprep.subr.mxu0 0.0
      %3869 = vmatpush2.msra.mxu0 0.0
      %3870 = vmatprep.subr.mxu0 0.0
      %3871 = vmatpush2.msra.mxu0 0.0
      %3872 = vmatprep.mubr.f32.mxu0 0.0
      %3873 = vmatmul.mubr.f32.gmra.mxu0 %v3022
      %v3874 = vpop.f32.mrf.mxu0
      %v3875 = vadd.f32 0.0, %v3874
      %v3876 = vpop.f32.mrf.mxu0
      %3877 = vmatprep.mubr.f32.mxu0 0.0
      %3878 = vmatmul.mubr.f32.gmra.mxu0 %v3024
      %v3879 = vpop.f32.mrf.mxu0
      %v3880 = vadd.f32 0.0, %v3879
      %v3881 = vpop.f32.mrf.mxu0
      %3882 = vmatprep.mubr.f32.mxu0 0.0
      %3883 = vmatmul.mubr.f32.gmra.mxu0 %v3026
      %v3884 = vpop.f32.mrf.mxu0
      %v3885 = vadd.f32 0.0, %v3884
      %v3886 = vpop.f32.mrf.mxu0
      %3887 = vmatprep.mubr.f32.mxu0 0.0
      %3888 = vmatmul.mubr.f32.gmra.mxu0 %v3028
      %v3889 = vpop.f32.mrf.mxu0
      %v3890 = vadd.f32 0.0, %v3889
      %v3891 = vpop.f32.mrf.mxu0
      %3892 = vmatprep.mubr.f32.mxu0 0.0
      %3893 = vmatmul.mubr.f32.gmra.mxu0 %v3030
      %v3894 = vpop.f32.mrf.mxu0
      %v3895 = vadd.f32 0.0, %v3894
      %v3896 = vpop.f32.mrf.mxu0
      %3897 = vmatprep.mubr.f32.mxu0 0.0
      %3898 = vmatmul.mubr.f32.gmra.mxu0 %v3032
      %v3899 = vpop.f32.mrf.mxu0
      %v3900 = vadd.f32 0.0, %v3899
      %v3901 = vpop.f32.mrf.mxu0
      %3902 = vmatprep.mubr.f32.mxu0 0.0
      %3903 = vmatmul.mubr.f32.gmra.mxu0 %v3435
      %v3904 = vpop.f32.mrf.mxu0
      %v3905 = vadd.f32 0.0, %v3904
      %v3906 = vpop.f32.mrf.mxu0
      %3907 = vmatprep.mubr.f32.mxu0 0.0
      %3908 = vmatmul.mubr.f32.gmra.mxu0 %v3803
      %v3909 = vpop.f32.mrf.mxu0
      %v3910 = vadd.f32 0.0, %v3909
      %v3911 = vpop.f32.mrf.mxu0
      %3912 = vdwg.mxu0
      %v3913 = vadd.f32 %v3789, %v3875
      %v3914 = vadd.f32 %v3790, %v3880
      %v3915 = vadd.f32 %v3791, %v3885
      %v3916 = vadd.f32 %v3792, %v3890
      %v3917 = vadd.f32 %v3793, %v3895
      %v3918 = vadd.f32 %v3794, %v3900
      %v3919 = vadd.f32 %v3795, %v3905
      %v3920 = vadd.f32 %v3796, %v3910
      %v3921 = vrot.slane %v2840, 2
      %v3922 = vrot.slane %v2841, 2
      %v3923 = vsel %vm705, %v3921, %v3922
      %s3924 = scalar_lea.vmem %s3, 104
      %v3925 = vld [vmem:[%s3924] sm:$0xf]
      %v3926 = vsel %vm455, %v3923, 0
      %v3929 = vsel %vm472, %v3925, 0
      %3931 = vmatprep.subr.mxu0 0.0
      %3932 = vmatpush1.msra.mxu0 0.0
      %3933 = vmatprep.subr.mxu0 0.0
      %3934 = vmatpush1.msra.mxu0 0.0
      %3935 = vmatprep.subr.mxu0 0.0
      %3936 = vmatpush1.msra.mxu0 0.0
      %3937 = vmatprep.subr.mxu0 0.0
      %3938 = vmatpush1.msra.mxu0 0.0
      %3939 = vmatprep.subr.mxu0 0.0
      %3940 = vmatpush1.msra.mxu0 0.0
      %3941 = vmatprep.subr.mxu0 0.0
      %3942 = vmatpush1.msra.mxu0 0.0
      %3943 = vmatprep.subr.mxu0 0.0
      %3944 = vmatpush1.msra.mxu0 0.0
      %3945 = vmatprep.subr.mxu0 0.0
      %3946 = vmatpush1.msra.mxu0 0.0
      %3947 = vmatprep.subr.mxu0 0.0
      %3948 = vmatpush1.msra.mxu0 0.0
      %3949 = vmatprep.subr.mxu0 0.0
      %3950 = vmatpush1.msra.mxu0 0.0
      %3951 = vmatprep.subr.mxu0 0.0
      %3952 = vmatpush1.msra.mxu0 0.0
      %3953 = vmatprep.subr.mxu0 0.0
      %3954 = vmatpush1.msra.mxu0 0.0
      %3955 = vmatprep.subr.mxu0 0.0
      %3956 = vmatpush1.msra.mxu0 0.0
      %3957 = vmatprep.subr.mxu0 0.0
      %3958 = vmatpush1.msra.mxu0 0.0
      %3959 = vmatprep.subr.mxu0 0.0
      %3960 = vmatpush1.msra.mxu0 0.0
      %3961 = vmatprep.subr.mxu0 0.0
      %3962 = vmatpush1.msra.mxu0 %v3929
      %3963 = vmatprep.subr.mxu0 0.0
      %3964 = vmatpush2.msra.mxu0 0.0
      %3965 = vmatprep.subr.mxu0 0.0
      %3966 = vmatpush2.msra.mxu0 0.0
      %3967 = vmatprep.subr.mxu0 0.0
      %3968 = vmatpush2.msra.mxu0 0.0
      %3969 = vmatprep.subr.mxu0 0.0
      %3970 = vmatpush2.msra.mxu0 0.0
      %3971 = vmatprep.subr.mxu0 0.0
      %3972 = vmatpush2.msra.mxu0 0.0
      %3973 = vmatprep.subr.mxu0 0.0
      %3974 = vmatpush2.msra.mxu0 0.0
      %3975 = vmatprep.subr.mxu0 0.0
      %3976 = vmatpush2.msra.mxu0 0.0
      %3977 = vmatprep.subr.mxu0 0.0
      %3978 = vmatpush2.msra.mxu0 0.0
      %3979 = vmatprep.subr.mxu0 0.0
      %3980 = vmatpush2.msra.mxu0 0.0
      %3981 = vmatprep.subr.mxu0 0.0
      %3982 = vmatpush2.msra.mxu0 0.0
      %3983 = vmatprep.subr.mxu0 0.0
      %3984 = vmatpush2.msra.mxu0 0.0
      %3985 = vmatprep.subr.mxu0 0.0
      %3986 = vmatpush2.msra.mxu0 0.0
      %3987 = vmatprep.subr.mxu0 0.0
      %3988 = vmatpush2.msra.mxu0 0.0
      %3989 = vmatprep.subr.mxu0 0.0
      %3990 = vmatpush2.msra.mxu0 0.0
      %3991 = vmatprep.subr.mxu0 0.0
      %3992 = vmatpush2.msra.mxu0 0.0
      %3993 = vmatprep.subr.mxu0 0.0
      %3994 = vmatpush2.msra.mxu0 0.0
      %3995 = vmatprep.mubr.f32.mxu0 0.0
      %3996 = vmatmul.mubr.f32.gmra.mxu0 %v3180
      %v3997 = vpop.f32.mrf.mxu0
      %v3998 = vadd.f32 0.0, %v3997
      %v3999 = vpop.f32.mrf.mxu0
      %4000 = vmatprep.mubr.f32.mxu0 0.0
      %4001 = vmatmul.mubr.f32.gmra.mxu0 %v3182
      %v4002 = vpop.f32.mrf.mxu0
      %v4003 = vadd.f32 0.0, %v4002
      %v4004 = vpop.f32.mrf.mxu0
      %4005 = vmatprep.mubr.f32.mxu0 0.0
      %4006 = vmatmul.mubr.f32.gmra.mxu0 %v3184
      %v4007 = vpop.f32.mrf.mxu0
      %v4008 = vadd.f32 0.0, %v4007
      %v4009 = vpop.f32.mrf.mxu0
      %4010 = vmatprep.mubr.f32.mxu0 0.0
      %4011 = vmatmul.mubr.f32.gmra.mxu0 %v3186
      %v4012 = vpop.f32.mrf.mxu0
      %v4013 = vadd.f32 0.0, %v4012
      %v4014 = vpop.f32.mrf.mxu0
      %4015 = vmatprep.mubr.f32.mxu0 0.0
      %4016 = vmatmul.mubr.f32.gmra.mxu0 %v3188
      %v4017 = vpop.f32.mrf.mxu0
      %v4018 = vadd.f32 0.0, %v4017
      %v4019 = vpop.f32.mrf.mxu0
      %4020 = vmatprep.mubr.f32.mxu0 0.0
      %4021 = vmatmul.mubr.f32.gmra.mxu0 %v3190
      %v4022 = vpop.f32.mrf.mxu0
      %v4023 = vadd.f32 0.0, %v4022
      %v4024 = vpop.f32.mrf.mxu0
      %4025 = vmatprep.mubr.f32.mxu0 0.0
      %4026 = vmatmul.mubr.f32.gmra.mxu0 %v3558
      %v4027 = vpop.f32.mrf.mxu0
      %v4028 = vadd.f32 0.0, %v4027
      %v4029 = vpop.f32.mrf.mxu0
      %4030 = vmatprep.mubr.f32.mxu0 0.0
      %4031 = vmatmul.mubr.f32.gmra.mxu0 %v3926
      %v4032 = vpop.f32.mrf.mxu0
      %v4033 = vadd.f32 0.0, %v4032
      %v4034 = vpop.f32.mrf.mxu0
      %4035 = vdwg.mxu0
      %v4036 = vadd.f32 %v3913, %v3998
      %v4037 = vadd.f32 %v3914, %v4003
      %v4038 = vadd.f32 %v3915, %v4008
      %v4039 = vadd.f32 %v3916, %v4013
      %v4040 = vadd.f32 %v3917, %v4018
      %v4041 = vadd.f32 %v3918, %v4023
      %v4042 = vadd.f32 %v3919, %v4028
      %v4043 = vadd.f32 %v3920, %v4033
      %v4044 = vld [vmem:[%s4] sm:$0x1]
      %v4046 = vlaneseq
      %v4047 = vshrl.u32 %v4046, 7
      %v4048 = vsub.s32 0, %v4047
      %v4049 = vrot.slane %v4044, %v4048
      %v4051 = vadd.f32 %v4036, %v4049
      %v4052 = vadd.f32 %v4037, %v4049
      %v4053 = vadd.f32 %v4038, %v4049
      %v4054 = vadd.f32 %v4039, %v4049
      %v4055 = vadd.f32 %v4040, %v4049
      %v4056 = vadd.f32 %v4041, %v4049
      %v4057 = vadd.f32 %v4042, %v4049
      %v4058 = vadd.f32 %v4043, %v4049
      %vm4059 = vcmp.gt.f32.partialorder %v4051, 0.0
      %vm4060 = vcmp.gt.f32.partialorder %v4052, 0.0
      %vm4061 = vcmp.gt.f32.partialorder %v4053, 0.0
      %vm4062 = vcmp.gt.f32.partialorder %v4054, 0.0
      %vm4063 = vcmp.gt.f32.partialorder %v4055, 0.0
      %vm4064 = vcmp.gt.f32.partialorder %v4056, 0.0
      %vm4065 = vcmp.gt.f32.partialorder %v4057, 0.0
      %vm4066 = vcmp.gt.f32.partialorder %v4058, 0.0
      %v4067 = vmul.f32 %v4051, 0.2
      %v4068 = vmul.f32 %v4052, 0.2
      %v4069 = vmul.f32 %v4053, 0.2
      %v4070 = vmul.f32 %v4054, 0.2
      %v4071 = vmul.f32 %v4055, 0.2
      %v4072 = vmul.f32 %v4056, 0.2
      %v4073 = vmul.f32 %v4057, 0.2
      %v4074 = vmul.f32 %v4058, 0.2
      %v4075 = vsel %vm4059, %v4051, %v4067
      %v4076 = vsel %vm4060, %v4052, %v4068
      %v4077 = vsel %vm4061, %v4053, %v4069
      %v4078 = vsel %vm4062, %v4054, %v4070
      %v4079 = vsel %vm4063, %v4055, %v4071
      %v4080 = vsel %vm4064, %v4056, %v4072
      %v4081 = vsel %vm4065, %v4057, %v4073
      %v4082 = vsel %vm4066, %v4058, %v4074
      %4083 = vst.msk [vmem:[%s380] sm:$0xff] %vm455, %v4075
      %4084 = vst.msk [vmem:[%s380 + $0x8] sm:$0xff] %vm455, %v4076
      %4085 = vst.msk [vmem:[%s380 + $0x10] sm:$0xff] %vm455, %v4077
      %4086 = vst.msk [vmem:[%s380 + $0x18] sm:$0xff] %vm455, %v4078
      %4087 = vst.msk [vmem:[%s380 + $0x20] sm:$0xff] %vm455, %v4079
      %4088 = vst.msk [vmem:[%s380 + $0x28] sm:$0xff] %vm455, %v4080
      %4089 = vst.msk [vmem:[%s380 + $0x30] sm:$0xff] %vm455, %v4081
      %4090 = vst.msk [vmem:[%s380 + $0x38] sm:$0xff] %vm455, %v4082
      %v4091 = vsel %vm455, %v4075, 0.0
      %v4092 = vsel %vm455, %v4076, 0.0
      %v4093 = vadd.f32 %v4091, %v4092
      %v4094 = vsel %vm455, %v4077, 0.0
      %v4095 = vadd.f32 %v4093, %v4094
      %v4096 = vsel %vm455, %v4078, 0.0
      %v4097 = vadd.f32 %v4095, %v4096
      %v4098 = vsel %vm455, %v4079, 0.0
      %v4099 = vadd.f32 %v4097, %v4098
      %v4100 = vsel %vm455, %v4080, 0.0
      %v4101 = vadd.f32 %v4099, %v4100
      %v4102 = vsel %vm455, %v4081, 0.0
      %v4103 = vadd.f32 %v4101, %v4102
      %v4104 = vsel %vm455, %v4082, 0.0
      %v4105 = vadd.f32 %v4103, %v4104
      %v4106 = vrot.slane %v4105, 4
      %v4107 = vadd.f32 %v4105, %v4106
      %v4108 = vrot.slane %v4107, 2
      %v4109 = vadd.f32 %v4107, %v4108
      %v4110 = vrot.slane %v4109, 1
      %v4111 = vadd.f32 %v4109, %v4110
      %v4112 = vmul.f32 %v4075, %v4075
      %v4113 = vmul.f32 %v4076, %v4076
      %v4114 = vmul.f32 %v4077, %v4077
      %v4115 = vmul.f32 %v4078, %v4078
      %v4116 = vmul.f32 %v4079, %v4079
      %v4117 = vmul.f32 %v4080, %v4080
      %v4118 = vmul.f32 %v4081, %v4081
      %v4119 = vmul.f32 %v4082, %v4082
      %v4120 = vsel %vm455, %v4112, 0.0
      %v4121 = vsel %vm455, %v4113, 0.0
      %v4122 = vadd.f32 %v4120, %v4121
      %v4123 = vsel %vm455, %v4114, 0.0
      %v4124 = vadd.f32 %v4122, %v4123
      %v4125 = vsel %vm455, %v4115, 0.0
      %v4126 = vadd.f32 %v4124, %v4125
      %v4127 = vsel %vm455, %v4116, 0.0
      %v4128 = vadd.f32 %v4126, %v4127
      %v4129 = vsel %vm455, %v4117, 0.0
      %v4130 = vadd.f32 %v4128, %v4129
      %v4131 = vsel %vm455, %v4118, 0.0
      %v4132 = vadd.f32 %v4130, %v4131
      %v4133 = vsel %vm455, %v4119, 0.0
      %v4134 = vadd.f32 %v4132, %v4133
      %v4135 = vrot.slane %v4134, 4
      %v4136 = vadd.f32 %v4134, %v4135
      %v4137 = vrot.slane %v4136, 2
      %v4138 = vadd.f32 %v4136, %v4137
      %v4139 = vrot.slane %v4138, 1
      %v4140 = vadd.f32 %v4138, %v4139
      %v4141 = vlaneseq
      %v4142 = vshrl.u32 %v4141, 7
      %vm4143 = vcmp.eq.s32.totalorder %v4142, 0
      %vm4144 = vcmp.eq.s32.totalorder %v4142, 1
      %v4145 = vsel %vm4144, %v4140, 0.0
      %v4146 = vsel %vm4143, %v4111, %v4145
      %4147 = vst.msk [vmem:[%s388] sm:$0xff] %vm455, %v4146
      %s4148 = smul.u32 %s22, 8
      %s4149 = sadd.s32 %s4148, %s23
      %p4150 = scmp.lt.s32.totalorder %s4149, 15
      %s4151 = scalar_select %p4150, %s4149, 15
      %s4152 = smul.addr %s4151, 8
      %s4153 = smul.addr %s4152, 8
      %s4154 = scalar_lea.vmem %s5, %s4153
      %s4155 = smul.u32 %s22, 8
      %s4156 = sadd.s32 %s4155, %s23
      %p4157 = scmp.lt.s32.totalorder %s4156, 15
      %s4158 = scalar_select %p4157, %s4156, 15
      %s4159 = smul.addr %s4158, 8
      %s4160 = scalar_lea.vmem %s6, %s4159
      // Predicated region
      $region41: #{res_block_down.4} parent=39 // pred_check
        %p4161 = pneg %p182
      $region42: #{res_block_down.4} parent=39 // pred_check_branch
        %4163 = sbr.rel (%p4161) target = $region44
      $region43: #{res_block_down.4} parent=39 // pred_region
        %s4164 = smul.u32 %s22, 8
        %s4165 = sadd.s32 %s4164, %s23
      $region44: #{res_block_down.4} parent=39 // pred_fallthru
        _
      // Predicated region
      $region45: #{res_block_down.4} parent=39 // pred_check
        %p4166 = pneg %p212
      $region46: #{res_block_down.4} parent=39 // pred_check_branch
        %4168 = sbr.rel (%p4166) target = $region48
      $region47: #{res_block_down.4} parent=39 // pred_region
        %s4169 = smul.u32 %s22, 8
        %s4170 = sadd.s32 %s4169, %s23
      $region48: #{res_block_down.4} parent=39 // pred_fallthru
        _
    $region40: #{res_block_down.4} parent=5 // pred_fallthru
      _
    %p4171 = scmp.le.s32.totalorder 2, %s13
    // Predicated region
    $region49: #{res_block_down.4} parent=5 // pred_check
      %p4172 = pneg %p4171
    $region50: #{res_block_down.4} parent=5 // pred_check_branch
      %4174 = sbr.rel (%p4172) target = $region52
    $region51: #{res_block_down.4} parent=5 // pred_region
      %s4175 = ssub.s32 %s13, 2
      // Predicated region
      $region53: #{res_block_down.4} parent=51 // pred_check
        %p4176 = pneg %p188
      $region54: #{res_block_down.4} parent=51 // pred_check_branch
        %4178 = sbr.rel (%p4176) target = $region56
      $region55: #{res_block_down.4} parent=51 // pred_region
        %s4179 = smul.u32 %s24, 8
        %s4180 = sadd.s32 %s4179, %s25
        %p4181 = scmp.lt.s32.totalorder %s4180, 15
        %s4182 = scalar_select %p4181, %s4180, 15
        %s4183 = smul.addr %s4182, 8
        %s4184 = smul.addr %s4183, 8
        %s4185 = scalar_lea.vmem %s5, %s4184
      $region56: #{res_block_down.4} parent=51 // pred_fallthru
        _
      // Predicated region
      $region57: #{res_block_down.4} parent=51 // pred_check
        %p4186 = pneg %p218
      $region58: #{res_block_down.4} parent=51 // pred_check_branch
        %4188 = sbr.rel (%p4186) target = $region60
      $region59: #{res_block_down.4} parent=51 // pred_region
        %s4189 = smul.u32 %s24, 8
        %s4190 = sadd.s32 %s4189, %s25
        %p4191 = scmp.lt.s32.totalorder %s4190, 15
        %s4192 = scalar_select %p4191, %s4190, 15
        %s4193 = smul.addr %s4192, 8
        %s4194 = scalar_lea.vmem %s6, %s4193
      $region60: #{res_block_down.4} parent=51 // pred_fallthru
        _
    $region52: #{res_block_down.4} parent=5 // pred_fallthru
      _
  $region6: #{res_block_down.4} parent=0 // loop_footer
    %s17 = sadd.s32 1, %s13
  $region7: #{res_block_down.4} parent=0 // loop_footer_branch
    %12 = sbr.rel target = $region3
  $region8: #{res_block_down.4} parent=0 // loop_exit
    _

</llo_original>
